<compile_context>
chip_gen: v5e
topology: v5e:2x2
jax: 0.10.0
libtpu: 0.0.40
codegen_flags: <defaults>
</compile_context>

<pallas_src>
import functools

import jax
import jax.numpy as jnp
from jax.experimental import pallas as pl
from jax.experimental.pallas import tpu as pltpu


CONTENT_LAYERS = ("conv_3",)
STYLE_LAYERS = ("conv_1", "conv_2", "conv_3")
MEAN = (0.485, 0.456, 0.406)
STD = (0.229, 0.224, 0.225)


# ----------------------------------------------------------------------------
# Pallas kernels
# ----------------------------------------------------------------------------
def _features_kernel(x_ref, m_ref, s_ref,
                     w1_ref, b1_ref, w2_ref, b2_ref, w3_ref, b3_ref,
                     f1_ref, f2_ref, f3_ref,
                     pad1_ref, pad2_ref, pad3_ref):
    """Fused normalize -> conv1 -> relu -> conv2 -> relu -> pool -> conv3."""
    H, W = x_ref.shape[1], x_ref.shape[2]

    def conv3x3(act, pad_ref, w_ref, b_ref):
        # act: (h, w, cin) f32; w_ref: (9*cin, cout) bf16; b_ref: (1, cout) f32
        h, w, cin = act.shape
        # 1-pixel zero halo built in VMEM scratch (no HBM-level pad pass).
        pad_ref[...] = jnp.zeros(pad_ref.shape, pad_ref.dtype)
        pad_ref[1:1 + h, 1:1 + w, :] = act
        xp = pad_ref[...]
        # im2col: one (h*w, 9*cin) patch matrix -> a single MXU matmul.
        cols = [xp[ky:ky + h, kx:kx + w, :]
                for ky in range(3) for kx in range(3)]
        patch = jnp.concatenate(cols, axis=-1).reshape(h * w, 9 * cin)
        acc = jnp.dot(patch.astype(jnp.bfloat16), w_ref[...],
                      preferred_element_type=jnp.float32)      # (h*w, cout) f32
        return acc + b_ref[...]                                # pre-ReLU tap

    # Per-channel normalization (multiply by precomputed 1/std).
    x = (x_ref[0] - m_ref[...]) * s_ref[...]                   # (H, W, 3)

    c1 = w1_ref.shape[1]
    pre1 = conv3x3(x, pad1_ref, w1_ref, b1_ref)                # (H*W, c1)
    f1_ref[0] = pre1.T                                         # (c1, H*W) lane-dense
    a1 = jnp.maximum(pre1, 0.0).reshape(H, W, c1)

    pre2 = conv3x3(a1, pad2_ref, w2_ref, b2_ref)               # (H*W, c1)
    f2_ref[0] = pre2.T
    a2 = jnp.maximum(pre2, 0.0).reshape(H, W, c1)

    # 2x2 max-pool, stride 2 (reshape-max; no strided ref indexing).
    ho, wo = H // 2, W // 2
    pooled = jnp.max(a2.reshape(ho, 2, wo, 2, c1), axis=(1, 3))  # (ho, wo, c1)

    pre3 = conv3x3(pooled, pad3_ref, w3_ref, b3_ref)           # (ho*wo, c2)
    f3_ref[0] = pre3.T                                         # (c2, ho*wo)


def _gram3_kernel(f1_ref, f2_ref, f3_ref, g1_ref, g2_ref, g3_ref, *, invs):
    # G = (1/(h*w)) * F @ F^T, contraction on the lane axis (no transpose).
    for f_ref, g_ref, inv in ((f1_ref, g1_ref, invs[0]),
                              (f2_ref, g2_ref, invs[1]),
                              (f3_ref, g3_ref, invs[2])):
        f = f_ref[...]
        g_ref[...] = jax.lax.dot_general(
            f, f, (((1,), (1,)), ((), ())),
            preferred_element_type=jnp.float32) * inv


def _loss_kernel(f1_ref, f2_ref, f3_ref, g1_ref, g2_ref, g3_ref, ct_ref,
                 style_ref, content_ref, *, g_invs, s_scales, c_scale):
    # Fused Gram + style-MSE for the three style layers, plus the content
    # squared-error term (content layer is conv_3 == f3_ref).
    def style_term(f_ref, gt_ref, inv_hw, scale):
        f = f_ref[...]
        g = jax.lax.dot_general(f, f, (((1,), (1,)), ((), ())),
                                preferred_element_type=jnp.float32) * inv_hw
        d = g - gt_ref[...]
        return jnp.sum(d * d, axis=(0, 1), keepdims=True) * scale   # (1, 1)

    style_ref[...] = (style_term(f1_ref, g1_ref, g_invs[0], s_scales[0])
                      + style_term(f2_ref, g2_ref, g_invs[1], s_scales[1])
                      + style_term(f3_ref, g3_ref, g_invs[2], s_scales[2]))
    dc = f3_ref[...] - ct_ref[...]
    content_ref[...] = jnp.sum(dc * dc, axis=(0, 1), keepdims=True) * c_scale


# ----------------------------------------------------------------------------
# Wrappers
# ----------------------------------------------------------------------------
def _flatten(feat):
    # (B, C, H*W) -> (B*C, H*W)  (matches torch's x.view(b*c, h*w))
    return feat.reshape(-1, feat.shape[-1])


def extract_features(img_nchw, params):
    """Run the fused feature kernel; returns {layer: (B, C, H*W) float32}."""
    x = jnp.transpose(img_nchw, (0, 2, 3, 1)).astype(jnp.float32)   # NCHW->NHWC
    B, H, W, cin = x.shape
    ho, wo = H // 2, W // 2
    w1, b1 = params["conv_1"]
    w2, b2 = params["conv_2"]
    w3, b3 = params["conv_3"]
    c1, c2 = w1.shape[3], w3.shape[3]

    # im2col weight layout (9*Cin, Cout); bf16 operands for the MXU.
    w1r = w1.reshape(9 * cin, c1).astype(jnp.bfloat16)
    w2r = w2.reshape(9 * c1, c1).astype(jnp.bfloat16)
    w3r = w3.reshape(9 * c1, c2).astype(jnp.bfloat16)
    b1r = b1.reshape(1, c1).astype(jnp.float32)
    b2r = b2.reshape(1, c1).astype(jnp.float32)
    b3r = b3.reshape(1, c2).astype(jnp.float32)
    mean = jnp.asarray(MEAN, jnp.float32).reshape(1, cin)
    inv_std = (1.0 / jnp.asarray(STD, jnp.float32)).reshape(1, cin)

    f1, f2, f3 = pl.pallas_call(
        _features_kernel,
        out_shape=(jax.ShapeDtypeStruct((B, c1, H * W), jnp.float32),
                   jax.ShapeDtypeStruct((B, c1, H * W), jnp.float32),
                   jax.ShapeDtypeStruct((B, c2, ho * wo), jnp.float32)),
        grid=(B,),
        in_specs=[
            pl.BlockSpec((1, H, W, cin), lambda b: (b, 0, 0, 0)),
            pl.BlockSpec((1, cin), lambda b: (0, 0)),
            pl.BlockSpec((1, cin), lambda b: (0, 0)),
            pl.BlockSpec((9 * cin, c1), lambda b: (0, 0)),
            pl.BlockSpec((1, c1), lambda b: (0, 0)),
            pl.BlockSpec((9 * c1, c1), lambda b: (0, 0)),
            pl.BlockSpec((1, c1), lambda b: (0, 0)),
            pl.BlockSpec((9 * c1, c2), lambda b: (0, 0)),
            pl.BlockSpec((1, c2), lambda b: (0, 0)),
        ],
        out_specs=(pl.BlockSpec((1, c1, H * W), lambda b: (b, 0, 0)),
                   pl.BlockSpec((1, c1, H * W), lambda b: (b, 0, 0)),
                   pl.BlockSpec((1, c2, ho * wo), lambda b: (b, 0, 0))),
        scratch_shapes=[pltpu.VMEM((H + 2, W + 2, cin), jnp.float32),
                        pltpu.VMEM((H + 2, W + 2, c1), jnp.float32),
                        pltpu.VMEM((ho + 2, wo + 2, c1), jnp.float32)],
        compiler_params=pltpu.CompilerParams(
            dimension_semantics=("parallel",)),
    )(x, mean, inv_std, w1r, b1r, w2r, b2r, w3r, b3r)
    return {"conv_1": f1, "conv_2": f2, "conv_3": f3}


def init_params(key, c1=8, c2=16):
    def conv_init(kw, kb, cin, cout):
        w = jax.random.normal(kw, (3, 3, cin, cout), jnp.float32) / jnp.sqrt(9.0 * cin)
        b = jax.random.normal(kb, (cout,), jnp.float32) * 0.01
        return w, b
    k = jax.random.split(key, 6)
    return {
        "conv_1": conv_init(k[0], k[1], 3, c1),
        "conv_2": conv_init(k[2], k[3], c1, c1),
        "conv_3": conv_init(k[4], k[5], c1, c2),
    }


# ----------------------------------------------------------------------------
# LossNet
# ----------------------------------------------------------------------------
class LossNet:
    """Pallas port of the PyTorch LossNet forward pass (loss taps pre-ReLU)."""

    def __init__(self, params, style_img, content_img,
                 style_weight=1_000_000.0, content_weight=10.0):
        self.params = params
        self.style_weight = style_weight
        self.content_weight = content_weight

        cfeat = extract_features(content_img, params)
        sfeat = extract_features(style_img, params)

        self.content_target = _flatten(cfeat[CONTENT_LAYERS[0]])      # (B*C, h*w)
        self.content_channels = int(cfeat[CONTENT_LAYERS[0]].shape[1])
        self.style_channels = tuple(int(sfeat[n].shape[1]) for n in STYLE_LAYERS)

        # All three style-target Grams in a single pallas_call.
        sflat = tuple(_flatten(sfeat[n]) for n in STYLE_LAYERS)
        invs = tuple(1.0 / float(f.shape[-1]) for f in sflat)
        self.style_targets = pl.pallas_call(
            functools.partial(_gram3_kernel, invs=invs),
            out_shape=tuple(jax.ShapeDtypeStruct((f.shape[0], f.shape[0]),
                                                 jnp.float32) for f in sflat),
        )(*sflat)

    def __call__(self, x_nchw):
        feats = extract_features(x_nchw, self.params)
        f1, f2, f3 = (_flatten(feats[n]) for n in STYLE_LAYERS)

        # torch semantics:
        #   style (per layer): 1/C^2 * mean((G_x - G_t)^2), G = F F^T / (h*w)
        #   content:           1/(C*h*w) * sum((x - target)^2)
        g_invs = tuple(1.0 / float(f.shape[-1]) for f in (f1, f2, f3))
        s_scales = tuple(1.0 / float(f.shape[0] * f.shape[0]) / float(c * c)
                         for f, c in zip((f1, f2, f3), self.style_channels))
        c_scale = 1.0 / float(self.content_channels * f3.shape[-1])

        style, content = pl.pallas_call(
            functools.partial(_loss_kernel, g_invs=g_invs,
                              s_scales=s_scales, c_scale=c_scale),
            out_shape=(jax.ShapeDtypeStruct((1, 1), jnp.float32),
                       jax.ShapeDtypeStruct((1, 1), jnp.float32)),
        )(f1, f2, f3, *self.style_targets, self.content_target)

        self.style_score = style[0, 0] * self.style_weight
        self.content_score = content[0, 0] * self.content_weight
        return self.style_score + self.content_score


if __name__ == "__main__":
    key = jax.random.PRNGKey(0)
    kp, kc, ks, kx = jax.random.split(key, 4)

    params = init_params(kp)
    B, C, H, W = 2, 3, 16, 16
    content_img = jax.random.uniform(kc, (B, C, H, W), jnp.float32)
    style_img = jax.random.uniform(ks, (B, C, H, W), jnp.float32)
    x = jax.random.uniform(kx, (B, C, H, W), jnp.float32)

    net = LossNet(params, style_img, content_img)
    loss = net(x)
    jax.block_until_ready(loss)
    print("KERNEL_OK")
</pallas_src>

<mosaic_0001>
module attributes {stable_mosaic.version = 11 : i64} {
  func.func @_features_kernel(%arg0: i32, %arg1: memref<1x16x16x3xf32, #tpu.memory_space<vmem>>, %arg2: memref<1x3xf32, #tpu.memory_space<vmem>>, %arg3: memref<1x3xf32, #tpu.memory_space<vmem>>, %arg4: memref<27x8xbf16, #tpu.memory_space<vmem>>, %arg5: memref<1x8xf32, #tpu.memory_space<vmem>>, %arg6: memref<72x8xbf16, #tpu.memory_space<vmem>>, %arg7: memref<1x8xf32, #tpu.memory_space<vmem>>, %arg8: memref<72x16xbf16, #tpu.memory_space<vmem>>, %arg9: memref<1x16xf32, #tpu.memory_space<vmem>>, %arg10: memref<1x8x256xf32, #tpu.memory_space<vmem>>, %arg11: memref<1x8x256xf32, #tpu.memory_space<vmem>>, %arg12: memref<1x16x64xf32, #tpu.memory_space<vmem>>, %arg13: memref<18x18x3xf32, #tpu.memory_space<vmem>>, %arg14: memref<18x18x8xf32, #tpu.memory_space<vmem>>, %arg15: memref<10x10x8xf32, #tpu.memory_space<vmem>>) attributes {dimension_semantics = [#tpu.dimension_semantics<parallel>], iteration_bounds = array<i64: 2>, scalar_prefetch = 0 : i64, scratch_operands = 3 : i64, tpu.core_type = #tpu.core_type<tc>, window_params = [{transform_indices = @transform_0, window_bounds = array<i64: 1, 16, 16, 3>}, {pipeline_mode = #tpu.pipeline_mode<synchronous>, transform_indices = @transform_1, window_bounds = array<i64: 1, 3>}, {pipeline_mode = #tpu.pipeline_mode<synchronous>, transform_indices = @transform_2, window_bounds = array<i64: 1, 3>}, {pipeline_mode = #tpu.pipeline_mode<synchronous>, transform_indices = @transform_3, window_bounds = array<i64: 27, 8>}, {pipeline_mode = #tpu.pipeline_mode<synchronous>, transform_indices = @transform_4, window_bounds = array<i64: 1, 8>}, {pipeline_mode = #tpu.pipeline_mode<synchronous>, transform_indices = @transform_5, window_bounds = array<i64: 72, 8>}, {pipeline_mode = #tpu.pipeline_mode<synchronous>, transform_indices = @transform_6, window_bounds = array<i64: 1, 8>}, {pipeline_mode = #tpu.pipeline_mode<synchronous>, transform_indices = @transform_7, window_bounds = array<i64: 72, 16>}, {pipeline_mode = #tpu.pipeline_mode<synchronous>, transform_indices = @transform_8, window_bounds = array<i64: 1, 16>}, {transform_indices = @transform_9, window_bounds = array<i64: 1, 8, 256>}, {transform_indices = @transform_10, window_bounds = array<i64: 1, 8, 256>}, {transform_indices = @transform_11, window_bounds = array<i64: 1, 16, 64>}]} {
    %c0 = arith.constant 0 : index
    %c0_0 = arith.constant 0 : index
    %c0_1 = arith.constant 0 : index
    %c0_2 = arith.constant 0 : index
    %0 = vector.load %arg1[%c0, %c0_0, %c0_1, %c0_2] : memref<1x16x16x3xf32, #tpu.memory_space<vmem>>, vector<1x16x16x3xf32>
    %1 = vector.shape_cast %0 : vector<1x16x16x3xf32> to vector<16x16x3xf32>
    %c0_3 = arith.constant 0 : index
    %c0_4 = arith.constant 0 : index
    %2 = vector.load %arg2[%c0_3, %c0_4] : memref<1x3xf32, #tpu.memory_space<vmem>>, vector<1x3xf32>
    %3 = vector.shape_cast %2 : vector<1x3xf32> to vector<1x1x3xf32>
    %4 = vector.broadcast %3 : vector<1x1x3xf32> to vector<16x16x3xf32>
    %5 = arith.subf %1, %4 : vector<16x16x3xf32>
    %c0_5 = arith.constant 0 : index
    %c0_6 = arith.constant 0 : index
    %6 = vector.load %arg3[%c0_5, %c0_6] : memref<1x3xf32, #tpu.memory_space<vmem>>, vector<1x3xf32>
    %7 = vector.shape_cast %6 : vector<1x3xf32> to vector<1x1x3xf32>
    %8 = vector.broadcast %7 : vector<1x1x3xf32> to vector<16x16x3xf32>
    %9 = arith.mulf %5, %8 : vector<16x16x3xf32>
    %cst = arith.constant 0.000000e+00 : f32
    %10 = vector.broadcast %cst : f32 to vector<18x18x3xf32>
    %c0_7 = arith.constant 0 : index
    %c0_8 = arith.constant 0 : index
    %c0_9 = arith.constant 0 : index
    %11 = vector.load %arg13[%c0_7, %c0_8, %c0_9] : memref<18x18x3xf32, #tpu.memory_space<vmem>>, vector<18x18x3xf32>
    tpu.vector_store %arg13[%c0_7, %c0_8, %c0_9], %10 {strides = array<i32>} : memref<18x18x3xf32, #tpu.memory_space<vmem>>, vector<18x18x3xf32>,
    %c1 = arith.constant 1 : index
    %c1_10 = arith.constant 1 : index
    %c0_11 = arith.constant 0 : index
    %12 = vector.load %arg13[%c1, %c1_10, %c0_11] : memref<18x18x3xf32, #tpu.memory_space<vmem>>, vector<16x16x3xf32>
    tpu.vector_store %arg13[%c1, %c1_10, %c0_11], %9 {strides = array<i32>} : memref<18x18x3xf32, #tpu.memory_space<vmem>>, vector<16x16x3xf32>,
    %c0_12 = arith.constant 0 : index
    %c0_13 = arith.constant 0 : index
    %c0_14 = arith.constant 0 : index
    %13 = vector.load %arg13[%c0_12, %c0_13, %c0_14] : memref<18x18x3xf32, #tpu.memory_space<vmem>>, vector<18x18x3xf32>
    %14 = vector.extract_strided_slice %13 {offsets = [0, 0, 0], sizes = [16, 16, 3], strides = [1, 1, 1]} : vector<18x18x3xf32> to vector<16x16x3xf32>
    %15 = vector.extract_strided_slice %13 {offsets = [0, 1, 0], sizes = [16, 16, 3], strides = [1, 1, 1]} : vector<18x18x3xf32> to vector<16x16x3xf32>
    %16 = vector.extract_strided_slice %13 {offsets = [0, 2, 0], sizes = [16, 16, 3], strides = [1, 1, 1]} : vector<18x18x3xf32> to vector<16x16x3xf32>
    %17 = vector.extract_strided_slice %13 {offsets = [1, 0, 0], sizes = [16, 16, 3], strides = [1, 1, 1]} : vector<18x18x3xf32> to vector<16x16x3xf32>
    %18 = vector.extract_strided_slice %13 {offsets = [1, 1, 0], sizes = [16, 16, 3], strides = [1, 1, 1]} : vector<18x18x3xf32> to vector<16x16x3xf32>
    %19 = vector.extract_strided_slice %13 {offsets = [1, 2, 0], sizes = [16, 16, 3], strides = [1, 1, 1]} : vector<18x18x3xf32> to vector<16x16x3xf32>
    %20 = vector.extract_strided_slice %13 {offsets = [2, 0, 0], sizes = [16, 16, 3], strides = [1, 1, 1]} : vector<18x18x3xf32> to vector<16x16x3xf32>
    %21 = vector.extract_strided_slice %13 {offsets = [2, 1, 0], sizes = [16, 16, 3], strides = [1, 1, 1]} : vector<18x18x3xf32> to vector<16x16x3xf32>
    %22 = vector.extract_strided_slice %13 {offsets = [2, 2, 0], sizes = [16, 16, 3], strides = [1, 1, 1]} : vector<18x18x3xf32> to vector<16x16x3xf32>
    %23 = tpu.concatenate %14, %15, %16, %17, %18, %19, %20, %21, %22 in 2 : vector<16x16x3xf32>, vector<16x16x3xf32>, vector<16x16x3xf32>, vector<16x16x3xf32>, vector<16x16x3xf32>, vector<16x16x3xf32>, vector<16x16x3xf32>, vector<16x16x3xf32>, vector<16x16x3xf32> -> vector<16x16x27xf32>
    %24 = vector.shape_cast %23 : vector<16x16x27xf32> to vector<256x27xf32>
    %25 = arith.truncf %24 : vector<256x27xf32> to vector<256x27xbf16>
    %c0_15 = arith.constant 0 : index
    %c0_16 = arith.constant 0 : index
    %26 = vector.load %arg4[%c0_15, %c0_16] : memref<27x8xbf16, #tpu.memory_space<vmem>>, vector<27x8xbf16>
    %cst_17 = arith.constant dense<0.000000e+00> : vector<256x8xf32>
    %27 = tpu.matmul %25, %26, %cst_17 {dimension_numbers = #tpu.dot_dimension_numbers<[1], [0], [0], [1], [0, 0, 1, 1], [], []>} : vector<256x27xbf16>, vector<27x8xbf16>, vector<256x8xf32> -> vector<256x8xf32>
    %c0_18 = arith.constant 0 : index
    %c0_19 = arith.constant 0 : index
    %28 = vector.load %arg5[%c0_18, %c0_19] : memref<1x8xf32, #tpu.memory_space<vmem>>, vector<1x8xf32>
    %29 = vector.broadcast %28 : vector<1x8xf32> to vector<256x8xf32>
    %30 = arith.addf %27, %29 : vector<256x8xf32>
    %31 = tpu.transpose %30, [1, 0] : vector<256x8xf32> -> vector<8x256xf32>
    %c0_20 = arith.constant 0 : index
    %c0_21 = arith.constant 0 : index
    %c0_22 = arith.constant 0 : index
    %32 = vector.load %arg10[%c0_20, %c0_21, %c0_22] : memref<1x8x256xf32, #tpu.memory_space<vmem>>, vector<1x8x256xf32>
    %33 = vector.shape_cast %32 : vector<1x8x256xf32> to vector<8x256xf32>
    %34 = vector.shape_cast %31 : vector<8x256xf32> to vector<1x8x256xf32>
    tpu.vector_store %arg10[%c0_20, %c0_21, %c0_22], %34 {strides = array<i32>} : memref<1x8x256xf32, #tpu.memory_space<vmem>>, vector<1x8x256xf32>,
    %cst_23 = arith.constant 0.000000e+00 : f32
    %35 = vector.broadcast %cst_23 : f32 to vector<256x8xf32>
    %36 = arith.maximumf %30, %35 : vector<256x8xf32>
    %37 = vector.shape_cast %36 : vector<256x8xf32> to vector<16x16x8xf32>
    %cst_24 = arith.constant 0.000000e+00 : f32
    %38 = vector.broadcast %cst_24 : f32 to vector<18x18x8xf32>
    %c0_25 = arith.constant 0 : index
    %c0_26 = arith.constant 0 : index
    %c0_27 = arith.constant 0 : index
    %39 = vector.load %arg14[%c0_25, %c0_26, %c0_27] : memref<18x18x8xf32, #tpu.memory_space<vmem>>, vector<18x18x8xf32>
    tpu.vector_store %arg14[%c0_25, %c0_26, %c0_27], %38 {strides = array<i32>} : memref<18x18x8xf32, #tpu.memory_space<vmem>>, vector<18x18x8xf32>,
    %c1_28 = arith.constant 1 : index
    %c1_29 = arith.constant 1 : index
    %c0_30 = arith.constant 0 : index
    %40 = vector.load %arg14[%c1_28, %c1_29, %c0_30] : memref<18x18x8xf32, #tpu.memory_space<vmem>>, vector<16x16x8xf32>
    tpu.vector_store %arg14[%c1_28, %c1_29, %c0_30], %37 {strides = array<i32>} : memref<18x18x8xf32, #tpu.memory_space<vmem>>, vector<16x16x8xf32>,
    %c0_31 = arith.constant 0 : index
    %c0_32 = arith.constant 0 : index
    %c0_33 = arith.constant 0 : index
    %41 = vector.load %arg14[%c0_31, %c0_32, %c0_33] : memref<18x18x8xf32, #tpu.memory_space<vmem>>, vector<18x18x8xf32>
    %42 = vector.extract_strided_slice %41 {offsets = [0, 0, 0], sizes = [16, 16, 8], strides = [1, 1, 1]} : vector<18x18x8xf32> to vector<16x16x8xf32>
    %43 = vector.extract_strided_slice %41 {offsets = [0, 1, 0], sizes = [16, 16, 8], strides = [1, 1, 1]} : vector<18x18x8xf32> to vector<16x16x8xf32>
    %44 = vector.extract_strided_slice %41 {offsets = [0, 2, 0], sizes = [16, 16, 8], strides = [1, 1, 1]} : vector<18x18x8xf32> to vector<16x16x8xf32>
    %45 = vector.extract_strided_slice %41 {offsets = [1, 0, 0], sizes = [16, 16, 8], strides = [1, 1, 1]} : vector<18x18x8xf32> to vector<16x16x8xf32>
    %46 = vector.extract_strided_slice %41 {offsets = [1, 1, 0], sizes = [16, 16, 8], strides = [1, 1, 1]} : vector<18x18x8xf32> to vector<16x16x8xf32>
    %47 = vector.extract_strided_slice %41 {offsets = [1, 2, 0], sizes = [16, 16, 8], strides = [1, 1, 1]} : vector<18x18x8xf32> to vector<16x16x8xf32>
    %48 = vector.extract_strided_slice %41 {offsets = [2, 0, 0], sizes = [16, 16, 8], strides = [1, 1, 1]} : vector<18x18x8xf32> to vector<16x16x8xf32>
    %49 = vector.extract_strided_slice %41 {offsets = [2, 1, 0], sizes = [16, 16, 8], strides = [1, 1, 1]} : vector<18x18x8xf32> to vector<16x16x8xf32>
    %50 = vector.extract_strided_slice %41 {offsets = [2, 2, 0], sizes = [16, 16, 8], strides = [1, 1, 1]} : vector<18x18x8xf32> to vector<16x16x8xf32>
    %51 = tpu.concatenate %42, %43, %44, %45, %46, %47, %48, %49, %50 in 2 : vector<16x16x8xf32>, vector<16x16x8xf32>, vector<16x16x8xf32>, vector<16x16x8xf32>, vector<16x16x8xf32>, vector<16x16x8xf32>, vector<16x16x8xf32>, vector<16x16x8xf32>, vector<16x16x8xf32> -> vector<16x16x72xf32>
    %52 = vector.shape_cast %51 : vector<16x16x72xf32> to vector<256x72xf32>
    %53 = arith.truncf %52 : vector<256x72xf32> to vector<256x72xbf16>
    %c0_34 = arith.constant 0 : index
    %c0_35 = arith.constant 0 : index
    %54 = vector.load %arg6[%c0_34, %c0_35] : memref<72x8xbf16, #tpu.memory_space<vmem>>, vector<72x8xbf16>
    %cst_36 = arith.constant dense<0.000000e+00> : vector<256x8xf32>
    %55 = tpu.matmul %53, %54, %cst_36 {dimension_numbers = #tpu.dot_dimension_numbers<[1], [0], [0], [1], [0, 0, 1, 1], [], []>} : vector<256x72xbf16>, vector<72x8xbf16>, vector<256x8xf32> -> vector<256x8xf32>
    %c0_37 = arith.constant 0 : index
    %c0_38 = arith.constant 0 : index
    %56 = vector.load %arg7[%c0_37, %c0_38] : memref<1x8xf32, #tpu.memory_space<vmem>>, vector<1x8xf32>
    %57 = vector.broadcast %56 : vector<1x8xf32> to vector<256x8xf32>
    %58 = arith.addf %55, %57 : vector<256x8xf32>
    %59 = tpu.transpose %58, [1, 0] : vector<256x8xf32> -> vector<8x256xf32>
    %c0_39 = arith.constant 0 : index
    %c0_40 = arith.constant 0 : index
    %c0_41 = arith.constant 0 : index
    %60 = vector.load %arg11[%c0_39, %c0_40, %c0_41] : memref<1x8x256xf32, #tpu.memory_space<vmem>>, vector<1x8x256xf32>
    %61 = vector.shape_cast %60 : vector<1x8x256xf32> to vector<8x256xf32>
    %62 = vector.shape_cast %59 : vector<8x256xf32> to vector<1x8x256xf32>
    tpu.vector_store %arg11[%c0_39, %c0_40, %c0_41], %62 {strides = array<i32>} : memref<1x8x256xf32, #tpu.memory_space<vmem>>, vector<1x8x256xf32>,
    %cst_42 = arith.constant 0.000000e+00 : f32
    %63 = vector.broadcast %cst_42 : f32 to vector<256x8xf32>
    %64 = arith.maximumf %58, %63 : vector<256x8xf32>
    %65 = vector.shape_cast %64 : vector<256x8xf32> to vector<16x16x8xf32>
    %66 = vector.shape_cast %65 : vector<16x16x8xf32> to vector<8x2x8x2x8xf32>
    %cst_43 = arith.constant dense<0xFF800000> : vector<8x8x8xf32>
    %67 = vector.multi_reduction <maximumf>, %66, %cst_43 [1, 3] : vector<8x2x8x2x8xf32> to vector<8x8x8xf32>
    %cst_44 = arith.constant 0.000000e+00 : f32
    %68 = vector.broadcast %cst_44 : f32 to vector<10x10x8xf32>
    %c0_45 = arith.constant 0 : index
    %c0_46 = arith.constant 0 : index
    %c0_47 = arith.constant 0 : index
    %69 = vector.load %arg15[%c0_45, %c0_46, %c0_47] : memref<10x10x8xf32, #tpu.memory_space<vmem>>, vector<10x10x8xf32>
    tpu.vector_store %arg15[%c0_45, %c0_46, %c0_47], %68 {strides = array<i32>} : memref<10x10x8xf32, #tpu.memory_space<vmem>>, vector<10x10x8xf32>,
    %c1_48 = arith.constant 1 : index
    %c1_49 = arith.constant 1 : index
    %c0_50 = arith.constant 0 : index
    %70 = vector.load %arg15[%c1_48, %c1_49, %c0_50] : memref<10x10x8xf32, #tpu.memory_space<vmem>>, vector<8x8x8xf32>
    tpu.vector_store %arg15[%c1_48, %c1_49, %c0_50], %67 {strides = array<i32>} : memref<10x10x8xf32, #tpu.memory_space<vmem>>, vector<8x8x8xf32>,
    %c0_51 = arith.constant 0 : index
    %c0_52 = arith.constant 0 : index
    %c0_53 = arith.constant 0 : index
    %71 = vector.load %arg15[%c0_51, %c0_52, %c0_53] : memref<10x10x8xf32, #tpu.memory_space<vmem>>, vector<10x10x8xf32>
    %72 = vector.extract_strided_slice %71 {offsets = [0, 0, 0], sizes = [8, 8, 8], strides = [1, 1, 1]} : vector<10x10x8xf32> to vector<8x8x8xf32>
    %73 = vector.extract_strided_slice %71 {offsets = [0, 1, 0], sizes = [8, 8, 8], strides = [1, 1, 1]} : vector<10x10x8xf32> to vector<8x8x8xf32>
    %74 = vector.extract_strided_slice %71 {offsets = [0, 2, 0], sizes = [8, 8, 8], strides = [1, 1, 1]} : vector<10x10x8xf32> to vector<8x8x8xf32>
    %75 = vector.extract_strided_slice %71 {offsets = [1, 0, 0], sizes = [8, 8, 8], strides = [1, 1, 1]} : vector<10x10x8xf32> to vector<8x8x8xf32>
    %76 = vector.extract_strided_slice %71 {offsets = [1, 1, 0], sizes = [8, 8, 8], strides = [1, 1, 1]} : vector<10x10x8xf32> to vector<8x8x8xf32>
    %77 = vector.extract_strided_slice %71 {offsets = [1, 2, 0], sizes = [8, 8, 8], strides = [1, 1, 1]} : vector<10x10x8xf32> to vector<8x8x8xf32>
    %78 = vector.extract_strided_slice %71 {offsets = [2, 0, 0], sizes = [8, 8, 8], strides = [1, 1, 1]} : vector<10x10x8xf32> to vector<8x8x8xf32>
    %79 = vector.extract_strided_slice %71 {offsets = [2, 1, 0], sizes = [8, 8, 8], strides = [1, 1, 1]} : vector<10x10x8xf32> to vector<8x8x8xf32>
    %80 = vector.extract_strided_slice %71 {offsets = [2, 2, 0], sizes = [8, 8, 8], strides = [1, 1, 1]} : vector<10x10x8xf32> to vector<8x8x8xf32>
    %81 = tpu.concatenate %72, %73, %74, %75, %76, %77, %78, %79, %80 in 2 : vector<8x8x8xf32>, vector<8x8x8xf32>, vector<8x8x8xf32>, vector<8x8x8xf32>, vector<8x8x8xf32>, vector<8x8x8xf32>, vector<8x8x8xf32>, vector<8x8x8xf32>, vector<8x8x8xf32> -> vector<8x8x72xf32>
    %82 = vector.shape_cast %81 : vector<8x8x72xf32> to vector<64x72xf32>
    %83 = arith.truncf %82 : vector<64x72xf32> to vector<64x72xbf16>
    %c0_54 = arith.constant 0 : index
    %c0_55 = arith.constant 0 : index
    %84 = vector.load %arg8[%c0_54, %c0_55] : memref<72x16xbf16, #tpu.memory_space<vmem>>, vector<72x16xbf16>
    %cst_56 = arith.constant dense<0.000000e+00> : vector<64x16xf32>
    %85 = tpu.matmul %83, %84, %cst_56 {dimension_numbers = #tpu.dot_dimension_numbers<[1], [0], [0], [1], [0, 0, 1, 1], [], []>} : vector<64x72xbf16>, vector<72x16xbf16>, vector<64x16xf32> -> vector<64x16xf32>
    %c0_57 = arith.constant 0 : index
    %c0_58 = arith.constant 0 : index
    %86 = vector.load %arg9[%c0_57, %c0_58] : memref<1x16xf32, #tpu.memory_space<vmem>>, vector<1x16xf32>
    %87 = vector.broadcast %86 : vector<1x16xf32> to vector<64x16xf32>
    %88 = arith.addf %85, %87 : vector<64x16xf32>
    %89 = tpu.transpose %88, [1, 0] : vector<64x16xf32> -> vector<16x64xf32>
    %c0_59 = arith.constant 0 : index
    %c0_60 = arith.constant 0 : index
    %c0_61 = arith.constant 0 : index
    %90 = vector.load %arg12[%c0_59, %c0_60, %c0_61] : memref<1x16x64xf32, #tpu.memory_space<vmem>>, vector<1x16x64xf32>
    %91 = vector.shape_cast %90 : vector<1x16x64xf32> to vector<16x64xf32>
    %92 = vector.shape_cast %89 : vector<16x64xf32> to vector<1x16x64xf32>
    tpu.vector_store %arg12[%c0_59, %c0_60, %c0_61], %92 {strides = array<i32>} : memref<1x16x64xf32, #tpu.memory_space<vmem>>, vector<1x16x64xf32>,
    return
  }
  func.func @transform_0(%arg0: i32) -> (i32, i32, i32, i32) {
    %c0_i32 = arith.constant 0 : i32
    %c0_i32_0 = arith.constant 0 : i32
    %c0_i32_1 = arith.constant 0 : i32
    %c0_i32_2 = arith.constant 0 : i32
    return %arg0, %c0_i32, %c0_i32_0, %c0_i32_1 : i32, i32, i32, i32
  }
  func.func @transform_1(%arg0: i32) -> (i32, i32) {
    %c0_i32 = arith.constant 0 : i32
    %c0_i32_0 = arith.constant 0 : i32
    %c0_i32_1 = arith.constant 0 : i32
    return %c0_i32, %c0_i32_0 : i32, i32
  }
  func.func @transform_2(%arg0: i32) -> (i32, i32) {
    %c0_i32 = arith.constant 0 : i32
    %c0_i32_0 = arith.constant 0 : i32
    %c0_i32_1 = arith.constant 0 : i32
    return %c0_i32, %c0_i32_0 : i32, i32
  }
  func.func @transform_3(%arg0: i32) -> (i32, i32) {
    %c0_i32 = arith.constant 0 : i32
    %c0_i32_0 = arith.constant 0 : i32
    %c0_i32_1 = arith.constant 0 : i32
    return %c0_i32, %c0_i32_0 : i32, i32
  }
  func.func @transform_4(%arg0: i32) -> (i32, i32) {
    %c0_i32 = arith.constant 0 : i32
    %c0_i32_0 = arith.constant 0 : i32
    %c0_i32_1 = arith.constant 0 : i32
    return %c0_i32, %c0_i32_0 : i32, i32
  }
  func.func @transform_5(%arg0: i32) -> (i32, i32) {
    %c0_i32 = arith.constant 0 : i32
    %c0_i32_0 = arith.constant 0 : i32
    %c0_i32_1 = arith.constant 0 : i32
    return %c0_i32, %c0_i32_0 : i32, i32
  }
  func.func @transform_6(%arg0: i32) -> (i32, i32) {
    %c0_i32 = arith.constant 0 : i32
    %c0_i32_0 = arith.constant 0 : i32
    %c0_i32_1 = arith.constant 0 : i32
    return %c0_i32, %c0_i32_0 : i32, i32
  }
  func.func @transform_7(%arg0: i32) -> (i32, i32) {
    %c0_i32 = arith.constant 0 : i32
    %c0_i32_0 = arith.constant 0 : i32
    %c0_i32_1 = arith.constant 0 : i32
    return %c0_i32, %c0_i32_0 : i32, i32
  }
  func.func @transform_8(%arg0: i32) -> (i32, i32) {
    %c0_i32 = arith.constant 0 : i32
    %c0_i32_0 = arith.constant 0 : i32
    %c0_i32_1 = arith.constant 0 : i32
    return %c0_i32, %c0_i32_0 : i32, i32
  }
  func.func @transform_9(%arg0: i32) -> (i32, i32, i32) {
    %c0_i32 = arith.constant 0 : i32
    %c0_i32_0 = arith.constant 0 : i32
    %c0_i32_1 = arith.constant 0 : i32
    return %arg0, %c0_i32, %c0_i32_0 : i32, i32, i32
  }
  func.func @transform_10(%arg0: i32) -> (i32, i32, i32) {
    %c0_i32 = arith.constant 0 : i32
    %c0_i32_0 = arith.constant 0 : i32
    %c0_i32_1 = arith.constant 0 : i32
    return %arg0, %c0_i32, %c0_i32_0 : i32, i32, i32
  }
  func.func @transform_11(%arg0: i32) -> (i32, i32, i32) {
    %c0_i32 = arith.constant 0 : i32
    %c0_i32_0 = arith.constant 0 : i32
    %c0_i32_1 = arith.constant 0 : i32
    return %arg0, %c0_i32, %c0_i32_0 : i32, i32, i32
  }
}

</mosaic_0001>

<llo_original>
// kernel: tpu_custom_call.1
$region0: #{tpu_custom_call.1}
  #allocation0 [shape = 'u32[]', space=smem, size = 0x4, offset = 0x4, fixed_abs, tag = 'smem constant byte address 0x4 - core index']
  #allocation1 [shape = 'u32[72,128]{1,0:T(1,128)}', space=vmem, size = 0x9000, scoped, tag = 'internal scratch']
  #allocation2 [shape = 'f32[18,18,3]{2,1,0:T(8,128)}', space=vmem, size = 0x36000, scoped, tag = 'scratch operand']
  #allocation3 [shape = 'f32[18,18,8]{2,1,0:T(8,128)}', space=vmem, size = 0x36000, scoped, tag = 'scratch operand']
  #allocation4 [shape = 'f32[10,10,8]{2,1,0:T(8,128)}', space=vmem, size = 0x14000, scoped, tag = 'scratch operand']
  %s0 = inlined_call_operand.vmem [shape: f32[2,16,16,3], index: 0, kind: input, shape index: {}]
  %s1 = inlined_call_operand.vmem [shape: f32[1,3], index: 1, kind: input, shape index: {}]
  %s2 = inlined_call_operand.vmem [shape: f32[1,3], index: 2, kind: input, shape index: {}]
  %s3 = inlined_call_operand.vmem [shape: bf16[27,8], index: 3, kind: input, shape index: {}]
  %s4 = inlined_call_operand.vmem [shape: f32[1,8], index: 4, kind: input, shape index: {}]
  %s5 = inlined_call_operand.vmem [shape: bf16[72,8], index: 5, kind: input, shape index: {}]
  %s6 = inlined_call_operand.vmem [shape: f32[1,8], index: 6, kind: input, shape index: {}]
  %s7 = inlined_call_operand.vmem [shape: bf16[72,16], index: 7, kind: input, shape index: {}]
  %s8 = inlined_call_operand.vmem [shape: f32[1,16], index: 8, kind: input, shape index: {}]
  %s9 = inlined_call_operand.hbm [shape: f32[2,8,256], index: 9, kind: output, shape index: {0}]
  %s10 = inlined_call_operand.hbm [shape: f32[2,8,256], index: 10, kind: output, shape index: {1}]
  %s11 = inlined_call_operand.hbm [shape: f32[2,16,64], index: 11, kind: output, shape index: {2}]
  %12 = xla_tuple %s9, %s10, %s11
  %s13 = sld [smem:[#allocation0]]
  $region85: #{tpu_custom_call.1} parent=0
    _
  %s15 = ssub.s32 1, %s13
  %s16 = scalar_select 0, %s15, %s13
  $region1: #{tpu_custom_call.1} parent=0
    #allocation5 [shape = 'u8[16384]{0}', space=vmem, size = 0x4000, scoped, tag = 'output window, operand 0']
    #allocation6 [shape = 's32[2]{0}', space=sflag, size = 0x8, scoped, tag = 'scoped memory for tpu_custom_call.1']
    #allocation7 [shape = 'u8[16384]{0}', space=vmem, size = 0x4000, scoped, tag = 'output window, operand 1']
    #allocation8 [shape = 's32[2]{0}', space=sflag, size = 0x8, scoped, tag = 'scoped memory for tpu_custom_call.1']
    #allocation9 [shape = 'u8[16384]{0}', space=vmem, size = 0x4000, scoped, tag = 'output window, operand 2']
    %17 = vsyncpa [#allocation6], 0
    %s18 = scalar_lea.sflag [#allocation6], 1
    %19 = vsyncpa %s18, 0
    %20 = vsyncpa [#allocation8], 0
    %s21 = scalar_lea.sflag [#allocation8], 1
    %22 = vsyncpa %s21, 0
    loop: start=0, step=1, limit=4
    $region2: #{tpu_custom_call.1} parent=1 // loop_pre_header
      _
    $region3: #{tpu_custom_call.1} parent=1 // loop_header
      %s24 = sphi 0, %s28
      %p25 = scmp.ge.s32.totalorder %s24, 4
      %s34 = sphi 0, %s36
      %s37 = sphi 0, %s34
      %s38 = sphi 0, %s37
      %s54 = sphi 0, %s38
      %s58 = sphi 0, %s58
      %s60 = sphi 0, %s58
      %s61 = sphi 0, %s60
      %s75 = sphi 0, %s61
      %s79 = sphi 0, %s79
      %s81 = sphi 0, %s79
      %s82 = sphi 0, %s81
      %s96 = sphi 0, %s82
      %s100 = sphi 0, %s100
      %s102 = sphi 0, %s100
      %s103 = sphi 0, %s102
      %s117 = sphi 0, %s103
      %s121 = sphi 0, %s121
      %s123 = sphi 0, %s121
      %s124 = sphi 0, %s123
      %s138 = sphi 0, %s124
      %s142 = sphi 0, %s142
      %s144 = sphi 0, %s142
      %s145 = sphi 0, %s144
      %s159 = sphi 0, %s145
      %s163 = sphi 0, %s163
      %s165 = sphi 0, %s163
      %s166 = sphi 0, %s165
      %s180 = sphi 0, %s166
      %s184 = sphi 0, %s184
      %s186 = sphi 0, %s184
      %s187 = sphi 0, %s186
      %s201 = sphi 0, %s187
      %s205 = sphi 0, %s205
      %s207 = sphi 0, %s205
      %s208 = sphi 0, %s207
      %s222 = sphi 0, %s208
      %s228 = sphi 0, %s230
      %s231 = sphi 0, %s228
      %s232 = sphi 0, %s231
      %s248 = sphi 0, %s232
      %s254 = sphi 0, %s256
      %s257 = sphi 0, %s254
      %s258 = sphi 0, %s257
      %s274 = sphi 0, %s258
      %s280 = sphi 0, %s282
      %s283 = sphi 0, %s280
      %s284 = sphi 0, %s283
      %s300 = sphi 0, %s284
    $region4: #{tpu_custom_call.1} parent=1 // loop_header_branch
      %27 = sbr.rel (%p25) target = $region8
    $region5: #{tpu_custom_call.1} parent=1 // loop_body
      %s29 = ssub.s32 %s24, 1
      %s30 = ssub.s32 %s24, 2
      %s31 = sadd.s32 %s24, 1
      %s32 = ssub.s32 %s24, %s31
      %p33 = scmp.eq.s32.totalorder %s32, 0
      %s35 = sadd.s32 %s34, 1
      %s36 = scalar_select %p33, %s34, %s35
      %p39 = pneg %p33
      %p40 = scmp.eq.s32.totalorder %s24, 1
      %p41 = por %p39, %p40
      %p42 = scmp.ne.s32.totalorder %s34, %s37
      %p43 = scmp.eq.s32.totalorder %s24, 0
      %p44 = por %p42, %p43
      %p45 = scmp.ne.s32.totalorder %s34, %s37
      %p46 = scmp.eq.s32.totalorder %s29, 1
      %p47 = por %p45, %p46
      %p48 = scmp.ne.s32.totalorder %s37, %s38
      %p49 = scmp.eq.s32.totalorder %s29, 0
      %p50 = por %p48, %p49
      %p51 = scmp.ne.s32.totalorder %s37, %s38
      %p52 = scmp.eq.s32.totalorder %s30, 1
      %p53 = por %p51, %p52
      %p55 = scmp.ne.s32.totalorder %s38, %s54
      %p56 = scmp.eq.s32.totalorder %s30, 0
      %p57 = por %p55, %p56
      %s59 = sadd.s32 %s58, 1
      %p62 = scmp.eq.s32.totalorder %s24, 1
      %p63 = scmp.ne.s32.totalorder %s58, %s60
      %p64 = scmp.eq.s32.totalorder %s24, 0
      %p65 = por %p63, %p64
      %p66 = scmp.ne.s32.totalorder %s58, %s60
      %p67 = scmp.eq.s32.totalorder %s29, 1
      %p68 = por %p66, %p67
      %p69 = scmp.ne.s32.totalorder %s60, %s61
      %p70 = scmp.eq.s32.totalorder %s29, 0
      %p71 = por %p69, %p70
      %p72 = scmp.ne.s32.totalorder %s60, %s61
      %p73 = scmp.eq.s32.totalorder %s30, 1
      %p74 = por %p72, %p73
      %p76 = scmp.ne.s32.totalorder %s61, %s75
      %p77 = scmp.eq.s32.totalorder %s30, 0
      %p78 = por %p76, %p77
      %s80 = sadd.s32 %s79, 1
      %p83 = scmp.eq.s32.totalorder %s24, 1
      %p84 = scmp.ne.s32.totalorder %s79, %s81
      %p85 = scmp.eq.s32.totalorder %s24, 0
      %p86 = por %p84, %p85
      %p87 = scmp.ne.s32.totalorder %s79, %s81
      %p88 = scmp.eq.s32.totalorder %s29, 1
      %p89 = por %p87, %p88
      %p90 = scmp.ne.s32.totalorder %s81, %s82
      %p91 = scmp.eq.s32.totalorder %s29, 0
      %p92 = por %p90, %p91
      %p93 = scmp.ne.s32.totalorder %s81, %s82
      %p94 = scmp.eq.s32.totalorder %s30, 1
      %p95 = por %p93, %p94
      %p97 = scmp.ne.s32.totalorder %s82, %s96
      %p98 = scmp.eq.s32.totalorder %s30, 0
      %p99 = por %p97, %p98
      %s101 = sadd.s32 %s100, 1
      %p104 = scmp.eq.s32.totalorder %s24, 1
      %p105 = scmp.ne.s32.totalorder %s100, %s102
      %p106 = scmp.eq.s32.totalorder %s24, 0
      %p107 = por %p105, %p106
      %p108 = scmp.ne.s32.totalorder %s100, %s102
      %p109 = scmp.eq.s32.totalorder %s29, 1
      %p110 = por %p108, %p109
      %p111 = scmp.ne.s32.totalorder %s102, %s103
      %p112 = scmp.eq.s32.totalorder %s29, 0
      %p113 = por %p111, %p112
      %p114 = scmp.ne.s32.totalorder %s102, %s103
      %p115 = scmp.eq.s32.totalorder %s30, 1
      %p116 = por %p114, %p115
      %p118 = scmp.ne.s32.totalorder %s103, %s117
      %p119 = scmp.eq.s32.totalorder %s30, 0
      %p120 = por %p118, %p119
      %s122 = sadd.s32 %s121, 1
      %p125 = scmp.eq.s32.totalorder %s24, 1
      %p126 = scmp.ne.s32.totalorder %s121, %s123
      %p127 = scmp.eq.s32.totalorder %s24, 0
      %p128 = por %p126, %p127
      %p129 = scmp.ne.s32.totalorder %s121, %s123
      %p130 = scmp.eq.s32.totalorder %s29, 1
      %p131 = por %p129, %p130
      %p132 = scmp.ne.s32.totalorder %s123, %s124
      %p133 = scmp.eq.s32.totalorder %s29, 0
      %p134 = por %p132, %p133
      %p135 = scmp.ne.s32.totalorder %s123, %s124
      %p136 = scmp.eq.s32.totalorder %s30, 1
      %p137 = por %p135, %p136
      %p139 = scmp.ne.s32.totalorder %s124, %s138
      %p140 = scmp.eq.s32.totalorder %s30, 0
      %p141 = por %p139, %p140
      %s143 = sadd.s32 %s142, 1
      %p146 = scmp.eq.s32.totalorder %s24, 1
      %p147 = scmp.ne.s32.totalorder %s142, %s144
      %p148 = scmp.eq.s32.totalorder %s24, 0
      %p149 = por %p147, %p148
      %p150 = scmp.ne.s32.totalorder %s142, %s144
      %p151 = scmp.eq.s32.totalorder %s29, 1
      %p152 = por %p150, %p151
      %p153 = scmp.ne.s32.totalorder %s144, %s145
      %p154 = scmp.eq.s32.totalorder %s29, 0
      %p155 = por %p153, %p154
      %p156 = scmp.ne.s32.totalorder %s144, %s145
      %p157 = scmp.eq.s32.totalorder %s30, 1
      %p158 = por %p156, %p157
      %p160 = scmp.ne.s32.totalorder %s145, %s159
      %p161 = scmp.eq.s32.totalorder %s30, 0
      %p162 = por %p160, %p161
      %s164 = sadd.s32 %s163, 1
      %p167 = scmp.eq.s32.totalorder %s24, 1
      %p168 = scmp.ne.s32.totalorder %s163, %s165
      %p169 = scmp.eq.s32.totalorder %s24, 0
      %p170 = por %p168, %p169
      %p171 = scmp.ne.s32.totalorder %s163, %s165
      %p172 = scmp.eq.s32.totalorder %s29, 1
      %p173 = por %p171, %p172
      %p174 = scmp.ne.s32.totalorder %s165, %s166
      %p175 = scmp.eq.s32.totalorder %s29, 0
      %p176 = por %p174, %p175
      %p177 = scmp.ne.s32.totalorder %s165, %s166
      %p178 = scmp.eq.s32.totalorder %s30, 1
      %p179 = por %p177, %p178
      %p181 = scmp.ne.s32.totalorder %s166, %s180
      %p182 = scmp.eq.s32.totalorder %s30, 0
      %p183 = por %p181, %p182
      %s185 = sadd.s32 %s184, 1
      %p188 = scmp.eq.s32.totalorder %s24, 1
      %p189 = scmp.ne.s32.totalorder %s184, %s186
      %p190 = scmp.eq.s32.totalorder %s24, 0
      %p191 = por %p189, %p190
      %p192 = scmp.ne.s32.totalorder %s184, %s186
      %p193 = scmp.eq.s32.totalorder %s29, 1
      %p194 = por %p192, %p193
      %p195 = scmp.ne.s32.totalorder %s186, %s187
      %p196 = scmp.eq.s32.totalorder %s29, 0
      %p197 = por %p195, %p196
      %p198 = scmp.ne.s32.totalorder %s186, %s187
      %p199 = scmp.eq.s32.totalorder %s30, 1
      %p200 = por %p198, %p199
      %p202 = scmp.ne.s32.totalorder %s187, %s201
      %p203 = scmp.eq.s32.totalorder %s30, 0
      %p204 = por %p202, %p203
      %s206 = sadd.s32 %s205, 1
      %p209 = scmp.eq.s32.totalorder %s24, 1
      %p210 = scmp.ne.s32.totalorder %s205, %s207
      %p211 = scmp.eq.s32.totalorder %s24, 0
      %p212 = por %p210, %p211
      %p213 = scmp.ne.s32.totalorder %s205, %s207
      %p214 = scmp.eq.s32.totalorder %s29, 1
      %p215 = por %p213, %p214
      %p216 = scmp.ne.s32.totalorder %s207, %s208
      %p217 = scmp.eq.s32.totalorder %s29, 0
      %p218 = por %p216, %p217
      %p219 = scmp.ne.s32.totalorder %s207, %s208
      %p220 = scmp.eq.s32.totalorder %s30, 1
      %p221 = por %p219, %p220
      %p223 = scmp.ne.s32.totalorder %s208, %s222
      %p224 = scmp.eq.s32.totalorder %s30, 0
      %p225 = por %p223, %p224
      %s226 = ssub.s32 %s24, %s31
      %p227 = scmp.eq.s32.totalorder %s226, 0
      %s229 = sadd.s32 %s228, 1
      %s230 = scalar_select %p227, %s228, %s229
      %p233 = pneg %p227
      %p234 = scmp.eq.s32.totalorder %s24, 1
      %p235 = por %p233, %p234
      %p236 = scmp.ne.s32.totalorder %s228, %s231
      %p237 = scmp.eq.s32.totalorder %s24, 0
      %p238 = por %p236, %p237
      %p239 = scmp.ne.s32.totalorder %s228, %s231
      %p240 = scmp.eq.s32.totalorder %s29, 1
      %p241 = por %p239, %p240
      %p242 = scmp.ne.s32.totalorder %s231, %s232
      %p243 = scmp.eq.s32.totalorder %s29, 0
      %p244 = por %p242, %p243
      %p245 = scmp.ne.s32.totalorder %s231, %s232
      %p246 = scmp.eq.s32.totalorder %s30, 1
      %p247 = por %p245, %p246
      %p249 = scmp.ne.s32.totalorder %s232, %s248
      %p250 = scmp.eq.s32.totalorder %s30, 0
      %p251 = por %p249, %p250
      %s252 = ssub.s32 %s24, %s31
      %p253 = scmp.eq.s32.totalorder %s252, 0
      %s255 = sadd.s32 %s254, 1
      %s256 = scalar_select %p253, %s254, %s255
      %p259 = pneg %p253
      %p260 = scmp.eq.s32.totalorder %s24, 1
      %p261 = por %p259, %p260
      %p262 = scmp.ne.s32.totalorder %s254, %s257
      %p263 = scmp.eq.s32.totalorder %s24, 0
      %p264 = por %p262, %p263
      %p265 = scmp.ne.s32.totalorder %s254, %s257
      %p266 = scmp.eq.s32.totalorder %s29, 1
      %p267 = por %p265, %p266
      %p268 = scmp.ne.s32.totalorder %s257, %s258
      %p269 = scmp.eq.s32.totalorder %s29, 0
      %p270 = por %p268, %p269
      %p271 = scmp.ne.s32.totalorder %s257, %s258
      %p272 = scmp.eq.s32.totalorder %s30, 1
      %p273 = por %p271, %p272
      %p275 = scmp.ne.s32.totalorder %s258, %s274
      %p276 = scmp.eq.s32.totalorder %s30, 0
      %p277 = por %p275, %p276
      %s278 = ssub.s32 %s24, %s31
      %p279 = scmp.eq.s32.totalorder %s278, 0
      %s281 = sadd.s32 %s280, 1
      %s282 = scalar_select %p279, %s280, %s281
      %p285 = pneg %p279
      %p286 = scmp.eq.s32.totalorder %s24, 1
      %p287 = por %p285, %p286
      %p288 = scmp.ne.s32.totalorder %s280, %s283
      %p289 = scmp.eq.s32.totalorder %s24, 0
      %p290 = por %p288, %p289
      %p291 = scmp.ne.s32.totalorder %s280, %s283
      %p292 = scmp.eq.s32.totalorder %s29, 1
      %p293 = por %p291, %p292
      %p294 = scmp.ne.s32.totalorder %s283, %s284
      %p295 = scmp.eq.s32.totalorder %s29, 0
      %p296 = por %p294, %p295
      %p297 = scmp.ne.s32.totalorder %s283, %s284
      %p298 = scmp.eq.s32.totalorder %s30, 1
      %p299 = por %p297, %p298
      %p301 = scmp.ne.s32.totalorder %s284, %s300
      %p302 = scmp.eq.s32.totalorder %s30, 0
      %p303 = por %p301, %p302
      %p304 = scmp.le.s32.totalorder 1, %s24
      %p305 = scmp.lt.s32.totalorder %s24, 3
      %p306 = pnand %p304, %p305
      %p307 = pneg %p306
      // Predicated region
      $region9: #{tpu_custom_call.1} parent=5 // pred_check
        _
      $region10: #{tpu_custom_call.1} parent=5 // pred_check_branch
        %309 = sbr.rel (%p306) target = $region12
      $region11: #{tpu_custom_call.1} parent=5 // pred_region
        %s310 = ssub.s32 %s24, 1
        // Predicated region
        $region13: #{tpu_custom_call.1} parent=11 // pred_check
          %p311 = pneg %p71
        $region14: #{tpu_custom_call.1} parent=11 // pred_check_branch
          %313 = sbr.rel (%p311) target = $region16
        $region15: #{tpu_custom_call.1} parent=11 // pred_region
          _
        $region16: #{tpu_custom_call.1} parent=11 // pred_fallthru
          _
        // Predicated region
        $region17: #{tpu_custom_call.1} parent=11 // pred_check
          %p314 = pneg %p92
        $region18: #{tpu_custom_call.1} parent=11 // pred_check_branch
          %316 = sbr.rel (%p314) target = $region20
        $region19: #{tpu_custom_call.1} parent=11 // pred_region
          _
        $region20: #{tpu_custom_call.1} parent=11 // pred_fallthru
          _
        // Predicated region
        $region21: #{tpu_custom_call.1} parent=11 // pred_check
          %p317 = pneg %p113
        $region22: #{tpu_custom_call.1} parent=11 // pred_check_branch
          %319 = sbr.rel (%p317) target = $region24
        $region23: #{tpu_custom_call.1} parent=11 // pred_region
          _
        $region24: #{tpu_custom_call.1} parent=11 // pred_fallthru
          _
        // Predicated region
        $region25: #{tpu_custom_call.1} parent=11 // pred_check
          %p320 = pneg %p134
        $region26: #{tpu_custom_call.1} parent=11 // pred_check_branch
          %322 = sbr.rel (%p320) target = $region28
        $region27: #{tpu_custom_call.1} parent=11 // pred_region
          _
        $region28: #{tpu_custom_call.1} parent=11 // pred_fallthru
          _
        // Predicated region
        $region29: #{tpu_custom_call.1} parent=11 // pred_check
          %p323 = pneg %p155
        $region30: #{tpu_custom_call.1} parent=11 // pred_check_branch
          %325 = sbr.rel (%p323) target = $region32
        $region31: #{tpu_custom_call.1} parent=11 // pred_region
          _
        $region32: #{tpu_custom_call.1} parent=11 // pred_fallthru
          _
        // Predicated region
        $region33: #{tpu_custom_call.1} parent=11 // pred_check
          %p326 = pneg %p176
        $region34: #{tpu_custom_call.1} parent=11 // pred_check_branch
          %328 = sbr.rel (%p326) target = $region36
        $region35: #{tpu_custom_call.1} parent=11 // pred_region
          _
        $region36: #{tpu_custom_call.1} parent=11 // pred_fallthru
          _
        // Predicated region
        $region37: #{tpu_custom_call.1} parent=11 // pred_check
          %p329 = pneg %p197
        $region38: #{tpu_custom_call.1} parent=11 // pred_check_branch
          %331 = sbr.rel (%p329) target = $region40
        $region39: #{tpu_custom_call.1} parent=11 // pred_region
          _
        $region40: #{tpu_custom_call.1} parent=11 // pred_fallthru
          _
        // Predicated region
        $region41: #{tpu_custom_call.1} parent=11 // pred_check
          %p332 = pneg %p218
        $region42: #{tpu_custom_call.1} parent=11 // pred_check_branch
          %334 = sbr.rel (%p332) target = $region44
        $region43: #{tpu_custom_call.1} parent=11 // pred_region
          _
        $region44: #{tpu_custom_call.1} parent=11 // pred_fallthru
          _
      $region12: #{tpu_custom_call.1} parent=5 // pred_fallthru
        _
      %p335 = scmp.lt.s32.totalorder %s24, 2
      // Predicated region
      $region45: #{tpu_custom_call.1} parent=5 // pred_check
        %p336 = pneg %p335
      $region46: #{tpu_custom_call.1} parent=5 // pred_check_branch
        %338 = sbr.rel (%p336) target = $region48
      $region47: #{tpu_custom_call.1} parent=5 // pred_region
        // Predicated region
        $region49: #{tpu_custom_call.1} parent=47 // pred_check
          %p339 = pneg %p44
        $region50: #{tpu_custom_call.1} parent=47 // pred_check_branch
          %341 = sbr.rel (%p339) target = $region52
        $region51: #{tpu_custom_call.1} parent=47 // pred_region
          %p342 = scmp.lt.s32.totalorder %s24, 1
          %s343 = scalar_select %p342, %s24, 1
          %s344 = smul.addr %s343, 32
          %s345 = smul.addr %s344, 8
          %s346 = scalar_lea.vmem %s0, %s345
        $region52: #{tpu_custom_call.1} parent=47 // pred_fallthru
          _
      $region48: #{tpu_custom_call.1} parent=5 // pred_fallthru
        _
      %p347 = scmp.le.s32.totalorder 1, %s24
      %p348 = scmp.lt.s32.totalorder %s24, 3
      %p349 = pnand %p347, %p348
      %p350 = pneg %p349
      // Predicated region
      $region53: #{tpu_custom_call.1} parent=5 // pred_check
        _
      $region54: #{tpu_custom_call.1} parent=5 // pred_check_branch
        %352 = sbr.rel (%p349) target = $region56
      $region55: #{tpu_custom_call.1} parent=5 // pred_region
        %s353 = ssub.s32 %s24, 1
        %p354 = scmp.lt.s32.totalorder %s29, 1
        %s355 = scalar_select %p354, %s29, 1
        %s356 = smul.addr %s355, 32
        %s357 = smul.addr %s356, 8
        %s358 = scalar_lea.vmem %s0, %s357
        %p359 = pneg %p50
        %p360 = pneg %p47
        %p361 = pneg %p71
        %p362 = pneg %p68
        %p363 = pneg %p92
        %p364 = pneg %p89
        %p365 = pneg %p113
        %p366 = pneg %p110
        %p367 = pneg %p134
        %p368 = pneg %p131
        %p369 = pneg %p155
        %p370 = pneg %p152
        %p371 = pneg %p176
        %p372 = pneg %p173
        %p373 = pneg %p197
        %p374 = pneg %p194
        %p375 = pneg %p218
        %p376 = pneg %p215
        %p377 = pneg %p244
        %p378 = pneg %p241
        %s379 = sand.u32 %s231, 1
        %s380 = scalar_lea.sflag [#allocation6], %s379
        %s381 = sand.u32 %s231, 1
        %s382 = smul.addr %s381, 16
        %s383 = scalar_lea.vmem [#allocation5], %s382
        %p384 = pneg %p270
        %p385 = pneg %p267
        %s386 = sand.u32 %s29, 1
        %s387 = scalar_lea.sflag [#allocation8], %s386
        %s388 = sand.u32 %s257, 1
        %s389 = smul.addr %s388, 16
        %s390 = scalar_lea.vmem [#allocation7], %s389
        %p391 = pneg %p296
        %p392 = pneg %p293
        %s393 = sand.u32 %s29, 1
        %s394 = scalar_lea.sflag [#allocation8], %s393
        %s395 = sand.u32 %s283, 1
        %s396 = smul.addr %s395, 16
        %s397 = scalar_lea.vmem [#allocation9], %s396
        %p398 = scmp.lt.s32.totalorder %s29, 1
        %s399 = scalar_select %p398, %s29, 1
        %s400 = smul.addr %s399, 32
        %s401 = smul.addr %s400, 8
        %s402 = scalar_lea.vmem %s0, %s401
        %v404 = vld [vmem:[%s402] sm:$0xff]
        %v405 = vld [vmem:[%s402 + $0x8] sm:$0xff]
        %v406 = vld [vmem:[%s402 + $0x10] sm:$0xff]
        %v407 = vld [vmem:[%s402 + $0x18] sm:$0xff]
        %v408 = vld [vmem:[%s402 + $0x20] sm:$0xff]
        %v409 = vld [vmem:[%s402 + $0x28] sm:$0xff]
        %v410 = vld [vmem:[%s402 + $0x30] sm:$0xff]
        %v411 = vld [vmem:[%s402 + $0x38] sm:$0xff]
        %v412 = vld [vmem:[%s402 + $0x40] sm:$0xff]
        %v413 = vld [vmem:[%s402 + $0x48] sm:$0xff]
        %v414 = vld [vmem:[%s402 + $0x50] sm:$0xff]
        %v415 = vld [vmem:[%s402 + $0x58] sm:$0xff]
        %v416 = vld [vmem:[%s402 + $0x60] sm:$0xff]
        %v417 = vld [vmem:[%s402 + $0x68] sm:$0xff]
        %v418 = vld [vmem:[%s402 + $0x70] sm:$0xff]
        %v419 = vld [vmem:[%s402 + $0x78] sm:$0xff]
        %v420 = vld [vmem:[%s402 + $0x80] sm:$0xff]
        %v421 = vld [vmem:[%s402 + $0x88] sm:$0xff]
        %v422 = vld [vmem:[%s402 + $0x90] sm:$0xff]
        %v423 = vld [vmem:[%s402 + $0x98] sm:$0xff]
        %v424 = vld [vmem:[%s402 + $0xa0] sm:$0xff]
        %v425 = vld [vmem:[%s402 + $0xa8] sm:$0xff]
        %v426 = vld [vmem:[%s402 + $0xb0] sm:$0xff]
        %v427 = vld [vmem:[%s402 + $0xb8] sm:$0xff]
        %v428 = vld [vmem:[%s402 + $0xc0] sm:$0xff]
        %v429 = vld [vmem:[%s402 + $0xc8] sm:$0xff]
        %v430 = vld [vmem:[%s402 + $0xd0] sm:$0xff]
        %v431 = vld [vmem:[%s402 + $0xd8] sm:$0xff]
        %v432 = vld [vmem:[%s402 + $0xe0] sm:$0xff]
        %v433 = vld [vmem:[%s402 + $0xe8] sm:$0xff]
        %v434 = vld [vmem:[%s402 + $0xf0] sm:$0xff]
        %v435 = vld [vmem:[%s402 + $0xf8] sm:$0xff]
        %v436 = vld [vmem:[%s1] sm:$0x1]
        %v438 = vperm.slane %v436, 0
        %v440 = vsub.f32 %v404, %v438
        %v441 = vsub.f32 %v405, %v438
        %v442 = vsub.f32 %v406, %v438
        %v443 = vsub.f32 %v407, %v438
        %v444 = vsub.f32 %v408, %v438
        %v445 = vsub.f32 %v409, %v438
        %v446 = vsub.f32 %v410, %v438
        %v447 = vsub.f32 %v411, %v438
        %v448 = vsub.f32 %v412, %v438
        %v449 = vsub.f32 %v413, %v438
        %v450 = vsub.f32 %v414, %v438
        %v451 = vsub.f32 %v415, %v438
        %v452 = vsub.f32 %v416, %v438
        %v453 = vsub.f32 %v417, %v438
        %v454 = vsub.f32 %v418, %v438
        %v455 = vsub.f32 %v419, %v438
        %v456 = vsub.f32 %v420, %v438
        %v457 = vsub.f32 %v421, %v438
        %v458 = vsub.f32 %v422, %v438
        %v459 = vsub.f32 %v423, %v438
        %v460 = vsub.f32 %v424, %v438
        %v461 = vsub.f32 %v425, %v438
        %v462 = vsub.f32 %v426, %v438
        %v463 = vsub.f32 %v427, %v438
        %v464 = vsub.f32 %v428, %v438
        %v465 = vsub.f32 %v429, %v438
        %v466 = vsub.f32 %v430, %v438
        %v467 = vsub.f32 %v431, %v438
        %v468 = vsub.f32 %v432, %v438
        %v469 = vsub.f32 %v433, %v438
        %v470 = vsub.f32 %v434, %v438
        %v471 = vsub.f32 %v435, %v438
        %v472 = vld [vmem:[%s2] sm:$0x1]
        %v474 = vperm.slane %v472, 0
        %v476 = vmul.f32 %v440, %v474
        %v477 = vmul.f32 %v441, %v474
        %v478 = vmul.f32 %v442, %v474
        %v479 = vmul.f32 %v443, %v474
        %v480 = vmul.f32 %v444, %v474
        %v481 = vmul.f32 %v445, %v474
        %v482 = vmul.f32 %v446, %v474
        %v483 = vmul.f32 %v447, %v474
        %v484 = vmul.f32 %v448, %v474
        %v485 = vmul.f32 %v449, %v474
        %v486 = vmul.f32 %v450, %v474
        %v487 = vmul.f32 %v451, %v474
        %v488 = vmul.f32 %v452, %v474
        %v489 = vmul.f32 %v453, %v474
        %v490 = vmul.f32 %v454, %v474
        %v491 = vmul.f32 %v455, %v474
        %v492 = vmul.f32 %v456, %v474
        %v493 = vmul.f32 %v457, %v474
        %v494 = vmul.f32 %v458, %v474
        %v495 = vmul.f32 %v459, %v474
        %v496 = vmul.f32 %v460, %v474
        %v497 = vmul.f32 %v461, %v474
        %v498 = vmul.f32 %v462, %v474
        %v499 = vmul.f32 %v463, %v474
        %v500 = vmul.f32 %v464, %v474
        %v501 = vmul.f32 %v465, %v474
        %v502 = vmul.f32 %v466, %v474
        %v503 = vmul.f32 %v467, %v474
        %v504 = vmul.f32 %v468, %v474
        %v505 = vmul.f32 %v469, %v474
        %v506 = vmul.f32 %v470, %v474
        %v507 = vmul.f32 %v471, %v474
        %vm508 = vcmask 23552
        %509 = vst.msk [vmem:[#allocation2] sm:$0xff] %vm508, 0.0
        %510 = vst.msk [vmem:[#allocation2 + $0x8] sm:$0xff] %vm508, 0.0
        %vm511 = vcmask 17408
        %512 = vst.msk [vmem:[#allocation2 + $0x10] sm:$0x3] %vm511, 0.0
        %513 = vst.msk [vmem:[#allocation2 + $0x18] sm:$0xff] %vm508, 0.0
        %514 = vst.msk [vmem:[#allocation2 + $0x20] sm:$0xff] %vm508, 0.0
        %515 = vst.msk [vmem:[#allocation2 + $0x28] sm:$0x3] %vm511, 0.0
        %516 = vst.msk [vmem:[#allocation2 + $0x30] sm:$0xff] %vm508, 0.0
        %517 = vst.msk [vmem:[#allocation2 + $0x38] sm:$0xff] %vm508, 0.0
        %518 = vst.msk [vmem:[#allocation2 + $0x40] sm:$0x3] %vm511, 0.0
        %519 = vst.msk [vmem:[#allocation2 + $0x48] sm:$0xff] %vm508, 0.0
        %520 = vst.msk [vmem:[#allocation2 + $0x50] sm:$0xff] %vm508, 0.0
        %521 = vst.msk [vmem:[#allocation2 + $0x58] sm:$0x3] %vm511, 0.0
        %522 = vst.msk [vmem:[#allocation2 + $0x60] sm:$0xff] %vm508, 0.0
        %523 = vst.msk [vmem:[#allocation2 + $0x68] sm:$0xff] %vm508, 0.0
        %524 = vst.msk [vmem:[#allocation2 + $0x70] sm:$0x3] %vm511, 0.0
        %525 = vst.msk [vmem:[#allocation2 + $0x78] sm:$0xff] %vm508, 0.0
        %526 = vst.msk [vmem:[#allocation2 + $0x80] sm:$0xff] %vm508, 0.0
        %527 = vst.msk [vmem:[#allocation2 + $0x88] sm:$0x3] %vm511, 0.0
        %528 = vst.msk [vmem:[#allocation2 + $0x90] sm:$0xff] %vm508, 0.0
        %529 = vst.msk [vmem:[#allocation2 + $0x98] sm:$0xff] %vm508, 0.0
        %530 = vst.msk [vmem:[#allocation2 + $0xa0] sm:$0x3] %vm511, 0.0
        %531 = vst.msk [vmem:[#allocation2 + $0xa8] sm:$0xff] %vm508, 0.0
        %532 = vst.msk [vmem:[#allocation2 + $0xb0] sm:$0xff] %vm508, 0.0
        %533 = vst.msk [vmem:[#allocation2 + $0xb8] sm:$0x3] %vm511, 0.0
        %534 = vst.msk [vmem:[#allocation2 + $0xc0] sm:$0xff] %vm508, 0.0
        %535 = vst.msk [vmem:[#allocation2 + $0xc8] sm:$0xff] %vm508, 0.0
        %536 = vst.msk [vmem:[#allocation2 + $0xd0] sm:$0x3] %vm511, 0.0
        %537 = vst.msk [vmem:[#allocation2 + $0xd8] sm:$0xff] %vm508, 0.0
        %538 = vst.msk [vmem:[#allocation2 + $0xe0] sm:$0xff] %vm508, 0.0
        %539 = vst.msk [vmem:[#allocation2 + $0xe8] sm:$0x3] %vm511, 0.0
        %540 = vst.msk [vmem:[#allocation2 + $0xf0] sm:$0xff] %vm508, 0.0
        %541 = vst.msk [vmem:[#allocation2 + $0xf8] sm:$0xff] %vm508, 0.0
        %542 = vst.msk [vmem:[#allocation2 + $0x100] sm:$0x3] %vm511, 0.0
        %543 = vst.msk [vmem:[#allocation2 + $0x108] sm:$0xff] %vm508, 0.0
        %544 = vst.msk [vmem:[#allocation2 + $0x110] sm:$0xff] %vm508, 0.0
        %545 = vst.msk [vmem:[#allocation2 + $0x118] sm:$0x3] %vm511, 0.0
        %546 = vst.msk [vmem:[#allocation2 + $0x120] sm:$0xff] %vm508, 0.0
        %547 = vst.msk [vmem:[#allocation2 + $0x128] sm:$0xff] %vm508, 0.0
        %548 = vst.msk [vmem:[#allocation2 + $0x130] sm:$0x3] %vm511, 0.0
        %549 = vst.msk [vmem:[#allocation2 + $0x138] sm:$0xff] %vm508, 0.0
        %550 = vst.msk [vmem:[#allocation2 + $0x140] sm:$0xff] %vm508, 0.0
        %551 = vst.msk [vmem:[#allocation2 + $0x148] sm:$0x3] %vm511, 0.0
        %552 = vst.msk [vmem:[#allocation2 + $0x150] sm:$0xff] %vm508, 0.0
        %553 = vst.msk [vmem:[#allocation2 + $0x158] sm:$0xff] %vm508, 0.0
        %554 = vst.msk [vmem:[#allocation2 + $0x160] sm:$0x3] %vm511, 0.0
        %555 = vst.msk [vmem:[#allocation2 + $0x168] sm:$0xff] %vm508, 0.0
        %556 = vst.msk [vmem:[#allocation2 + $0x170] sm:$0xff] %vm508, 0.0
        %557 = vst.msk [vmem:[#allocation2 + $0x178] sm:$0x3] %vm511, 0.0
        %558 = vst.msk [vmem:[#allocation2 + $0x180] sm:$0xff] %vm508, 0.0
        %559 = vst.msk [vmem:[#allocation2 + $0x188] sm:$0xff] %vm508, 0.0
        %560 = vst.msk [vmem:[#allocation2 + $0x190] sm:$0x3] %vm511, 0.0
        %561 = vst.msk [vmem:[#allocation2 + $0x198] sm:$0xff] %vm508, 0.0
        %562 = vst.msk [vmem:[#allocation2 + $0x1a0] sm:$0xff] %vm508, 0.0
        %563 = vst.msk [vmem:[#allocation2 + $0x1a8] sm:$0x3] %vm511, 0.0
        %s564 = scalar_lea.vmem [#allocation2], 24
        %565 = vst.msk [vmem:[%s564 + $0x1] sm:$0xff] %vm508, %v476
        %566 = vst.msk [vmem:[%s564 + $0x9] sm:$0xff] %vm508, %v477
        %567 = vst.msk [vmem:[%s564 + $0x19] sm:$0xff] %vm508, %v478
        %568 = vst.msk [vmem:[%s564 + $0x21] sm:$0xff] %vm508, %v479
        %569 = vst.msk [vmem:[%s564 + $0x31] sm:$0xff] %vm508, %v480
        %570 = vst.msk [vmem:[%s564 + $0x39] sm:$0xff] %vm508, %v481
        %571 = vst.msk [vmem:[%s564 + $0x49] sm:$0xff] %vm508, %v482
        %572 = vst.msk [vmem:[%s564 + $0x51] sm:$0xff] %vm508, %v483
        %573 = vst.msk [vmem:[%s564 + $0x61] sm:$0xff] %vm508, %v484
        %574 = vst.msk [vmem:[%s564 + $0x69] sm:$0xff] %vm508, %v485
        %575 = vst.msk [vmem:[%s564 + $0x79] sm:$0xff] %vm508, %v486
        %576 = vst.msk [vmem:[%s564 + $0x81] sm:$0xff] %vm508, %v487
        %577 = vst.msk [vmem:[%s564 + $0x91] sm:$0xff] %vm508, %v488
        %578 = vst.msk [vmem:[%s564 + $0x99] sm:$0xff] %vm508, %v489
        %579 = vst.msk [vmem:[%s564 + $0xa9] sm:$0xff] %vm508, %v490
        %580 = vst.msk [vmem:[%s564 + $0xb1] sm:$0xff] %vm508, %v491
        %581 = vst.msk [vmem:[%s564 + $0xc1] sm:$0xff] %vm508, %v492
        %582 = vst.msk [vmem:[%s564 + $0xc9] sm:$0xff] %vm508, %v493
        %583 = vst.msk [vmem:[%s564 + $0xd9] sm:$0xff] %vm508, %v494
        %584 = vst.msk [vmem:[%s564 + $0xe1] sm:$0xff] %vm508, %v495
        %585 = vst.msk [vmem:[%s564 + $0xf1] sm:$0xff] %vm508, %v496
        %586 = vst.msk [vmem:[%s564 + $0xf9] sm:$0xff] %vm508, %v497
        %587 = vst.msk [vmem:[%s564 + $0x109] sm:$0xff] %vm508, %v498
        %588 = vst.msk [vmem:[%s564 + $0x111] sm:$0xff] %vm508, %v499
        %589 = vst.msk [vmem:[%s564 + $0x121] sm:$0xff] %vm508, %v500
        %590 = vst.msk [vmem:[%s564 + $0x129] sm:$0xff] %vm508, %v501
        %591 = vst.msk [vmem:[%s564 + $0x139] sm:$0xff] %vm508, %v502
        %592 = vst.msk [vmem:[%s564 + $0x141] sm:$0xff] %vm508, %v503
        %593 = vst.msk [vmem:[%s564 + $0x151] sm:$0xff] %vm508, %v504
        %594 = vst.msk [vmem:[%s564 + $0x159] sm:$0xff] %vm508, %v505
        %595 = vst.msk [vmem:[%s564 + $0x169] sm:$0xff] %vm508, %v506
        %596 = vst.msk [vmem:[%s564 + $0x171] sm:$0xff] %vm508, %v507
        %v597 = vld [vmem:[#allocation2] sm:$0xff]
        %v598 = vld [vmem:[#allocation2 + $0x8] sm:$0xff]
        %v599 = vld [vmem:[#allocation2 + $0x10] sm:$0x3]
        %v600 = vld [vmem:[#allocation2 + $0x18] sm:$0xff]
        %v601 = vld [vmem:[#allocation2 + $0x20] sm:$0xff]
        %v602 = vld [vmem:[#allocation2 + $0x28] sm:$0x3]
        %v603 = vld [vmem:[#allocation2 + $0x30] sm:$0xff]
        %v604 = vld [vmem:[#allocation2 + $0x38] sm:$0xff]
        %v605 = vld [vmem:[#allocation2 + $0x40] sm:$0x3]
        %v606 = vld [vmem:[#allocation2 + $0x48] sm:$0xff]
        %v607 = vld [vmem:[#allocation2 + $0x50] sm:$0xff]
        %v608 = vld [vmem:[#allocation2 + $0x58] sm:$0x3]
        %v609 = vld [vmem:[#allocation2 + $0x60] sm:$0xff]
        %v610 = vld [vmem:[#allocation2 + $0x68] sm:$0xff]
        %v611 = vld [vmem:[#allocation2 + $0x70] sm:$0x3]
        %v612 = vld [vmem:[#allocation2 + $0x78] sm:$0xff]
        %v613 = vld [vmem:[#allocation2 + $0x80] sm:$0xff]
        %v614 = vld [vmem:[#allocation2 + $0x88] sm:$0x3]
        %v615 = vld [vmem:[#allocation2 + $0x90] sm:$0xff]
        %v616 = vld [vmem:[#allocation2 + $0x98] sm:$0xff]
        %v617 = vld [vmem:[#allocation2 + $0xa0] sm:$0x3]
        %v618 = vld [vmem:[#allocation2 + $0xa8] sm:$0xff]
        %v619 = vld [vmem:[#allocation2 + $0xb0] sm:$0xff]
        %v620 = vld [vmem:[#allocation2 + $0xb8] sm:$0x3]
        %v621 = vld [vmem:[#allocation2 + $0xc0] sm:$0xff]
        %v622 = vld [vmem:[#allocation2 + $0xc8] sm:$0xff]
        %v623 = vld [vmem:[#allocation2 + $0xd0] sm:$0x3]
        %v624 = vld [vmem:[#allocation2 + $0xd8] sm:$0xff]
        %v625 = vld [vmem:[#allocation2 + $0xe0] sm:$0xff]
        %v626 = vld [vmem:[#allocation2 + $0xe8] sm:$0x3]
        %v627 = vld [vmem:[#allocation2 + $0xf0] sm:$0xff]
        %v628 = vld [vmem:[#allocation2 + $0xf8] sm:$0xff]
        %v629 = vld [vmem:[#allocation2 + $0x100] sm:$0x3]
        %v630 = vld [vmem:[#allocation2 + $0x108] sm:$0xff]
        %v631 = vld [vmem:[#allocation2 + $0x110] sm:$0xff]
        %v632 = vld [vmem:[#allocation2 + $0x118] sm:$0x3]
        %v633 = vld [vmem:[#allocation2 + $0x120] sm:$0xff]
        %v634 = vld [vmem:[#allocation2 + $0x128] sm:$0xff]
        %v635 = vld [vmem:[#allocation2 + $0x130] sm:$0x3]
        %v636 = vld [vmem:[#allocation2 + $0x138] sm:$0xff]
        %v637 = vld [vmem:[#allocation2 + $0x140] sm:$0xff]
        %v638 = vld [vmem:[#allocation2 + $0x148] sm:$0x3]
        %v639 = vld [vmem:[#allocation2 + $0x150] sm:$0xff]
        %v640 = vld [vmem:[#allocation2 + $0x158] sm:$0xff]
        %v641 = vld [vmem:[#allocation2 + $0x160] sm:$0x3]
        %v642 = vld [vmem:[#allocation2 + $0x168] sm:$0xff]
        %v643 = vld [vmem:[#allocation2 + $0x170] sm:$0xff]
        %v644 = vld [vmem:[#allocation2 + $0x178] sm:$0x3]
        %v645 = vld [vmem:[#allocation2 + $0x180] sm:$0xff]
        %v646 = vld [vmem:[#allocation2 + $0x188] sm:$0xff]
        %v647 = vld [vmem:[#allocation2 + $0x190] sm:$0x3]
        %v648 = vld [vmem:[#allocation2 + $0x198] sm:$0xff]
        %v649 = vld [vmem:[#allocation2 + $0x1a0] sm:$0xff]
        %v650 = vld [vmem:[#allocation2 + $0x1a8] sm:$0x3]
        %vm699 = vcmask 1046528
        %v700 = vrot.slane %v597, 1
        %v701 = vrot.slane %v598, 1
        %v702 = vsel %vm699, %v700, %v701
        %v703 = vrot.slane %v599, 1
        %v704 = vsel %vm699, %v701, %v703
        %v705 = vrot.slane %v600, 1
        %v706 = vrot.slane %v601, 1
        %v707 = vsel %vm699, %v705, %v706
        %v708 = vrot.slane %v602, 1
        %v709 = vsel %vm699, %v706, %v708
        %v710 = vrot.slane %v603, 1
        %v711 = vrot.slane %v604, 1
        %v712 = vsel %vm699, %v710, %v711
        %v713 = vrot.slane %v605, 1
        %v714 = vsel %vm699, %v711, %v713
        %v715 = vrot.slane %v606, 1
        %v716 = vrot.slane %v607, 1
        %v717 = vsel %vm699, %v715, %v716
        %v718 = vrot.slane %v608, 1
        %v719 = vsel %vm699, %v716, %v718
        %v720 = vrot.slane %v609, 1
        %v721 = vrot.slane %v610, 1
        %v722 = vsel %vm699, %v720, %v721
        %v723 = vrot.slane %v611, 1
        %v724 = vsel %vm699, %v721, %v723
        %v725 = vrot.slane %v612, 1
        %v726 = vrot.slane %v613, 1
        %v727 = vsel %vm699, %v725, %v726
        %v728 = vrot.slane %v614, 1
        %v729 = vsel %vm699, %v726, %v728
        %v730 = vrot.slane %v615, 1
        %v731 = vrot.slane %v616, 1
        %v732 = vsel %vm699, %v730, %v731
        %v733 = vrot.slane %v617, 1
        %v734 = vsel %vm699, %v731, %v733
        %v735 = vrot.slane %v618, 1
        %v736 = vrot.slane %v619, 1
        %v737 = vsel %vm699, %v735, %v736
        %v738 = vrot.slane %v620, 1
        %v739 = vsel %vm699, %v736, %v738
        %v740 = vrot.slane %v621, 1
        %v741 = vrot.slane %v622, 1
        %v742 = vsel %vm699, %v740, %v741
        %v743 = vrot.slane %v623, 1
        %v744 = vsel %vm699, %v741, %v743
        %v745 = vrot.slane %v624, 1
        %v746 = vrot.slane %v625, 1
        %v747 = vsel %vm699, %v745, %v746
        %v748 = vrot.slane %v626, 1
        %v749 = vsel %vm699, %v746, %v748
        %v750 = vrot.slane %v627, 1
        %v751 = vrot.slane %v628, 1
        %v752 = vsel %vm699, %v750, %v751
        %v753 = vrot.slane %v629, 1
        %v754 = vsel %vm699, %v751, %v753
        %v755 = vrot.slane %v630, 1
        %v756 = vrot.slane %v631, 1
        %v757 = vsel %vm699, %v755, %v756
        %v758 = vrot.slane %v632, 1
        %v759 = vsel %vm699, %v756, %v758
        %v760 = vrot.slane %v633, 1
        %v761 = vrot.slane %v634, 1
        %v762 = vsel %vm699, %v760, %v761
        %v763 = vrot.slane %v635, 1
        %v764 = vsel %vm699, %v761, %v763
        %v765 = vrot.slane %v636, 1
        %v766 = vrot.slane %v637, 1
        %v767 = vsel %vm699, %v765, %v766
        %v768 = vrot.slane %v638, 1
        %v769 = vsel %vm699, %v766, %v768
        %v770 = vrot.slane %v639, 1
        %v771 = vrot.slane %v640, 1
        %v772 = vsel %vm699, %v770, %v771
        %v773 = vrot.slane %v641, 1
        %v774 = vsel %vm699, %v771, %v773
        %v775 = vrot.slane %v642, 1
        %v776 = vrot.slane %v643, 1
        %v777 = vsel %vm699, %v775, %v776
        %v778 = vrot.slane %v644, 1
        %v779 = vsel %vm699, %v776, %v778
        %780 = vrot.lane.b32.xlu0 %v702, 3
        %v781 = vpop.permute.xlu0 %780
        %782 = vrot.lane.b32.xlu0 %v704, 3
        %v783 = vpop.permute.xlu0 %782
        %784 = vrot.lane.b32.xlu0 %v707, 3
        %v785 = vpop.permute.xlu0 %784
        %786 = vrot.lane.b32.xlu0 %v709, 3
        %v787 = vpop.permute.xlu0 %786
        %788 = vrot.lane.b32.xlu0 %v712, 3
        %v789 = vpop.permute.xlu0 %788
        %790 = vrot.lane.b32.xlu0 %v714, 3
        %v791 = vpop.permute.xlu0 %790
        %792 = vrot.lane.b32.xlu0 %v717, 3
        %v793 = vpop.permute.xlu0 %792
        %794 = vrot.lane.b32.xlu0 %v719, 3
        %v795 = vpop.permute.xlu0 %794
        %796 = vrot.lane.b32.xlu0 %v722, 3
        %v797 = vpop.permute.xlu0 %796
        %798 = vrot.lane.b32.xlu0 %v724, 3
        %v799 = vpop.permute.xlu0 %798
        %800 = vrot.lane.b32.xlu0 %v727, 3
        %v801 = vpop.permute.xlu0 %800
        %802 = vrot.lane.b32.xlu0 %v729, 3
        %v803 = vpop.permute.xlu0 %802
        %804 = vrot.lane.b32.xlu0 %v732, 3
        %v805 = vpop.permute.xlu0 %804
        %806 = vrot.lane.b32.xlu0 %v734, 3
        %v807 = vpop.permute.xlu0 %806
        %808 = vrot.lane.b32.xlu0 %v737, 3
        %v809 = vpop.permute.xlu0 %808
        %810 = vrot.lane.b32.xlu0 %v739, 3
        %v811 = vpop.permute.xlu0 %810
        %812 = vrot.lane.b32.xlu0 %v742, 3
        %v813 = vpop.permute.xlu0 %812
        %814 = vrot.lane.b32.xlu0 %v744, 3
        %v815 = vpop.permute.xlu0 %814
        %816 = vrot.lane.b32.xlu0 %v747, 3
        %v817 = vpop.permute.xlu0 %816
        %818 = vrot.lane.b32.xlu0 %v749, 3
        %v819 = vpop.permute.xlu0 %818
        %820 = vrot.lane.b32.xlu0 %v752, 3
        %v821 = vpop.permute.xlu0 %820
        %822 = vrot.lane.b32.xlu0 %v754, 3
        %v823 = vpop.permute.xlu0 %822
        %824 = vrot.lane.b32.xlu0 %v757, 3
        %v825 = vpop.permute.xlu0 %824
        %826 = vrot.lane.b32.xlu0 %v759, 3
        %v827 = vpop.permute.xlu0 %826
        %828 = vrot.lane.b32.xlu0 %v762, 3
        %v829 = vpop.permute.xlu0 %828
        %830 = vrot.lane.b32.xlu0 %v764, 3
        %v831 = vpop.permute.xlu0 %830
        %832 = vrot.lane.b32.xlu0 %v767, 3
        %v833 = vpop.permute.xlu0 %832
        %834 = vrot.lane.b32.xlu0 %v769, 3
        %v835 = vpop.permute.xlu0 %834
        %836 = vrot.lane.b32.xlu0 %v772, 3
        %v837 = vpop.permute.xlu0 %836
        %838 = vrot.lane.b32.xlu0 %v774, 3
        %v839 = vpop.permute.xlu0 %838
        %840 = vrot.lane.b32.xlu0 %v777, 3
        %v841 = vpop.permute.xlu0 %840
        %842 = vrot.lane.b32.xlu0 %v779, 3
        %v843 = vpop.permute.xlu0 %842
        %vm876 = vcmask 1045504
        %v877 = vrot.slane %v597, 2
        %v878 = vrot.slane %v598, 2
        %v879 = vsel %vm876, %v877, %v878
        %v880 = vrot.slane %v599, 2
        %v881 = vsel %vm876, %v878, %v880
        %v882 = vrot.slane %v600, 2
        %v883 = vrot.slane %v601, 2
        %v884 = vsel %vm876, %v882, %v883
        %v885 = vrot.slane %v602, 2
        %v886 = vsel %vm876, %v883, %v885
        %v887 = vrot.slane %v603, 2
        %v888 = vrot.slane %v604, 2
        %v889 = vsel %vm876, %v887, %v888
        %v890 = vrot.slane %v605, 2
        %v891 = vsel %vm876, %v888, %v890
        %v892 = vrot.slane %v606, 2
        %v893 = vrot.slane %v607, 2
        %v894 = vsel %vm876, %v892, %v893
        %v895 = vrot.slane %v608, 2
        %v896 = vsel %vm876, %v893, %v895
        %v897 = vrot.slane %v609, 2
        %v898 = vrot.slane %v610, 2
        %v899 = vsel %vm876, %v897, %v898
        %v900 = vrot.slane %v611, 2
        %v901 = vsel %vm876, %v898, %v900
        %v902 = vrot.slane %v612, 2
        %v903 = vrot.slane %v613, 2
        %v904 = vsel %vm876, %v902, %v903
        %v905 = vrot.slane %v614, 2
        %v906 = vsel %vm876, %v903, %v905
        %v907 = vrot.slane %v615, 2
        %v908 = vrot.slane %v616, 2
        %v909 = vsel %vm876, %v907, %v908
        %v910 = vrot.slane %v617, 2
        %v911 = vsel %vm876, %v908, %v910
        %v912 = vrot.slane %v618, 2
        %v913 = vrot.slane %v619, 2
        %v914 = vsel %vm876, %v912, %v913
        %v915 = vrot.slane %v620, 2
        %v916 = vsel %vm876, %v913, %v915
        %v917 = vrot.slane %v621, 2
        %v918 = vrot.slane %v622, 2
        %v919 = vsel %vm876, %v917, %v918
        %v920 = vrot.slane %v623, 2
        %v921 = vsel %vm876, %v918, %v920
        %v922 = vrot.slane %v624, 2
        %v923 = vrot.slane %v625, 2
        %v924 = vsel %vm876, %v922, %v923
        %v925 = vrot.slane %v626, 2
        %v926 = vsel %vm876, %v923, %v925
        %v927 = vrot.slane %v627, 2
        %v928 = vrot.slane %v628, 2
        %v929 = vsel %vm876, %v927, %v928
        %v930 = vrot.slane %v629, 2
        %v931 = vsel %vm876, %v928, %v930
        %v932 = vrot.slane %v630, 2
        %v933 = vrot.slane %v631, 2
        %v934 = vsel %vm876, %v932, %v933
        %v935 = vrot.slane %v632, 2
        %v936 = vsel %vm876, %v933, %v935
        %v937 = vrot.slane %v633, 2
        %v938 = vrot.slane %v634, 2
        %v939 = vsel %vm876, %v937, %v938
        %v940 = vrot.slane %v635, 2
        %v941 = vsel %vm876, %v938, %v940
        %v942 = vrot.slane %v636, 2
        %v943 = vrot.slane %v637, 2
        %v944 = vsel %vm876, %v942, %v943
        %v945 = vrot.slane %v638, 2
        %v946 = vsel %vm876, %v943, %v945
        %v947 = vrot.slane %v639, 2
        %v948 = vrot.slane %v640, 2
        %v949 = vsel %vm876, %v947, %v948
        %v950 = vrot.slane %v641, 2
        %v951 = vsel %vm876, %v948, %v950
        %v952 = vrot.slane %v642, 2
        %v953 = vrot.slane %v643, 2
        %v954 = vsel %vm876, %v952, %v953
        %v955 = vrot.slane %v644, 2
        %v956 = vsel %vm876, %v953, %v955
        %957 = vrot.lane.b32.xlu0 %v879, 6
        %v958 = vpop.permute.xlu0 %957
        %959 = vrot.lane.b32.xlu0 %v881, 6
        %v960 = vpop.permute.xlu0 %959
        %961 = vrot.lane.b32.xlu0 %v884, 6
        %v962 = vpop.permute.xlu0 %961
        %963 = vrot.lane.b32.xlu0 %v886, 6
        %v964 = vpop.permute.xlu0 %963
        %965 = vrot.lane.b32.xlu0 %v889, 6
        %v966 = vpop.permute.xlu0 %965
        %967 = vrot.lane.b32.xlu0 %v891, 6
        %v968 = vpop.permute.xlu0 %967
        %969 = vrot.lane.b32.xlu0 %v894, 6
        %v970 = vpop.permute.xlu0 %969
        %971 = vrot.lane.b32.xlu0 %v896, 6
        %v972 = vpop.permute.xlu0 %971
        %973 = vrot.lane.b32.xlu0 %v899, 6
        %v974 = vpop.permute.xlu0 %973
        %975 = vrot.lane.b32.xlu0 %v901, 6
        %v976 = vpop.permute.xlu0 %975
        %977 = vrot.lane.b32.xlu0 %v904, 6
        %v978 = vpop.permute.xlu0 %977
        %979 = vrot.lane.b32.xlu0 %v906, 6
        %v980 = vpop.permute.xlu0 %979
        %981 = vrot.lane.b32.xlu0 %v909, 6
        %v982 = vpop.permute.xlu0 %981
        %983 = vrot.lane.b32.xlu0 %v911, 6
        %v984 = vpop.permute.xlu0 %983
        %985 = vrot.lane.b32.xlu0 %v914, 6
        %v986 = vpop.permute.xlu0 %985
        %987 = vrot.lane.b32.xlu0 %v916, 6
        %v988 = vpop.permute.xlu0 %987
        %989 = vrot.lane.b32.xlu0 %v919, 6
        %v990 = vpop.permute.xlu0 %989
        %991 = vrot.lane.b32.xlu0 %v921, 6
        %v992 = vpop.permute.xlu0 %991
        %993 = vrot.lane.b32.xlu0 %v924, 6
        %v994 = vpop.permute.xlu0 %993
        %995 = vrot.lane.b32.xlu0 %v926, 6
        %v996 = vpop.permute.xlu0 %995
        %997 = vrot.lane.b32.xlu0 %v929, 6
        %v998 = vpop.permute.xlu0 %997
        %999 = vrot.lane.b32.xlu0 %v931, 6
        %v1000 = vpop.permute.xlu0 %999
        %1001 = vrot.lane.b32.xlu0 %v934, 6
        %v1002 = vpop.permute.xlu0 %1001
        %1003 = vrot.lane.b32.xlu0 %v936, 6
        %v1004 = vpop.permute.xlu0 %1003
        %1005 = vrot.lane.b32.xlu0 %v939, 6
        %v1006 = vpop.permute.xlu0 %1005
        %1007 = vrot.lane.b32.xlu0 %v941, 6
        %v1008 = vpop.permute.xlu0 %1007
        %1009 = vrot.lane.b32.xlu0 %v944, 6
        %v1010 = vpop.permute.xlu0 %1009
        %1011 = vrot.lane.b32.xlu0 %v946, 6
        %v1012 = vpop.permute.xlu0 %1011
        %1013 = vrot.lane.b32.xlu0 %v949, 6
        %v1014 = vpop.permute.xlu0 %1013
        %1015 = vrot.lane.b32.xlu0 %v951, 6
        %v1016 = vpop.permute.xlu0 %1015
        %1017 = vrot.lane.b32.xlu0 %v954, 6
        %v1018 = vpop.permute.xlu0 %1017
        %1019 = vrot.lane.b32.xlu0 %v956, 6
        %v1020 = vpop.permute.xlu0 %1019
        %1055 = vrot.lane.b32.xlu0 %v600, 9
        %v1056 = vpop.permute.xlu0 %1055
        %1057 = vrot.lane.b32.xlu0 %v601, 9
        %v1058 = vpop.permute.xlu0 %1057
        %1059 = vrot.lane.b32.xlu0 %v603, 9
        %v1060 = vpop.permute.xlu0 %1059
        %1061 = vrot.lane.b32.xlu0 %v604, 9
        %v1062 = vpop.permute.xlu0 %1061
        %1063 = vrot.lane.b32.xlu0 %v606, 9
        %v1064 = vpop.permute.xlu0 %1063
        %1065 = vrot.lane.b32.xlu0 %v607, 9
        %v1066 = vpop.permute.xlu0 %1065
        %1067 = vrot.lane.b32.xlu0 %v609, 9
        %v1068 = vpop.permute.xlu0 %1067
        %1069 = vrot.lane.b32.xlu0 %v610, 9
        %v1070 = vpop.permute.xlu0 %1069
        %1071 = vrot.lane.b32.xlu0 %v612, 9
        %v1072 = vpop.permute.xlu0 %1071
        %1073 = vrot.lane.b32.xlu0 %v613, 9
        %v1074 = vpop.permute.xlu0 %1073
        %1075 = vrot.lane.b32.xlu0 %v615, 9
        %v1076 = vpop.permute.xlu0 %1075
        %1077 = vrot.lane.b32.xlu0 %v616, 9
        %v1078 = vpop.permute.xlu0 %1077
        %1079 = vrot.lane.b32.xlu0 %v618, 9
        %v1080 = vpop.permute.xlu0 %1079
        %1081 = vrot.lane.b32.xlu0 %v619, 9
        %v1082 = vpop.permute.xlu0 %1081
        %1083 = vrot.lane.b32.xlu0 %v621, 9
        %v1084 = vpop.permute.xlu0 %1083
        %1085 = vrot.lane.b32.xlu0 %v622, 9
        %v1086 = vpop.permute.xlu0 %1085
        %1087 = vrot.lane.b32.xlu0 %v624, 9
        %v1088 = vpop.permute.xlu0 %1087
        %1089 = vrot.lane.b32.xlu0 %v625, 9
        %v1090 = vpop.permute.xlu0 %1089
        %1091 = vrot.lane.b32.xlu0 %v627, 9
        %v1092 = vpop.permute.xlu0 %1091
        %1093 = vrot.lane.b32.xlu0 %v628, 9
        %v1094 = vpop.permute.xlu0 %1093
        %1095 = vrot.lane.b32.xlu0 %v630, 9
        %v1096 = vpop.permute.xlu0 %1095
        %1097 = vrot.lane.b32.xlu0 %v631, 9
        %v1098 = vpop.permute.xlu0 %1097
        %1099 = vrot.lane.b32.xlu0 %v633, 9
        %v1100 = vpop.permute.xlu0 %1099
        %1101 = vrot.lane.b32.xlu0 %v634, 9
        %v1102 = vpop.permute.xlu0 %1101
        %1103 = vrot.lane.b32.xlu0 %v636, 9
        %v1104 = vpop.permute.xlu0 %1103
        %1105 = vrot.lane.b32.xlu0 %v637, 9
        %v1106 = vpop.permute.xlu0 %1105
        %1107 = vrot.lane.b32.xlu0 %v639, 9
        %v1108 = vpop.permute.xlu0 %1107
        %1109 = vrot.lane.b32.xlu0 %v640, 9
        %v1110 = vpop.permute.xlu0 %1109
        %1111 = vrot.lane.b32.xlu0 %v642, 9
        %v1112 = vpop.permute.xlu0 %1111
        %1113 = vrot.lane.b32.xlu0 %v643, 9
        %v1114 = vpop.permute.xlu0 %1113
        %1115 = vrot.lane.b32.xlu0 %v645, 9
        %v1116 = vpop.permute.xlu0 %1115
        %1117 = vrot.lane.b32.xlu0 %v646, 9
        %v1118 = vpop.permute.xlu0 %1117
        %v1152 = vrot.slane %v645, 1
        %v1153 = vrot.slane %v646, 1
        %v1154 = vsel %vm699, %v1152, %v1153
        %v1155 = vrot.slane %v647, 1
        %v1156 = vsel %vm699, %v1153, %v1155
        %1157 = vrot.lane.b32.xlu0 %v707, 12
        %v1158 = vpop.permute.xlu0 %1157
        %1159 = vrot.lane.b32.xlu0 %v709, 12
        %v1160 = vpop.permute.xlu0 %1159
        %1161 = vrot.lane.b32.xlu0 %v712, 12
        %v1162 = vpop.permute.xlu0 %1161
        %1163 = vrot.lane.b32.xlu0 %v714, 12
        %v1164 = vpop.permute.xlu0 %1163
        %1165 = vrot.lane.b32.xlu0 %v717, 12
        %v1166 = vpop.permute.xlu0 %1165
        %1167 = vrot.lane.b32.xlu0 %v719, 12
        %v1168 = vpop.permute.xlu0 %1167
        %1169 = vrot.lane.b32.xlu0 %v722, 12
        %v1170 = vpop.permute.xlu0 %1169
        %1171 = vrot.lane.b32.xlu0 %v724, 12
        %v1172 = vpop.permute.xlu0 %1171
        %1173 = vrot.lane.b32.xlu0 %v727, 12
        %v1174 = vpop.permute.xlu0 %1173
        %1175 = vrot.lane.b32.xlu0 %v729, 12
        %v1176 = vpop.permute.xlu0 %1175
        %1177 = vrot.lane.b32.xlu0 %v732, 12
        %v1178 = vpop.permute.xlu0 %1177
        %1179 = vrot.lane.b32.xlu0 %v734, 12
        %v1180 = vpop.permute.xlu0 %1179
        %1181 = vrot.lane.b32.xlu0 %v737, 12
        %v1182 = vpop.permute.xlu0 %1181
        %1183 = vrot.lane.b32.xlu0 %v739, 12
        %v1184 = vpop.permute.xlu0 %1183
        %1185 = vrot.lane.b32.xlu0 %v742, 12
        %v1186 = vpop.permute.xlu0 %1185
        %1187 = vrot.lane.b32.xlu0 %v744, 12
        %v1188 = vpop.permute.xlu0 %1187
        %1189 = vrot.lane.b32.xlu0 %v747, 12
        %v1190 = vpop.permute.xlu0 %1189
        %1191 = vrot.lane.b32.xlu0 %v749, 12
        %v1192 = vpop.permute.xlu0 %1191
        %1193 = vrot.lane.b32.xlu0 %v752, 12
        %v1194 = vpop.permute.xlu0 %1193
        %1195 = vrot.lane.b32.xlu0 %v754, 12
        %v1196 = vpop.permute.xlu0 %1195
        %1197 = vrot.lane.b32.xlu0 %v757, 12
        %v1198 = vpop.permute.xlu0 %1197
        %1199 = vrot.lane.b32.xlu0 %v759, 12
        %v1200 = vpop.permute.xlu0 %1199
        %1201 = vrot.lane.b32.xlu0 %v762, 12
        %v1202 = vpop.permute.xlu0 %1201
        %1203 = vrot.lane.b32.xlu0 %v764, 12
        %v1204 = vpop.permute.xlu0 %1203
        %1205 = vrot.lane.b32.xlu0 %v767, 12
        %v1206 = vpop.permute.xlu0 %1205
        %1207 = vrot.lane.b32.xlu0 %v769, 12
        %v1208 = vpop.permute.xlu0 %1207
        %1209 = vrot.lane.b32.xlu0 %v772, 12
        %v1210 = vpop.permute.xlu0 %1209
        %1211 = vrot.lane.b32.xlu0 %v774, 12
        %v1212 = vpop.permute.xlu0 %1211
        %1213 = vrot.lane.b32.xlu0 %v777, 12
        %v1214 = vpop.permute.xlu0 %1213
        %1215 = vrot.lane.b32.xlu0 %v779, 12
        %v1216 = vpop.permute.xlu0 %1215
        %1217 = vrot.lane.b32.xlu0 %v1154, 12
        %v1218 = vpop.permute.xlu0 %1217
        %1219 = vrot.lane.b32.xlu0 %v1156, 12
        %v1220 = vpop.permute.xlu0 %1219
        %v1253 = vrot.slane %v645, 2
        %v1254 = vrot.slane %v646, 2
        %v1255 = vsel %vm876, %v1253, %v1254
        %v1256 = vrot.slane %v647, 2
        %v1257 = vsel %vm876, %v1254, %v1256
        %1258 = vrot.lane.b32.xlu0 %v884, 15
        %v1259 = vpop.permute.xlu0 %1258
        %1260 = vrot.lane.b32.xlu0 %v886, 15
        %v1261 = vpop.permute.xlu0 %1260
        %1262 = vrot.lane.b32.xlu0 %v889, 15
        %v1263 = vpop.permute.xlu0 %1262
        %1264 = vrot.lane.b32.xlu0 %v891, 15
        %v1265 = vpop.permute.xlu0 %1264
        %1266 = vrot.lane.b32.xlu0 %v894, 15
        %v1267 = vpop.permute.xlu0 %1266
        %1268 = vrot.lane.b32.xlu0 %v896, 15
        %v1269 = vpop.permute.xlu0 %1268
        %1270 = vrot.lane.b32.xlu0 %v899, 15
        %v1271 = vpop.permute.xlu0 %1270
        %1272 = vrot.lane.b32.xlu0 %v901, 15
        %v1273 = vpop.permute.xlu0 %1272
        %1274 = vrot.lane.b32.xlu0 %v904, 15
        %v1275 = vpop.permute.xlu0 %1274
        %1276 = vrot.lane.b32.xlu0 %v906, 15
        %v1277 = vpop.permute.xlu0 %1276
        %1278 = vrot.lane.b32.xlu0 %v909, 15
        %v1279 = vpop.permute.xlu0 %1278
        %1280 = vrot.lane.b32.xlu0 %v911, 15
        %v1281 = vpop.permute.xlu0 %1280
        %1282 = vrot.lane.b32.xlu0 %v914, 15
        %v1283 = vpop.permute.xlu0 %1282
        %1284 = vrot.lane.b32.xlu0 %v916, 15
        %v1285 = vpop.permute.xlu0 %1284
        %1286 = vrot.lane.b32.xlu0 %v919, 15
        %v1287 = vpop.permute.xlu0 %1286
        %1288 = vrot.lane.b32.xlu0 %v921, 15
        %v1289 = vpop.permute.xlu0 %1288
        %1290 = vrot.lane.b32.xlu0 %v924, 15
        %v1291 = vpop.permute.xlu0 %1290
        %1292 = vrot.lane.b32.xlu0 %v926, 15
        %v1293 = vpop.permute.xlu0 %1292
        %1294 = vrot.lane.b32.xlu0 %v929, 15
        %v1295 = vpop.permute.xlu0 %1294
        %1296 = vrot.lane.b32.xlu0 %v931, 15
        %v1297 = vpop.permute.xlu0 %1296
        %1298 = vrot.lane.b32.xlu0 %v934, 15
        %v1299 = vpop.permute.xlu0 %1298
        %1300 = vrot.lane.b32.xlu0 %v936, 15
        %v1301 = vpop.permute.xlu0 %1300
        %1302 = vrot.lane.b32.xlu0 %v939, 15
        %v1303 = vpop.permute.xlu0 %1302
        %1304 = vrot.lane.b32.xlu0 %v941, 15
        %v1305 = vpop.permute.xlu0 %1304
        %1306 = vrot.lane.b32.xlu0 %v944, 15
        %v1307 = vpop.permute.xlu0 %1306
        %1308 = vrot.lane.b32.xlu0 %v946, 15
        %v1309 = vpop.permute.xlu0 %1308
        %1310 = vrot.lane.b32.xlu0 %v949, 15
        %v1311 = vpop.permute.xlu0 %1310
        %1312 = vrot.lane.b32.xlu0 %v951, 15
        %v1313 = vpop.permute.xlu0 %1312
        %1314 = vrot.lane.b32.xlu0 %v954, 15
        %v1315 = vpop.permute.xlu0 %1314
        %1316 = vrot.lane.b32.xlu0 %v956, 15
        %v1317 = vpop.permute.xlu0 %1316
        %1318 = vrot.lane.b32.xlu0 %v1255, 15
        %v1319 = vpop.permute.xlu0 %1318
        %1320 = vrot.lane.b32.xlu0 %v1257, 15
        %v1321 = vpop.permute.xlu0 %1320
        %1356 = vrot.lane.b32.xlu0 %v603, 18
        %v1357 = vpop.permute.xlu0 %1356
        %1358 = vrot.lane.b32.xlu0 %v604, 18
        %v1359 = vpop.permute.xlu0 %1358
        %1360 = vrot.lane.b32.xlu0 %v606, 18
        %v1361 = vpop.permute.xlu0 %1360
        %1362 = vrot.lane.b32.xlu0 %v607, 18
        %v1363 = vpop.permute.xlu0 %1362
        %1364 = vrot.lane.b32.xlu0 %v609, 18
        %v1365 = vpop.permute.xlu0 %1364
        %1366 = vrot.lane.b32.xlu0 %v610, 18
        %v1367 = vpop.permute.xlu0 %1366
        %1368 = vrot.lane.b32.xlu0 %v612, 18
        %v1369 = vpop.permute.xlu0 %1368
        %1370 = vrot.lane.b32.xlu0 %v613, 18
        %v1371 = vpop.permute.xlu0 %1370
        %1372 = vrot.lane.b32.xlu0 %v615, 18
        %v1373 = vpop.permute.xlu0 %1372
        %1374 = vrot.lane.b32.xlu0 %v616, 18
        %v1375 = vpop.permute.xlu0 %1374
        %1376 = vrot.lane.b32.xlu0 %v618, 18
        %v1377 = vpop.permute.xlu0 %1376
        %1378 = vrot.lane.b32.xlu0 %v619, 18
        %v1379 = vpop.permute.xlu0 %1378
        %1380 = vrot.lane.b32.xlu0 %v621, 18
        %v1381 = vpop.permute.xlu0 %1380
        %1382 = vrot.lane.b32.xlu0 %v622, 18
        %v1383 = vpop.permute.xlu0 %1382
        %1384 = vrot.lane.b32.xlu0 %v624, 18
        %v1385 = vpop.permute.xlu0 %1384
        %1386 = vrot.lane.b32.xlu0 %v625, 18
        %v1387 = vpop.permute.xlu0 %1386
        %1388 = vrot.lane.b32.xlu0 %v627, 18
        %v1389 = vpop.permute.xlu0 %1388
        %1390 = vrot.lane.b32.xlu0 %v628, 18
        %v1391 = vpop.permute.xlu0 %1390
        %1392 = vrot.lane.b32.xlu0 %v630, 18
        %v1393 = vpop.permute.xlu0 %1392
        %1394 = vrot.lane.b32.xlu0 %v631, 18
        %v1395 = vpop.permute.xlu0 %1394
        %1396 = vrot.lane.b32.xlu0 %v633, 18
        %v1397 = vpop.permute.xlu0 %1396
        %1398 = vrot.lane.b32.xlu0 %v634, 18
        %v1399 = vpop.permute.xlu0 %1398
        %1400 = vrot.lane.b32.xlu0 %v636, 18
        %v1401 = vpop.permute.xlu0 %1400
        %1402 = vrot.lane.b32.xlu0 %v637, 18
        %v1403 = vpop.permute.xlu0 %1402
        %1404 = vrot.lane.b32.xlu0 %v639, 18
        %v1405 = vpop.permute.xlu0 %1404
        %1406 = vrot.lane.b32.xlu0 %v640, 18
        %v1407 = vpop.permute.xlu0 %1406
        %1408 = vrot.lane.b32.xlu0 %v642, 18
        %v1409 = vpop.permute.xlu0 %1408
        %1410 = vrot.lane.b32.xlu0 %v643, 18
        %v1411 = vpop.permute.xlu0 %1410
        %1412 = vrot.lane.b32.xlu0 %v645, 18
        %v1413 = vpop.permute.xlu0 %1412
        %1414 = vrot.lane.b32.xlu0 %v646, 18
        %v1415 = vpop.permute.xlu0 %1414
        %1416 = vrot.lane.b32.xlu0 %v648, 18
        %v1417 = vpop.permute.xlu0 %1416
        %1418 = vrot.lane.b32.xlu0 %v649, 18
        %v1419 = vpop.permute.xlu0 %1418
        %v1453 = vrot.slane %v648, 1
        %v1454 = vrot.slane %v649, 1
        %v1455 = vsel %vm699, %v1453, %v1454
        %v1456 = vrot.slane %v650, 1
        %v1457 = vsel %vm699, %v1454, %v1456
        %1458 = vrot.lane.b32.xlu0 %v712, 21
        %v1459 = vpop.permute.xlu0 %1458
        %1460 = vrot.lane.b32.xlu0 %v714, 21
        %v1461 = vpop.permute.xlu0 %1460
        %1462 = vrot.lane.b32.xlu0 %v717, 21
        %v1463 = vpop.permute.xlu0 %1462
        %1464 = vrot.lane.b32.xlu0 %v719, 21
        %v1465 = vpop.permute.xlu0 %1464
        %1466 = vrot.lane.b32.xlu0 %v722, 21
        %v1467 = vpop.permute.xlu0 %1466
        %1468 = vrot.lane.b32.xlu0 %v724, 21
        %v1469 = vpop.permute.xlu0 %1468
        %1470 = vrot.lane.b32.xlu0 %v727, 21
        %v1471 = vpop.permute.xlu0 %1470
        %1472 = vrot.lane.b32.xlu0 %v729, 21
        %v1473 = vpop.permute.xlu0 %1472
        %1474 = vrot.lane.b32.xlu0 %v732, 21
        %v1475 = vpop.permute.xlu0 %1474
        %1476 = vrot.lane.b32.xlu0 %v734, 21
        %v1477 = vpop.permute.xlu0 %1476
        %1478 = vrot.lane.b32.xlu0 %v737, 21
        %v1479 = vpop.permute.xlu0 %1478
        %1480 = vrot.lane.b32.xlu0 %v739, 21
        %v1481 = vpop.permute.xlu0 %1480
        %1482 = vrot.lane.b32.xlu0 %v742, 21
        %v1483 = vpop.permute.xlu0 %1482
        %1484 = vrot.lane.b32.xlu0 %v744, 21
        %v1485 = vpop.permute.xlu0 %1484
        %1486 = vrot.lane.b32.xlu0 %v747, 21
        %v1487 = vpop.permute.xlu0 %1486
        %1488 = vrot.lane.b32.xlu0 %v749, 21
        %v1489 = vpop.permute.xlu0 %1488
        %1490 = vrot.lane.b32.xlu0 %v752, 21
        %v1491 = vpop.permute.xlu0 %1490
        %1492 = vrot.lane.b32.xlu0 %v754, 21
        %v1493 = vpop.permute.xlu0 %1492
        %1494 = vrot.lane.b32.xlu0 %v757, 21
        %v1495 = vpop.permute.xlu0 %1494
        %1496 = vrot.lane.b32.xlu0 %v759, 21
        %v1497 = vpop.permute.xlu0 %1496
        %1498 = vrot.lane.b32.xlu0 %v762, 21
        %v1499 = vpop.permute.xlu0 %1498
        %1500 = vrot.lane.b32.xlu0 %v764, 21
        %v1501 = vpop.permute.xlu0 %1500
        %1502 = vrot.lane.b32.xlu0 %v767, 21
        %v1503 = vpop.permute.xlu0 %1502
        %1504 = vrot.lane.b32.xlu0 %v769, 21
        %v1505 = vpop.permute.xlu0 %1504
        %1506 = vrot.lane.b32.xlu0 %v772, 21
        %v1507 = vpop.permute.xlu0 %1506
        %1508 = vrot.lane.b32.xlu0 %v774, 21
        %v1509 = vpop.permute.xlu0 %1508
        %1510 = vrot.lane.b32.xlu0 %v777, 21
        %v1511 = vpop.permute.xlu0 %1510
        %1512 = vrot.lane.b32.xlu0 %v779, 21
        %v1513 = vpop.permute.xlu0 %1512
        %1514 = vrot.lane.b32.xlu0 %v1154, 21
        %v1515 = vpop.permute.xlu0 %1514
        %1516 = vrot.lane.b32.xlu0 %v1156, 21
        %v1517 = vpop.permute.xlu0 %1516
        %1518 = vrot.lane.b32.xlu0 %v1455, 21
        %v1519 = vpop.permute.xlu0 %1518
        %1520 = vrot.lane.b32.xlu0 %v1457, 21
        %v1521 = vpop.permute.xlu0 %1520
        %v1554 = vrot.slane %v648, 2
        %v1555 = vrot.slane %v649, 2
        %v1556 = vsel %vm876, %v1554, %v1555
        %v1557 = vrot.slane %v650, 2
        %v1558 = vsel %vm876, %v1555, %v1557
        %1559 = vrot.lane.b32.xlu0 %v889, 24
        %v1560 = vpop.permute.xlu0 %1559
        %1561 = vrot.lane.b32.xlu0 %v891, 24
        %v1562 = vpop.permute.xlu0 %1561
        %1563 = vrot.lane.b32.xlu0 %v894, 24
        %v1564 = vpop.permute.xlu0 %1563
        %1565 = vrot.lane.b32.xlu0 %v896, 24
        %v1566 = vpop.permute.xlu0 %1565
        %1567 = vrot.lane.b32.xlu0 %v899, 24
        %v1568 = vpop.permute.xlu0 %1567
        %1569 = vrot.lane.b32.xlu0 %v901, 24
        %v1570 = vpop.permute.xlu0 %1569
        %1571 = vrot.lane.b32.xlu0 %v904, 24
        %v1572 = vpop.permute.xlu0 %1571
        %1573 = vrot.lane.b32.xlu0 %v906, 24
        %v1574 = vpop.permute.xlu0 %1573
        %1575 = vrot.lane.b32.xlu0 %v909, 24
        %v1576 = vpop.permute.xlu0 %1575
        %1577 = vrot.lane.b32.xlu0 %v911, 24
        %v1578 = vpop.permute.xlu0 %1577
        %1579 = vrot.lane.b32.xlu0 %v914, 24
        %v1580 = vpop.permute.xlu0 %1579
        %1581 = vrot.lane.b32.xlu0 %v916, 24
        %v1582 = vpop.permute.xlu0 %1581
        %1583 = vrot.lane.b32.xlu0 %v919, 24
        %v1584 = vpop.permute.xlu0 %1583
        %1585 = vrot.lane.b32.xlu0 %v921, 24
        %v1586 = vpop.permute.xlu0 %1585
        %1587 = vrot.lane.b32.xlu0 %v924, 24
        %v1588 = vpop.permute.xlu0 %1587
        %1589 = vrot.lane.b32.xlu0 %v926, 24
        %v1590 = vpop.permute.xlu0 %1589
        %1591 = vrot.lane.b32.xlu0 %v929, 24
        %v1592 = vpop.permute.xlu0 %1591
        %1593 = vrot.lane.b32.xlu0 %v931, 24
        %v1594 = vpop.permute.xlu0 %1593
        %1595 = vrot.lane.b32.xlu0 %v934, 24
        %v1596 = vpop.permute.xlu0 %1595
        %1597 = vrot.lane.b32.xlu0 %v936, 24
        %v1598 = vpop.permute.xlu0 %1597
        %1599 = vrot.lane.b32.xlu0 %v939, 24
        %v1600 = vpop.permute.xlu0 %1599
        %1601 = vrot.lane.b32.xlu0 %v941, 24
        %v1602 = vpop.permute.xlu0 %1601
        %1603 = vrot.lane.b32.xlu0 %v944, 24
        %v1604 = vpop.permute.xlu0 %1603
        %1605 = vrot.lane.b32.xlu0 %v946, 24
        %v1606 = vpop.permute.xlu0 %1605
        %1607 = vrot.lane.b32.xlu0 %v949, 24
        %v1608 = vpop.permute.xlu0 %1607
        %1609 = vrot.lane.b32.xlu0 %v951, 24
        %v1610 = vpop.permute.xlu0 %1609
        %1611 = vrot.lane.b32.xlu0 %v954, 24
        %v1612 = vpop.permute.xlu0 %1611
        %1613 = vrot.lane.b32.xlu0 %v956, 24
        %v1614 = vpop.permute.xlu0 %1613
        %1615 = vrot.lane.b32.xlu0 %v1255, 24
        %v1616 = vpop.permute.xlu0 %1615
        %1617 = vrot.lane.b32.xlu0 %v1257, 24
        %v1618 = vpop.permute.xlu0 %1617
        %1619 = vrot.lane.b32.xlu0 %v1556, 24
        %v1620 = vpop.permute.xlu0 %1619
        %1621 = vrot.lane.b32.xlu0 %v1558, 24
        %v1622 = vpop.permute.xlu0 %1621
        %v1655 = vsel %vm508, %v597, %v781
        %v1656 = vsel %vm508, %v598, %v783
        %v1657 = vsel %vm508, %v600, %v785
        %v1658 = vsel %vm508, %v601, %v787
        %v1659 = vsel %vm508, %v603, %v789
        %v1660 = vsel %vm508, %v604, %v791
        %v1661 = vsel %vm508, %v606, %v793
        %v1662 = vsel %vm508, %v607, %v795
        %v1663 = vsel %vm508, %v609, %v797
        %v1664 = vsel %vm508, %v610, %v799
        %v1665 = vsel %vm508, %v612, %v801
        %v1666 = vsel %vm508, %v613, %v803
        %v1667 = vsel %vm508, %v615, %v805
        %v1668 = vsel %vm508, %v616, %v807
        %v1669 = vsel %vm508, %v618, %v809
        %v1670 = vsel %vm508, %v619, %v811
        %v1671 = vsel %vm508, %v621, %v813
        %v1672 = vsel %vm508, %v622, %v815
        %v1673 = vsel %vm508, %v624, %v817
        %v1674 = vsel %vm508, %v625, %v819
        %v1675 = vsel %vm508, %v627, %v821
        %v1676 = vsel %vm508, %v628, %v823
        %v1677 = vsel %vm508, %v630, %v825
        %v1678 = vsel %vm508, %v631, %v827
        %v1679 = vsel %vm508, %v633, %v829
        %v1680 = vsel %vm508, %v634, %v831
        %v1681 = vsel %vm508, %v636, %v833
        %v1682 = vsel %vm508, %v637, %v835
        %v1683 = vsel %vm508, %v639, %v837
        %v1684 = vsel %vm508, %v640, %v839
        %v1685 = vsel %vm508, %v642, %v841
        %v1686 = vsel %vm508, %v643, %v843
        %vm1687 = vcmask 48128
        %v1688 = vsel %vm1687, %v1655, %v958
        %v1689 = vsel %vm1687, %v1656, %v960
        %v1690 = vsel %vm1687, %v1657, %v962
        %v1691 = vsel %vm1687, %v1658, %v964
        %v1692 = vsel %vm1687, %v1659, %v966
        %v1693 = vsel %vm1687, %v1660, %v968
        %v1694 = vsel %vm1687, %v1661, %v970
        %v1695 = vsel %vm1687, %v1662, %v972
        %v1696 = vsel %vm1687, %v1663, %v974
        %v1697 = vsel %vm1687, %v1664, %v976
        %v1698 = vsel %vm1687, %v1665, %v978
        %v1699 = vsel %vm1687, %v1666, %v980
        %v1700 = vsel %vm1687, %v1667, %v982
        %v1701 = vsel %vm1687, %v1668, %v984
        %v1702 = vsel %vm1687, %v1669, %v986
        %v1703 = vsel %vm1687, %v1670, %v988
        %v1704 = vsel %vm1687, %v1671, %v990
        %v1705 = vsel %vm1687, %v1672, %v992
        %v1706 = vsel %vm1687, %v1673, %v994
        %v1707 = vsel %vm1687, %v1674, %v996
        %v1708 = vsel %vm1687, %v1675, %v998
        %v1709 = vsel %vm1687, %v1676, %v1000
        %v1710 = vsel %vm1687, %v1677, %v1002
        %v1711 = vsel %vm1687, %v1678, %v1004
        %v1712 = vsel %vm1687, %v1679, %v1006
        %v1713 = vsel %vm1687, %v1680, %v1008
        %v1714 = vsel %vm1687, %v1681, %v1010
        %v1715 = vsel %vm1687, %v1682, %v1012
        %v1716 = vsel %vm1687, %v1683, %v1014
        %v1717 = vsel %vm1687, %v1684, %v1016
        %v1718 = vsel %vm1687, %v1685, %v1018
        %v1719 = vsel %vm1687, %v1686, %v1020
        %vm1720 = vcmask 72704
        %v1721 = vsel %vm1720, %v1688, %v1056
        %v1722 = vsel %vm1720, %v1689, %v1058
        %v1723 = vsel %vm1720, %v1690, %v1060
        %v1724 = vsel %vm1720, %v1691, %v1062
        %v1725 = vsel %vm1720, %v1692, %v1064
        %v1726 = vsel %vm1720, %v1693, %v1066
        %v1727 = vsel %vm1720, %v1694, %v1068
        %v1728 = vsel %vm1720, %v1695, %v1070
        %v1729 = vsel %vm1720, %v1696, %v1072
        %v1730 = vsel %vm1720, %v1697, %v1074
        %v1731 = vsel %vm1720, %v1698, %v1076
        %v1732 = vsel %vm1720, %v1699, %v1078
        %v1733 = vsel %vm1720, %v1700, %v1080
        %v1734 = vsel %vm1720, %v1701, %v1082
        %v1735 = vsel %vm1720, %v1702, %v1084
        %v1736 = vsel %vm1720, %v1703, %v1086
        %v1737 = vsel %vm1720, %v1704, %v1088
        %v1738 = vsel %vm1720, %v1705, %v1090
        %v1739 = vsel %vm1720, %v1706, %v1092
        %v1740 = vsel %vm1720, %v1707, %v1094
        %v1741 = vsel %vm1720, %v1708, %v1096
        %v1742 = vsel %vm1720, %v1709, %v1098
        %v1743 = vsel %vm1720, %v1710, %v1100
        %v1744 = vsel %vm1720, %v1711, %v1102
        %v1745 = vsel %vm1720, %v1712, %v1104
        %v1746 = vsel %vm1720, %v1713, %v1106
        %v1747 = vsel %vm1720, %v1714, %v1108
        %v1748 = vsel %vm1720, %v1715, %v1110
        %v1749 = vsel %vm1720, %v1716, %v1112
        %v1750 = vsel %vm1720, %v1717, %v1114
        %v1751 = vsel %vm1720, %v1718, %v1116
        %v1752 = vsel %vm1720, %v1719, %v1118
        %vm1753 = vcmask 97280
        %v1754 = vsel %vm1753, %v1721, %v1158
        %v1755 = vsel %vm1753, %v1722, %v1160
        %v1756 = vsel %vm1753, %v1723, %v1162
        %v1757 = vsel %vm1753, %v1724, %v1164
        %v1758 = vsel %vm1753, %v1725, %v1166
        %v1759 = vsel %vm1753, %v1726, %v1168
        %v1760 = vsel %vm1753, %v1727, %v1170
        %v1761 = vsel %vm1753, %v1728, %v1172
        %v1762 = vsel %vm1753, %v1729, %v1174
        %v1763 = vsel %vm1753, %v1730, %v1176
        %v1764 = vsel %vm1753, %v1731, %v1178
        %v1765 = vsel %vm1753, %v1732, %v1180
        %v1766 = vsel %vm1753, %v1733, %v1182
        %v1767 = vsel %vm1753, %v1734, %v1184
        %v1768 = vsel %vm1753, %v1735, %v1186
        %v1769 = vsel %vm1753, %v1736, %v1188
        %v1770 = vsel %vm1753, %v1737, %v1190
        %v1771 = vsel %vm1753, %v1738, %v1192
        %v1772 = vsel %vm1753, %v1739, %v1194
        %v1773 = vsel %vm1753, %v1740, %v1196
        %v1774 = vsel %vm1753, %v1741, %v1198
        %v1775 = vsel %vm1753, %v1742, %v1200
        %v1776 = vsel %vm1753, %v1743, %v1202
        %v1777 = vsel %vm1753, %v1744, %v1204
        %v1778 = vsel %vm1753, %v1745, %v1206
        %v1779 = vsel %vm1753, %v1746, %v1208
        %v1780 = vsel %vm1753, %v1747, %v1210
        %v1781 = vsel %vm1753, %v1748, %v1212
        %v1782 = vsel %vm1753, %v1749, %v1214
        %v1783 = vsel %vm1753, %v1750, %v1216
        %v1784 = vsel %vm1753, %v1751, %v1218
        %v1785 = vsel %vm1753, %v1752, %v1220
        %vm1786 = vcmask 121856
        %v1787 = vsel %vm1786, %v1754, %v1259
        %v1788 = vsel %vm1786, %v1755, %v1261
        %v1789 = vsel %vm1786, %v1756, %v1263
        %v1790 = vsel %vm1786, %v1757, %v1265
        %v1791 = vsel %vm1786, %v1758, %v1267
        %v1792 = vsel %vm1786, %v1759, %v1269
        %v1793 = vsel %vm1786, %v1760, %v1271
        %v1794 = vsel %vm1786, %v1761, %v1273
        %v1795 = vsel %vm1786, %v1762, %v1275
        %v1796 = vsel %vm1786, %v1763, %v1277
        %v1797 = vsel %vm1786, %v1764, %v1279
        %v1798 = vsel %vm1786, %v1765, %v1281
        %v1799 = vsel %vm1786, %v1766, %v1283
        %v1800 = vsel %vm1786, %v1767, %v1285
        %v1801 = vsel %vm1786, %v1768, %v1287
        %v1802 = vsel %vm1786, %v1769, %v1289
        %v1803 = vsel %vm1786, %v1770, %v1291
        %v1804 = vsel %vm1786, %v1771, %v1293
        %v1805 = vsel %vm1786, %v1772, %v1295
        %v1806 = vsel %vm1786, %v1773, %v1297
        %v1807 = vsel %vm1786, %v1774, %v1299
        %v1808 = vsel %vm1786, %v1775, %v1301
        %v1809 = vsel %vm1786, %v1776, %v1303
        %v1810 = vsel %vm1786, %v1777, %v1305
        %v1811 = vsel %vm1786, %v1778, %v1307
        %v1812 = vsel %vm1786, %v1779, %v1309
        %v1813 = vsel %vm1786, %v1780, %v1311
        %v1814 = vsel %vm1786, %v1781, %v1313
        %v1815 = vsel %vm1786, %v1782, %v1315
        %v1816 = vsel %vm1786, %v1783, %v1317
        %v1817 = vsel %vm1786, %v1784, %v1319
        %v1818 = vsel %vm1786, %v1785, %v1321
        %vm1819 = vcmask 146432
        %v1820 = vsel %vm1819, %v1787, %v1357
        %v1821 = vsel %vm1819, %v1788, %v1359
        %v1822 = vsel %vm1819, %v1789, %v1361
        %v1823 = vsel %vm1819, %v1790, %v1363
        %v1824 = vsel %vm1819, %v1791, %v1365
        %v1825 = vsel %vm1819, %v1792, %v1367
        %v1826 = vsel %vm1819, %v1793, %v1369
        %v1827 = vsel %vm1819, %v1794, %v1371
        %v1828 = vsel %vm1819, %v1795, %v1373
        %v1829 = vsel %vm1819, %v1796, %v1375
        %v1830 = vsel %vm1819, %v1797, %v1377
        %v1831 = vsel %vm1819, %v1798, %v1379
        %v1832 = vsel %vm1819, %v1799, %v1381
        %v1833 = vsel %vm1819, %v1800, %v1383
        %v1834 = vsel %vm1819, %v1801, %v1385
        %v1835 = vsel %vm1819, %v1802, %v1387
        %v1836 = vsel %vm1819, %v1803, %v1389
        %v1837 = vsel %vm1819, %v1804, %v1391
        %v1838 = vsel %vm1819, %v1805, %v1393
        %v1839 = vsel %vm1819, %v1806, %v1395
        %v1840 = vsel %vm1819, %v1807, %v1397
        %v1841 = vsel %vm1819, %v1808, %v1399
        %v1842 = vsel %vm1819, %v1809, %v1401
        %v1843 = vsel %vm1819, %v1810, %v1403
        %v1844 = vsel %vm1819, %v1811, %v1405
        %v1845 = vsel %vm1819, %v1812, %v1407
        %v1846 = vsel %vm1819, %v1813, %v1409
        %v1847 = vsel %vm1819, %v1814, %v1411
        %v1848 = vsel %vm1819, %v1815, %v1413
        %v1849 = vsel %vm1819, %v1816, %v1415
        %v1850 = vsel %vm1819, %v1817, %v1417
        %v1851 = vsel %vm1819, %v1818, %v1419
        %vm1852 = vcmask 171008
        %v1853 = vsel %vm1852, %v1820, %v1459
        %v1854 = vsel %vm1852, %v1821, %v1461
        %v1855 = vsel %vm1852, %v1822, %v1463
        %v1856 = vsel %vm1852, %v1823, %v1465
        %v1857 = vsel %vm1852, %v1824, %v1467
        %v1858 = vsel %vm1852, %v1825, %v1469
        %v1859 = vsel %vm1852, %v1826, %v1471
        %v1860 = vsel %vm1852, %v1827, %v1473
        %v1861 = vsel %vm1852, %v1828, %v1475
        %v1862 = vsel %vm1852, %v1829, %v1477
        %v1863 = vsel %vm1852, %v1830, %v1479
        %v1864 = vsel %vm1852, %v1831, %v1481
        %v1865 = vsel %vm1852, %v1832, %v1483
        %v1866 = vsel %vm1852, %v1833, %v1485
        %v1867 = vsel %vm1852, %v1834, %v1487
        %v1868 = vsel %vm1852, %v1835, %v1489
        %v1869 = vsel %vm1852, %v1836, %v1491
        %v1870 = vsel %vm1852, %v1837, %v1493
        %v1871 = vsel %vm1852, %v1838, %v1495
        %v1872 = vsel %vm1852, %v1839, %v1497
        %v1873 = vsel %vm1852, %v1840, %v1499
        %v1874 = vsel %vm1852, %v1841, %v1501
        %v1875 = vsel %vm1852, %v1842, %v1503
        %v1876 = vsel %vm1852, %v1843, %v1505
        %v1877 = vsel %vm1852, %v1844, %v1507
        %v1878 = vsel %vm1852, %v1845, %v1509
        %v1879 = vsel %vm1852, %v1846, %v1511
        %v1880 = vsel %vm1852, %v1847, %v1513
        %v1881 = vsel %vm1852, %v1848, %v1515
        %v1882 = vsel %vm1852, %v1849, %v1517
        %v1883 = vsel %vm1852, %v1850, %v1519
        %v1884 = vsel %vm1852, %v1851, %v1521
        %vm1885 = vcmask 195584
        %v1886 = vsel %vm1885, %v1853, %v1560
        %v1887 = vsel %vm1885, %v1854, %v1562
        %v1888 = vsel %vm1885, %v1855, %v1564
        %v1889 = vsel %vm1885, %v1856, %v1566
        %v1890 = vsel %vm1885, %v1857, %v1568
        %v1891 = vsel %vm1885, %v1858, %v1570
        %v1892 = vsel %vm1885, %v1859, %v1572
        %v1893 = vsel %vm1885, %v1860, %v1574
        %v1894 = vsel %vm1885, %v1861, %v1576
        %v1895 = vsel %vm1885, %v1862, %v1578
        %v1896 = vsel %vm1885, %v1863, %v1580
        %v1897 = vsel %vm1885, %v1864, %v1582
        %v1898 = vsel %vm1885, %v1865, %v1584
        %v1899 = vsel %vm1885, %v1866, %v1586
        %v1900 = vsel %vm1885, %v1867, %v1588
        %v1901 = vsel %vm1885, %v1868, %v1590
        %v1902 = vsel %vm1885, %v1869, %v1592
        %v1903 = vsel %vm1885, %v1870, %v1594
        %v1904 = vsel %vm1885, %v1871, %v1596
        %v1905 = vsel %vm1885, %v1872, %v1598
        %v1906 = vsel %vm1885, %v1873, %v1600
        %v1907 = vsel %vm1885, %v1874, %v1602
        %v1908 = vsel %vm1885, %v1875, %v1604
        %v1909 = vsel %vm1885, %v1876, %v1606
        %v1910 = vsel %vm1885, %v1877, %v1608
        %v1911 = vsel %vm1885, %v1878, %v1610
        %v1912 = vsel %vm1885, %v1879, %v1612
        %v1913 = vsel %vm1885, %v1880, %v1614
        %v1914 = vsel %vm1885, %v1881, %v1616
        %v1915 = vsel %vm1885, %v1882, %v1618
        %v1916 = vsel %vm1885, %v1883, %v1620
        %v1917 = vsel %vm1885, %v1884, %v1622
        %v1918 = vpack.c.bf16 %v1887, %v1886
        %v1919 = vpack.c.bf16 %v1889, %v1888
        %v1920 = vpack.c.bf16 %v1891, %v1890
        %v1921 = vpack.c.bf16 %v1893, %v1892
        %v1922 = vpack.c.bf16 %v1895, %v1894
        %v1923 = vpack.c.bf16 %v1897, %v1896
        %v1924 = vpack.c.bf16 %v1899, %v1898
        %v1925 = vpack.c.bf16 %v1901, %v1900
        %v1926 = vpack.c.bf16 %v1903, %v1902
        %v1927 = vpack.c.bf16 %v1905, %v1904
        %v1928 = vpack.c.bf16 %v1907, %v1906
        %v1929 = vpack.c.bf16 %v1909, %v1908
        %v1930 = vpack.c.bf16 %v1911, %v1910
        %v1931 = vpack.c.bf16 %v1913, %v1912
        %v1932 = vpack.c.bf16 %v1915, %v1914
        %v1933 = vpack.c.bf16 %v1917, %v1916
        %v1934 = vld [vmem:[%s3] sm:$0xf]
        %v1935 = vld [vmem:[%s3 + $0x4] sm:$0xf]
        %v1936 = vld [vmem:[%s3 + $0x8] sm:$0xf]
        %v1937 = vld [vmem:[%s3 + $0xc] sm:$0x3]
        %v1938 = vld [vmem:[%s4] sm:$0x1]
        %v1940 = vperm.slane %v1938, 0
        %v1946 = vunpack.c.l.b16 %v1934
        %v1947 = vunpack.c.l.b16 %v1935
        %v1948 = vunpack.c.l.b16 %v1936
        %v1949 = vunpack.c.l.b16 %v1937
        %v1950 = vpack.c.b16 %v1947, %v1946
        %v1951 = vpack.c.b16 %v1949, %v1948
        %vm1953 = vcmask 220160
        %v1955 = vsel %vm1953, %v1918, 0
        %v1958 = vsel %vm1953, %v1919, 0
        %v1961 = vsel %vm1953, %v1920, 0
        %v1964 = vsel %vm1953, %v1921, 0
        %v1967 = vsel %vm1953, %v1922, 0
        %v1970 = vsel %vm1953, %v1923, 0
        %v1973 = vsel %vm1953, %v1924, 0
        %v1976 = vsel %vm1953, %v1925, 0
        %v1979 = vsel %vm1953, %v1926, 0
        %v1982 = vsel %vm1953, %v1927, 0
        %v1985 = vsel %vm1953, %v1928, 0
        %v1988 = vsel %vm1953, %v1929, 0
        %v1991 = vsel %vm1953, %v1930, 0
        %v1994 = vsel %vm1953, %v1931, 0
        %v1997 = vsel %vm1953, %v1932, 0
        %v2000 = vsel %vm1953, %v1933, 0
        %vm2002 = vcmask 1044480
        %v2003 = vsel %vm2002, 4294967295, 65535
        %v2004 = vsel %vm876, %v2003, 0
        %v2006 = vand.u32 %v1951, %v2004
        %2008 = vmatpush.bf16.msra.mxu0 0
        %2009 = vmatpush.bf16.msra.mxu0 0
        %2010 = vmatpush.bf16.msra.mxu0 0
        %2011 = vmatpush.bf16.msra.mxu0 0
        %2012 = vmatpush.bf16.msra.mxu0 0
        %2013 = vmatpush.bf16.msra.mxu0 0
        %2014 = vmatpush.bf16.msra.mxu0 %v2006
        %2015 = vmatpush.bf16.msra.mxu0 %v1950
        %2016 = vmatmul.bf16.gmra.mxu0 %v1955
        %v2017 = vpop.f32.mrf.mxu0
        %v2018 = vadd.f32 %v1940, %v2017
        %v2019 = vpop.f32.mrf.mxu0
        %v2020 = vadd.f32 %v1940, %v2019
        %2021 = vmatmul.bf16.gmra.mxu0 %v1958
        %v2022 = vpop.f32.mrf.mxu0
        %v2023 = vadd.f32 %v1940, %v2022
        %v2024 = vpop.f32.mrf.mxu0
        %v2025 = vadd.f32 %v1940, %v2024
        %2026 = vmatmul.bf16.gmra.mxu0 %v1961
        %v2027 = vpop.f32.mrf.mxu0
        %v2028 = vadd.f32 %v1940, %v2027
        %v2029 = vpop.f32.mrf.mxu0
        %v2030 = vadd.f32 %v1940, %v2029
        %2031 = vmatmul.bf16.gmra.mxu0 %v1964
        %v2032 = vpop.f32.mrf.mxu0
        %v2033 = vadd.f32 %v1940, %v2032
        %v2034 = vpop.f32.mrf.mxu0
        %v2035 = vadd.f32 %v1940, %v2034
        %2036 = vmatmul.bf16.gmra.mxu0 %v1967
        %v2037 = vpop.f32.mrf.mxu0
        %v2038 = vadd.f32 %v1940, %v2037
        %v2039 = vpop.f32.mrf.mxu0
        %v2040 = vadd.f32 %v1940, %v2039
        %2041 = vmatmul.bf16.gmra.mxu0 %v1970
        %v2042 = vpop.f32.mrf.mxu0
        %v2043 = vadd.f32 %v1940, %v2042
        %v2044 = vpop.f32.mrf.mxu0
        %v2045 = vadd.f32 %v1940, %v2044
        %2046 = vmatmul.bf16.gmra.mxu0 %v1973
        %v2047 = vpop.f32.mrf.mxu0
        %v2048 = vadd.f32 %v1940, %v2047
        %v2049 = vpop.f32.mrf.mxu0
        %v2050 = vadd.f32 %v1940, %v2049
        %2051 = vmatmul.bf16.gmra.mxu0 %v1976
        %v2052 = vpop.f32.mrf.mxu0
        %v2053 = vadd.f32 %v1940, %v2052
        %v2054 = vpop.f32.mrf.mxu0
        %v2055 = vadd.f32 %v1940, %v2054
        %2056 = vmatmul.bf16.gmra.mxu0 %v1979
        %v2057 = vpop.f32.mrf.mxu0
        %v2058 = vadd.f32 %v1940, %v2057
        %v2059 = vpop.f32.mrf.mxu0
        %v2060 = vadd.f32 %v1940, %v2059
        %2061 = vmatmul.bf16.gmra.mxu0 %v1982
        %v2062 = vpop.f32.mrf.mxu0
        %v2063 = vadd.f32 %v1940, %v2062
        %v2064 = vpop.f32.mrf.mxu0
        %v2065 = vadd.f32 %v1940, %v2064
        %2066 = vmatmul.bf16.gmra.mxu0 %v1985
        %v2067 = vpop.f32.mrf.mxu0
        %v2068 = vadd.f32 %v1940, %v2067
        %v2069 = vpop.f32.mrf.mxu0
        %v2070 = vadd.f32 %v1940, %v2069
        %2071 = vmatmul.bf16.gmra.mxu0 %v1988
        %v2072 = vpop.f32.mrf.mxu0
        %v2073 = vadd.f32 %v1940, %v2072
        %v2074 = vpop.f32.mrf.mxu0
        %v2075 = vadd.f32 %v1940, %v2074
        %2076 = vmatmul.bf16.gmra.mxu0 %v1991
        %v2077 = vpop.f32.mrf.mxu0
        %v2078 = vadd.f32 %v1940, %v2077
        %v2079 = vpop.f32.mrf.mxu0
        %v2080 = vadd.f32 %v1940, %v2079
        %2081 = vmatmul.bf16.gmra.mxu0 %v1994
        %v2082 = vpop.f32.mrf.mxu0
        %v2083 = vadd.f32 %v1940, %v2082
        %v2084 = vpop.f32.mrf.mxu0
        %v2085 = vadd.f32 %v1940, %v2084
        %2086 = vmatmul.bf16.gmra.mxu0 %v1997
        %v2087 = vpop.f32.mrf.mxu0
        %v2088 = vadd.f32 %v1940, %v2087
        %v2089 = vpop.f32.mrf.mxu0
        %v2090 = vadd.f32 %v1940, %v2089
        %2091 = vmatmul.bf16.gmra.mxu0 %v2000
        %v2092 = vpop.f32.mrf.mxu0
        %v2093 = vadd.f32 %v1940, %v2092
        %v2094 = vpop.f32.mrf.mxu0
        %v2095 = vadd.f32 %v1940, %v2094
        %2096 = vdwg.mxu0
        %2097 = vxpose.xlu0.b32.start [1/16] %v2018, 128
        %2098 = vxpose.xlu0.b32.cont [2/16] %v2020, 128
        %2099 = vxpose.xlu0.b32.cont [3/16] %v2023, 128
        %2100 = vxpose.xlu0.b32.cont [4/16] %v2025, 128
        %2101 = vxpose.xlu0.b32.cont [5/16] %v2028, 128
        %2102 = vxpose.xlu0.b32.cont [6/16] %v2030, 128
        %2103 = vxpose.xlu0.b32.cont [7/16] %v2033, 128
        %2104 = vxpose.xlu0.b32.cont [8/16] %v2035, 128
        %2105 = vxpose.xlu0.b32.cont [9/16] %v2038, 128
        %2106 = vxpose.xlu0.b32.cont [10/16] %v2040, 128
        %2107 = vxpose.xlu0.b32.cont [11/16] %v2043, 128
        %2108 = vxpose.xlu0.b32.cont [12/16] %v2045, 128
        %2109 = vxpose.xlu0.b32.cont [13/16] %v2048, 128
        %2110 = vxpose.xlu0.b32.cont [14/16] %v2050, 128
        %2111 = vxpose.xlu0.b32.cont [15/16] %v2053, 128
        %2112 = vxpose.xlu0.b32.end [16/16] %v2055, 128
        %v2113 = vpop.trf.xlu0
        %v2114 = vpop.trf.xlu0
        %v2115 = vpop.trf.xlu0
        %v2116 = vpop.trf.xlu0
        %v2117 = vpop.trf.xlu0
        %v2118 = vpop.trf.xlu0
        %v2119 = vpop.trf.xlu0
        %v2120 = vpop.trf.xlu0
        %v2121 = vpop.trf.xlu0
        %v2122 = vpop.trf.xlu0
        %v2123 = vpop.trf.xlu0
        %v2124 = vpop.trf.xlu0
        %v2125 = vpop.trf.xlu0
        %v2126 = vpop.trf.xlu0
        %v2127 = vpop.trf.xlu0
        %v2128 = vpop.trf.xlu0
        %2129 = vxpose.xlu0.b32.start [1/16] %v2058, 128
        %2130 = vxpose.xlu0.b32.cont [2/16] %v2060, 128
        %2131 = vxpose.xlu0.b32.cont [3/16] %v2063, 128
        %2132 = vxpose.xlu0.b32.cont [4/16] %v2065, 128
        %2133 = vxpose.xlu0.b32.cont [5/16] %v2068, 128
        %2134 = vxpose.xlu0.b32.cont [6/16] %v2070, 128
        %2135 = vxpose.xlu0.b32.cont [7/16] %v2073, 128
        %2136 = vxpose.xlu0.b32.cont [8/16] %v2075, 128
        %2137 = vxpose.xlu0.b32.cont [9/16] %v2078, 128
        %2138 = vxpose.xlu0.b32.cont [10/16] %v2080, 128
        %2139 = vxpose.xlu0.b32.cont [11/16] %v2083, 128
        %2140 = vxpose.xlu0.b32.cont [12/16] %v2085, 128
        %2141 = vxpose.xlu0.b32.cont [13/16] %v2088, 128
        %2142 = vxpose.xlu0.b32.cont [14/16] %v2090, 128
        %2143 = vxpose.xlu0.b32.cont [15/16] %v2093, 128
        %2144 = vxpose.xlu0.b32.end [16/16] %v2095, 128
        %v2145 = vpop.trf.xlu0
        %v2146 = vpop.trf.xlu0
        %v2147 = vpop.trf.xlu0
        %v2148 = vpop.trf.xlu0
        %v2149 = vpop.trf.xlu0
        %v2150 = vpop.trf.xlu0
        %v2151 = vpop.trf.xlu0
        %v2152 = vpop.trf.xlu0
        %v2153 = vpop.trf.xlu0
        %v2154 = vpop.trf.xlu0
        %v2155 = vpop.trf.xlu0
        %v2156 = vpop.trf.xlu0
        %v2157 = vpop.trf.xlu0
        %v2158 = vpop.trf.xlu0
        %v2159 = vpop.trf.xlu0
        %v2160 = vpop.trf.xlu0
        %2161 = vst [vmem:[%s383] sm:$0xff] %v2113
        %2162 = vst [vmem:[%s383 + $0x8] sm:$0xff] %v2145
        %v2163 = vmax.f32 %v2018, 0.0
        %v2164 = vmax.f32 %v2020, 0.0
        %v2165 = vmax.f32 %v2023, 0.0
        %v2166 = vmax.f32 %v2025, 0.0
        %v2167 = vmax.f32 %v2028, 0.0
        %v2168 = vmax.f32 %v2030, 0.0
        %v2169 = vmax.f32 %v2033, 0.0
        %v2170 = vmax.f32 %v2035, 0.0
        %v2171 = vmax.f32 %v2038, 0.0
        %v2172 = vmax.f32 %v2040, 0.0
        %v2173 = vmax.f32 %v2043, 0.0
        %v2174 = vmax.f32 %v2045, 0.0
        %v2175 = vmax.f32 %v2048, 0.0
        %v2176 = vmax.f32 %v2050, 0.0
        %v2177 = vmax.f32 %v2053, 0.0
        %v2178 = vmax.f32 %v2055, 0.0
        %v2179 = vmax.f32 %v2058, 0.0
        %v2180 = vmax.f32 %v2060, 0.0
        %v2181 = vmax.f32 %v2063, 0.0
        %v2182 = vmax.f32 %v2065, 0.0
        %v2183 = vmax.f32 %v2068, 0.0
        %v2184 = vmax.f32 %v2070, 0.0
        %v2185 = vmax.f32 %v2073, 0.0
        %v2186 = vmax.f32 %v2075, 0.0
        %v2187 = vmax.f32 %v2078, 0.0
        %v2188 = vmax.f32 %v2080, 0.0
        %v2189 = vmax.f32 %v2083, 0.0
        %v2190 = vmax.f32 %v2085, 0.0
        %v2191 = vmax.f32 %v2088, 0.0
        %v2192 = vmax.f32 %v2090, 0.0
        %v2193 = vmax.f32 %v2093, 0.0
        %v2194 = vmax.f32 %v2095, 0.0
        %vm2195 = vcmask 64512
        %2196 = vst.msk [vmem:[#allocation3] sm:$0xff] %vm2195, 0.0
        %2197 = vst.msk [vmem:[#allocation3 + $0x8] sm:$0xff] %vm2195, 0.0
        %vm2198 = vcmask 58368
        %2199 = vst.msk [vmem:[#allocation3 + $0x10] sm:$0x3] %vm2198, 0.0
        %2200 = vst.msk [vmem:[#allocation3 + $0x18] sm:$0xff] %vm2195, 0.0
        %2201 = vst.msk [vmem:[#allocation3 + $0x20] sm:$0xff] %vm2195, 0.0
        %2202 = vst.msk [vmem:[#allocation3 + $0x28] sm:$0x3] %vm2198, 0.0
        %2203 = vst.msk [vmem:[#allocation3 + $0x30] sm:$0xff] %vm2195, 0.0
        %2204 = vst.msk [vmem:[#allocation3 + $0x38] sm:$0xff] %vm2195, 0.0
        %2205 = vst.msk [vmem:[#allocation3 + $0x40] sm:$0x3] %vm2198, 0.0
        %2206 = vst.msk [vmem:[#allocation3 + $0x48] sm:$0xff] %vm2195, 0.0
        %2207 = vst.msk [vmem:[#allocation3 + $0x50] sm:$0xff] %vm2195, 0.0
        %2208 = vst.msk [vmem:[#allocation3 + $0x58] sm:$0x3] %vm2198, 0.0
        %2209 = vst.msk [vmem:[#allocation3 + $0x60] sm:$0xff] %vm2195, 0.0
        %2210 = vst.msk [vmem:[#allocation3 + $0x68] sm:$0xff] %vm2195, 0.0
        %2211 = vst.msk [vmem:[#allocation3 + $0x70] sm:$0x3] %vm2198, 0.0
        %2212 = vst.msk [vmem:[#allocation3 + $0x78] sm:$0xff] %vm2195, 0.0
        %2213 = vst.msk [vmem:[#allocation3 + $0x80] sm:$0xff] %vm2195, 0.0
        %2214 = vst.msk [vmem:[#allocation3 + $0x88] sm:$0x3] %vm2198, 0.0
        %2215 = vst.msk [vmem:[#allocation3 + $0x90] sm:$0xff] %vm2195, 0.0
        %2216 = vst.msk [vmem:[#allocation3 + $0x98] sm:$0xff] %vm2195, 0.0
        %2217 = vst.msk [vmem:[#allocation3 + $0xa0] sm:$0x3] %vm2198, 0.0
        %2218 = vst.msk [vmem:[#allocation3 + $0xa8] sm:$0xff] %vm2195, 0.0
        %2219 = vst.msk [vmem:[#allocation3 + $0xb0] sm:$0xff] %vm2195, 0.0
        %2220 = vst.msk [vmem:[#allocation3 + $0xb8] sm:$0x3] %vm2198, 0.0
        %2221 = vst.msk [vmem:[#allocation3 + $0xc0] sm:$0xff] %vm2195, 0.0
        %2222 = vst.msk [vmem:[#allocation3 + $0xc8] sm:$0xff] %vm2195, 0.0
        %2223 = vst.msk [vmem:[#allocation3 + $0xd0] sm:$0x3] %vm2198, 0.0
        %2224 = vst.msk [vmem:[#allocation3 + $0xd8] sm:$0xff] %vm2195, 0.0
        %2225 = vst.msk [vmem:[#allocation3 + $0xe0] sm:$0xff] %vm2195, 0.0
        %2226 = vst.msk [vmem:[#allocation3 + $0xe8] sm:$0x3] %vm2198, 0.0
        %2227 = vst.msk [vmem:[#allocation3 + $0xf0] sm:$0xff] %vm2195, 0.0
        %2228 = vst.msk [vmem:[#allocation3 + $0xf8] sm:$0xff] %vm2195, 0.0
        %2229 = vst.msk [vmem:[#allocation3 + $0x100] sm:$0x3] %vm2198, 0.0
        %2230 = vst.msk [vmem:[#allocation3 + $0x108] sm:$0xff] %vm2195, 0.0
        %2231 = vst.msk [vmem:[#allocation3 + $0x110] sm:$0xff] %vm2195, 0.0
        %2232 = vst.msk [vmem:[#allocation3 + $0x118] sm:$0x3] %vm2198, 0.0
        %2233 = vst.msk [vmem:[#allocation3 + $0x120] sm:$0xff] %vm2195, 0.0
        %2234 = vst.msk [vmem:[#allocation3 + $0x128] sm:$0xff] %vm2195, 0.0
        %2235 = vst.msk [vmem:[#allocation3 + $0x130] sm:$0x3] %vm2198, 0.0
        %2236 = vst.msk [vmem:[#allocation3 + $0x138] sm:$0xff] %vm2195, 0.0
        %2237 = vst.msk [vmem:[#allocation3 + $0x140] sm:$0xff] %vm2195, 0.0
        %2238 = vst.msk [vmem:[#allocation3 + $0x148] sm:$0x3] %vm2198, 0.0
        %2239 = vst.msk [vmem:[#allocation3 + $0x150] sm:$0xff] %vm2195, 0.0
        %2240 = vst.msk [vmem:[#allocation3 + $0x158] sm:$0xff] %vm2195, 0.0
        %2241 = vst.msk [vmem:[#allocation3 + $0x160] sm:$0x3] %vm2198, 0.0
        %2242 = vst.msk [vmem:[#allocation3 + $0x168] sm:$0xff] %vm2195, 0.0
        %2243 = vst.msk [vmem:[#allocation3 + $0x170] sm:$0xff] %vm2195, 0.0
        %2244 = vst.msk [vmem:[#allocation3 + $0x178] sm:$0x3] %vm2198, 0.0
        %2245 = vst.msk [vmem:[#allocation3 + $0x180] sm:$0xff] %vm2195, 0.0
        %2246 = vst.msk [vmem:[#allocation3 + $0x188] sm:$0xff] %vm2195, 0.0
        %2247 = vst.msk [vmem:[#allocation3 + $0x190] sm:$0x3] %vm2198, 0.0
        %2248 = vst.msk [vmem:[#allocation3 + $0x198] sm:$0xff] %vm2195, 0.0
        %2249 = vst.msk [vmem:[#allocation3 + $0x1a0] sm:$0xff] %vm2195, 0.0
        %2250 = vst.msk [vmem:[#allocation3 + $0x1a8] sm:$0x3] %vm2198, 0.0
        %s2251 = scalar_lea.vmem [#allocation3], 24
        %2252 = vst.msk [vmem:[%s2251 + $0x1] sm:$0xff] %vm2195, %v2163
        %2253 = vst.msk [vmem:[%s2251 + $0x9] sm:$0xff] %vm2195, %v2164
        %2254 = vst.msk [vmem:[%s2251 + $0x19] sm:$0xff] %vm2195, %v2165
        %2255 = vst.msk [vmem:[%s2251 + $0x21] sm:$0xff] %vm2195, %v2166
        %2256 = vst.msk [vmem:[%s2251 + $0x31] sm:$0xff] %vm2195, %v2167
        %2257 = vst.msk [vmem:[%s2251 + $0x39] sm:$0xff] %vm2195, %v2168
        %2258 = vst.msk [vmem:[%s2251 + $0x49] sm:$0xff] %vm2195, %v2169
        %2259 = vst.msk [vmem:[%s2251 + $0x51] sm:$0xff] %vm2195, %v2170
        %2260 = vst.msk [vmem:[%s2251 + $0x61] sm:$0xff] %vm2195, %v2171
        %2261 = vst.msk [vmem:[%s2251 + $0x69] sm:$0xff] %vm2195, %v2172
        %2262 = vst.msk [vmem:[%s2251 + $0x79] sm:$0xff] %vm2195, %v2173
        %2263 = vst.msk [vmem:[%s2251 + $0x81] sm:$0xff] %vm2195, %v2174
        %2264 = vst.msk [vmem:[%s2251 + $0x91] sm:$0xff] %vm2195, %v2175
        %2265 = vst.msk [vmem:[%s2251 + $0x99] sm:$0xff] %vm2195, %v2176
        %2266 = vst.msk [vmem:[%s2251 + $0xa9] sm:$0xff] %vm2195, %v2177
        %2267 = vst.msk [vmem:[%s2251 + $0xb1] sm:$0xff] %vm2195, %v2178
        %2268 = vst.msk [vmem:[%s2251 + $0xc1] sm:$0xff] %vm2195, %v2179
        %2269 = vst.msk [vmem:[%s2251 + $0xc9] sm:$0xff] %vm2195, %v2180
        %2270 = vst.msk [vmem:[%s2251 + $0xd9] sm:$0xff] %vm2195, %v2181
        %2271 = vst.msk [vmem:[%s2251 + $0xe1] sm:$0xff] %vm2195, %v2182
        %2272 = vst.msk [vmem:[%s2251 + $0xf1] sm:$0xff] %vm2195, %v2183
        %2273 = vst.msk [vmem:[%s2251 + $0xf9] sm:$0xff] %vm2195, %v2184
        %2274 = vst.msk [vmem:[%s2251 + $0x109] sm:$0xff] %vm2195, %v2185
        %2275 = vst.msk [vmem:[%s2251 + $0x111] sm:$0xff] %vm2195, %v2186
        %2276 = vst.msk [vmem:[%s2251 + $0x121] sm:$0xff] %vm2195, %v2187
        %2277 = vst.msk [vmem:[%s2251 + $0x129] sm:$0xff] %vm2195, %v2188
        %2278 = vst.msk [vmem:[%s2251 + $0x139] sm:$0xff] %vm2195, %v2189
        %2279 = vst.msk [vmem:[%s2251 + $0x141] sm:$0xff] %vm2195, %v2190
        %2280 = vst.msk [vmem:[%s2251 + $0x151] sm:$0xff] %vm2195, %v2191
        %2281 = vst.msk [vmem:[%s2251 + $0x159] sm:$0xff] %vm2195, %v2192
        %2282 = vst.msk [vmem:[%s2251 + $0x169] sm:$0xff] %vm2195, %v2193
        %2283 = vst.msk [vmem:[%s2251 + $0x171] sm:$0xff] %vm2195, %v2194
        %v2284 = vld [vmem:[#allocation3] sm:$0xff]
        %v2285 = vld [vmem:[#allocation3 + $0x8] sm:$0xff]
        %v2286 = vld [vmem:[#allocation3 + $0x10] sm:$0x3]
        %v2287 = vld [vmem:[#allocation3 + $0x18] sm:$0xff]
        %v2288 = vld [vmem:[#allocation3 + $0x20] sm:$0xff]
        %v2289 = vld [vmem:[#allocation3 + $0x28] sm:$0x3]
        %v2290 = vld [vmem:[#allocation3 + $0x30] sm:$0xff]
        %v2291 = vld [vmem:[#allocation3 + $0x38] sm:$0xff]
        %v2292 = vld [vmem:[#allocation3 + $0x40] sm:$0x3]
        %v2293 = vld [vmem:[#allocation3 + $0x48] sm:$0xff]
        %v2294 = vld [vmem:[#allocation3 + $0x50] sm:$0xff]
        %v2295 = vld [vmem:[#allocation3 + $0x58] sm:$0x3]
        %v2296 = vld [vmem:[#allocation3 + $0x60] sm:$0xff]
        %v2297 = vld [vmem:[#allocation3 + $0x68] sm:$0xff]
        %v2298 = vld [vmem:[#allocation3 + $0x70] sm:$0x3]
        %v2299 = vld [vmem:[#allocation3 + $0x78] sm:$0xff]
        %v2300 = vld [vmem:[#allocation3 + $0x80] sm:$0xff]
        %v2301 = vld [vmem:[#allocation3 + $0x88] sm:$0x3]
        %v2302 = vld [vmem:[#allocation3 + $0x90] sm:$0xff]
        %v2303 = vld [vmem:[#allocation3 + $0x98] sm:$0xff]
        %v2304 = vld [vmem:[#allocation3 + $0xa0] sm:$0x3]
        %v2305 = vld [vmem:[#allocation3 + $0xa8] sm:$0xff]
        %v2306 = vld [vmem:[#allocation3 + $0xb0] sm:$0xff]
        %v2307 = vld [vmem:[#allocation3 + $0xb8] sm:$0x3]
        %v2308 = vld [vmem:[#allocation3 + $0xc0] sm:$0xff]
        %v2309 = vld [vmem:[#allocation3 + $0xc8] sm:$0xff]
        %v2310 = vld [vmem:[#allocation3 + $0xd0] sm:$0x3]
        %v2311 = vld [vmem:[#allocation3 + $0xd8] sm:$0xff]
        %v2312 = vld [vmem:[#allocation3 + $0xe0] sm:$0xff]
        %v2313 = vld [vmem:[#allocation3 + $0xe8] sm:$0x3]
        %v2314 = vld [vmem:[#allocation3 + $0xf0] sm:$0xff]
        %v2315 = vld [vmem:[#allocation3 + $0xf8] sm:$0xff]
        %v2316 = vld [vmem:[#allocation3 + $0x100] sm:$0x3]
        %v2317 = vld [vmem:[#allocation3 + $0x108] sm:$0xff]
        %v2318 = vld [vmem:[#allocation3 + $0x110] sm:$0xff]
        %v2319 = vld [vmem:[#allocation3 + $0x118] sm:$0x3]
        %v2320 = vld [vmem:[#allocation3 + $0x120] sm:$0xff]
        %v2321 = vld [vmem:[#allocation3 + $0x128] sm:$0xff]
        %v2322 = vld [vmem:[#allocation3 + $0x130] sm:$0x3]
        %v2323 = vld [vmem:[#allocation3 + $0x138] sm:$0xff]
        %v2324 = vld [vmem:[#allocation3 + $0x140] sm:$0xff]
        %v2325 = vld [vmem:[#allocation3 + $0x148] sm:$0x3]
        %v2326 = vld [vmem:[#allocation3 + $0x150] sm:$0xff]
        %v2327 = vld [vmem:[#allocation3 + $0x158] sm:$0xff]
        %v2328 = vld [vmem:[#allocation3 + $0x160] sm:$0x3]
        %v2329 = vld [vmem:[#allocation3 + $0x168] sm:$0xff]
        %v2330 = vld [vmem:[#allocation3 + $0x170] sm:$0xff]
        %v2331 = vld [vmem:[#allocation3 + $0x178] sm:$0x3]
        %v2332 = vld [vmem:[#allocation3 + $0x180] sm:$0xff]
        %v2333 = vld [vmem:[#allocation3 + $0x188] sm:$0xff]
        %v2334 = vld [vmem:[#allocation3 + $0x190] sm:$0x3]
        %v2335 = vld [vmem:[#allocation3 + $0x198] sm:$0xff]
        %v2336 = vld [vmem:[#allocation3 + $0x1a0] sm:$0xff]
        %v2337 = vld [vmem:[#allocation3 + $0x1a8] sm:$0x3]
        %v2386 = vrot.slane %v2284, 1
        %v2387 = vrot.slane %v2285, 1
        %v2388 = vsel %vm699, %v2386, %v2387
        %v2389 = vrot.slane %v2286, 1
        %v2390 = vsel %vm699, %v2387, %v2389
        %v2391 = vrot.slane %v2287, 1
        %v2392 = vrot.slane %v2288, 1
        %v2393 = vsel %vm699, %v2391, %v2392
        %v2394 = vrot.slane %v2289, 1
        %v2395 = vsel %vm699, %v2392, %v2394
        %v2396 = vrot.slane %v2290, 1
        %v2397 = vrot.slane %v2291, 1
        %v2398 = vsel %vm699, %v2396, %v2397
        %v2399 = vrot.slane %v2292, 1
        %v2400 = vsel %vm699, %v2397, %v2399
        %v2401 = vrot.slane %v2293, 1
        %v2402 = vrot.slane %v2294, 1
        %v2403 = vsel %vm699, %v2401, %v2402
        %v2404 = vrot.slane %v2295, 1
        %v2405 = vsel %vm699, %v2402, %v2404
        %v2406 = vrot.slane %v2296, 1
        %v2407 = vrot.slane %v2297, 1
        %v2408 = vsel %vm699, %v2406, %v2407
        %v2409 = vrot.slane %v2298, 1
        %v2410 = vsel %vm699, %v2407, %v2409
        %v2411 = vrot.slane %v2299, 1
        %v2412 = vrot.slane %v2300, 1
        %v2413 = vsel %vm699, %v2411, %v2412
        %v2414 = vrot.slane %v2301, 1
        %v2415 = vsel %vm699, %v2412, %v2414
        %v2416 = vrot.slane %v2302, 1
        %v2417 = vrot.slane %v2303, 1
        %v2418 = vsel %vm699, %v2416, %v2417
        %v2419 = vrot.slane %v2304, 1
        %v2420 = vsel %vm699, %v2417, %v2419
        %v2421 = vrot.slane %v2305, 1
        %v2422 = vrot.slane %v2306, 1
        %v2423 = vsel %vm699, %v2421, %v2422
        %v2424 = vrot.slane %v2307, 1
        %v2425 = vsel %vm699, %v2422, %v2424
        %v2426 = vrot.slane %v2308, 1
        %v2427 = vrot.slane %v2309, 1
        %v2428 = vsel %vm699, %v2426, %v2427
        %v2429 = vrot.slane %v2310, 1
        %v2430 = vsel %vm699, %v2427, %v2429
        %v2431 = vrot.slane %v2311, 1
        %v2432 = vrot.slane %v2312, 1
        %v2433 = vsel %vm699, %v2431, %v2432
        %v2434 = vrot.slane %v2313, 1
        %v2435 = vsel %vm699, %v2432, %v2434
        %v2436 = vrot.slane %v2314, 1
        %v2437 = vrot.slane %v2315, 1
        %v2438 = vsel %vm699, %v2436, %v2437
        %v2439 = vrot.slane %v2316, 1
        %v2440 = vsel %vm699, %v2437, %v2439
        %v2441 = vrot.slane %v2317, 1
        %v2442 = vrot.slane %v2318, 1
        %v2443 = vsel %vm699, %v2441, %v2442
        %v2444 = vrot.slane %v2319, 1
        %v2445 = vsel %vm699, %v2442, %v2444
        %v2446 = vrot.slane %v2320, 1
        %v2447 = vrot.slane %v2321, 1
        %v2448 = vsel %vm699, %v2446, %v2447
        %v2449 = vrot.slane %v2322, 1
        %v2450 = vsel %vm699, %v2447, %v2449
        %v2451 = vrot.slane %v2323, 1
        %v2452 = vrot.slane %v2324, 1
        %v2453 = vsel %vm699, %v2451, %v2452
        %v2454 = vrot.slane %v2325, 1
        %v2455 = vsel %vm699, %v2452, %v2454
        %v2456 = vrot.slane %v2326, 1
        %v2457 = vrot.slane %v2327, 1
        %v2458 = vsel %vm699, %v2456, %v2457
        %v2459 = vrot.slane %v2328, 1
        %v2460 = vsel %vm699, %v2457, %v2459
        %v2461 = vrot.slane %v2329, 1
        %v2462 = vrot.slane %v2330, 1
        %v2463 = vsel %vm699, %v2461, %v2462
        %v2464 = vrot.slane %v2331, 1
        %v2465 = vsel %vm699, %v2462, %v2464
        %2466 = vrot.lane.b32.xlu0 %v2388, 8
        %v2467 = vpop.permute.xlu0 %2466
        %2468 = vrot.lane.b32.xlu0 %v2390, 8
        %v2469 = vpop.permute.xlu0 %2468
        %2470 = vrot.lane.b32.xlu0 %v2393, 8
        %v2471 = vpop.permute.xlu0 %2470
        %2472 = vrot.lane.b32.xlu0 %v2395, 8
        %v2473 = vpop.permute.xlu0 %2472
        %2474 = vrot.lane.b32.xlu0 %v2398, 8
        %v2475 = vpop.permute.xlu0 %2474
        %2476 = vrot.lane.b32.xlu0 %v2400, 8
        %v2477 = vpop.permute.xlu0 %2476
        %2478 = vrot.lane.b32.xlu0 %v2403, 8
        %v2479 = vpop.permute.xlu0 %2478
        %2480 = vrot.lane.b32.xlu0 %v2405, 8
        %v2481 = vpop.permute.xlu0 %2480
        %2482 = vrot.lane.b32.xlu0 %v2408, 8
        %v2483 = vpop.permute.xlu0 %2482
        %2484 = vrot.lane.b32.xlu0 %v2410, 8
        %v2485 = vpop.permute.xlu0 %2484
        %2486 = vrot.lane.b32.xlu0 %v2413, 8
        %v2487 = vpop.permute.xlu0 %2486
        %2488 = vrot.lane.b32.xlu0 %v2415, 8
        %v2489 = vpop.permute.xlu0 %2488
        %2490 = vrot.lane.b32.xlu0 %v2418, 8
        %v2491 = vpop.permute.xlu0 %2490
        %2492 = vrot.lane.b32.xlu0 %v2420, 8
        %v2493 = vpop.permute.xlu0 %2492
        %2494 = vrot.lane.b32.xlu0 %v2423, 8
        %v2495 = vpop.permute.xlu0 %2494
        %2496 = vrot.lane.b32.xlu0 %v2425, 8
        %v2497 = vpop.permute.xlu0 %2496
        %2498 = vrot.lane.b32.xlu0 %v2428, 8
        %v2499 = vpop.permute.xlu0 %2498
        %2500 = vrot.lane.b32.xlu0 %v2430, 8
        %v2501 = vpop.permute.xlu0 %2500
        %2502 = vrot.lane.b32.xlu0 %v2433, 8
        %v2503 = vpop.permute.xlu0 %2502
        %2504 = vrot.lane.b32.xlu0 %v2435, 8
        %v2505 = vpop.permute.xlu0 %2504
        %2506 = vrot.lane.b32.xlu0 %v2438, 8
        %v2507 = vpop.permute.xlu0 %2506
        %2508 = vrot.lane.b32.xlu0 %v2440, 8
        %v2509 = vpop.permute.xlu0 %2508
        %2510 = vrot.lane.b32.xlu0 %v2443, 8
        %v2511 = vpop.permute.xlu0 %2510
        %2512 = vrot.lane.b32.xlu0 %v2445, 8
        %v2513 = vpop.permute.xlu0 %2512
        %2514 = vrot.lane.b32.xlu0 %v2448, 8
        %v2515 = vpop.permute.xlu0 %2514
        %2516 = vrot.lane.b32.xlu0 %v2450, 8
        %v2517 = vpop.permute.xlu0 %2516
        %2518 = vrot.lane.b32.xlu0 %v2453, 8
        %v2519 = vpop.permute.xlu0 %2518
        %2520 = vrot.lane.b32.xlu0 %v2455, 8
        %v2521 = vpop.permute.xlu0 %2520
        %2522 = vrot.lane.b32.xlu0 %v2458, 8
        %v2523 = vpop.permute.xlu0 %2522
        %2524 = vrot.lane.b32.xlu0 %v2460, 8
        %v2525 = vpop.permute.xlu0 %2524
        %2526 = vrot.lane.b32.xlu0 %v2463, 8
        %v2527 = vpop.permute.xlu0 %2526
        %2528 = vrot.lane.b32.xlu0 %v2465, 8
        %v2529 = vpop.permute.xlu0 %2528
        %v2562 = vrot.slane %v2284, 2
        %v2563 = vrot.slane %v2285, 2
        %v2564 = vsel %vm876, %v2562, %v2563
        %v2565 = vrot.slane %v2286, 2
        %v2566 = vsel %vm876, %v2563, %v2565
        %v2567 = vrot.slane %v2287, 2
        %v2568 = vrot.slane %v2288, 2
        %v2569 = vsel %vm876, %v2567, %v2568
        %v2570 = vrot.slane %v2289, 2
        %v2571 = vsel %vm876, %v2568, %v2570
        %v2572 = vrot.slane %v2290, 2
        %v2573 = vrot.slane %v2291, 2
        %v2574 = vsel %vm876, %v2572, %v2573
        %v2575 = vrot.slane %v2292, 2
        %v2576 = vsel %vm876, %v2573, %v2575
        %v2577 = vrot.slane %v2293, 2
        %v2578 = vrot.slane %v2294, 2
        %v2579 = vsel %vm876, %v2577, %v2578
        %v2580 = vrot.slane %v2295, 2
        %v2581 = vsel %vm876, %v2578, %v2580
        %v2582 = vrot.slane %v2296, 2
        %v2583 = vrot.slane %v2297, 2
        %v2584 = vsel %vm876, %v2582, %v2583
        %v2585 = vrot.slane %v2298, 2
        %v2586 = vsel %vm876, %v2583, %v2585
        %v2587 = vrot.slane %v2299, 2
        %v2588 = vrot.slane %v2300, 2
        %v2589 = vsel %vm876, %v2587, %v2588
        %v2590 = vrot.slane %v2301, 2
        %v2591 = vsel %vm876, %v2588, %v2590
        %v2592 = vrot.slane %v2302, 2
        %v2593 = vrot.slane %v2303, 2
        %v2594 = vsel %vm876, %v2592, %v2593
        %v2595 = vrot.slane %v2304, 2
        %v2596 = vsel %vm876, %v2593, %v2595
        %v2597 = vrot.slane %v2305, 2
        %v2598 = vrot.slane %v2306, 2
        %v2599 = vsel %vm876, %v2597, %v2598
        %v2600 = vrot.slane %v2307, 2
        %v2601 = vsel %vm876, %v2598, %v2600
        %v2602 = vrot.slane %v2308, 2
        %v2603 = vrot.slane %v2309, 2
        %v2604 = vsel %vm876, %v2602, %v2603
        %v2605 = vrot.slane %v2310, 2
        %v2606 = vsel %vm876, %v2603, %v2605
        %v2607 = vrot.slane %v2311, 2
        %v2608 = vrot.slane %v2312, 2
        %v2609 = vsel %vm876, %v2607, %v2608
        %v2610 = vrot.slane %v2313, 2
        %v2611 = vsel %vm876, %v2608, %v2610
        %v2612 = vrot.slane %v2314, 2
        %v2613 = vrot.slane %v2315, 2
        %v2614 = vsel %vm876, %v2612, %v2613
        %v2615 = vrot.slane %v2316, 2
        %v2616 = vsel %vm876, %v2613, %v2615
        %v2617 = vrot.slane %v2317, 2
        %v2618 = vrot.slane %v2318, 2
        %v2619 = vsel %vm876, %v2617, %v2618
        %v2620 = vrot.slane %v2319, 2
        %v2621 = vsel %vm876, %v2618, %v2620
        %v2622 = vrot.slane %v2320, 2
        %v2623 = vrot.slane %v2321, 2
        %v2624 = vsel %vm876, %v2622, %v2623
        %v2625 = vrot.slane %v2322, 2
        %v2626 = vsel %vm876, %v2623, %v2625
        %v2627 = vrot.slane %v2323, 2
        %v2628 = vrot.slane %v2324, 2
        %v2629 = vsel %vm876, %v2627, %v2628
        %v2630 = vrot.slane %v2325, 2
        %v2631 = vsel %vm876, %v2628, %v2630
        %v2632 = vrot.slane %v2326, 2
        %v2633 = vrot.slane %v2327, 2
        %v2634 = vsel %vm876, %v2632, %v2633
        %v2635 = vrot.slane %v2328, 2
        %v2636 = vsel %vm876, %v2633, %v2635
        %v2637 = vrot.slane %v2329, 2
        %v2638 = vrot.slane %v2330, 2
        %v2639 = vsel %vm876, %v2637, %v2638
        %v2640 = vrot.slane %v2331, 2
        %v2641 = vsel %vm876, %v2638, %v2640
        %2642 = vrot.lane.b32.xlu0 %v2564, 16
        %v2643 = vpop.permute.xlu0 %2642
        %2644 = vrot.lane.b32.xlu0 %v2566, 16
        %v2645 = vpop.permute.xlu0 %2644
        %2646 = vrot.lane.b32.xlu0 %v2569, 16
        %v2647 = vpop.permute.xlu0 %2646
        %2648 = vrot.lane.b32.xlu0 %v2571, 16
        %v2649 = vpop.permute.xlu0 %2648
        %2650 = vrot.lane.b32.xlu0 %v2574, 16
        %v2651 = vpop.permute.xlu0 %2650
        %2652 = vrot.lane.b32.xlu0 %v2576, 16
        %v2653 = vpop.permute.xlu0 %2652
        %2654 = vrot.lane.b32.xlu0 %v2579, 16
        %v2655 = vpop.permute.xlu0 %2654
        %2656 = vrot.lane.b32.xlu0 %v2581, 16
        %v2657 = vpop.permute.xlu0 %2656
        %2658 = vrot.lane.b32.xlu0 %v2584, 16
        %v2659 = vpop.permute.xlu0 %2658
        %2660 = vrot.lane.b32.xlu0 %v2586, 16
        %v2661 = vpop.permute.xlu0 %2660
        %2662 = vrot.lane.b32.xlu0 %v2589, 16
        %v2663 = vpop.permute.xlu0 %2662
        %2664 = vrot.lane.b32.xlu0 %v2591, 16
        %v2665 = vpop.permute.xlu0 %2664
        %2666 = vrot.lane.b32.xlu0 %v2594, 16
        %v2667 = vpop.permute.xlu0 %2666
        %2668 = vrot.lane.b32.xlu0 %v2596, 16
        %v2669 = vpop.permute.xlu0 %2668
        %2670 = vrot.lane.b32.xlu0 %v2599, 16
        %v2671 = vpop.permute.xlu0 %2670
        %2672 = vrot.lane.b32.xlu0 %v2601, 16
        %v2673 = vpop.permute.xlu0 %2672
        %2674 = vrot.lane.b32.xlu0 %v2604, 16
        %v2675 = vpop.permute.xlu0 %2674
        %2676 = vrot.lane.b32.xlu0 %v2606, 16
        %v2677 = vpop.permute.xlu0 %2676
        %2678 = vrot.lane.b32.xlu0 %v2609, 16
        %v2679 = vpop.permute.xlu0 %2678
        %2680 = vrot.lane.b32.xlu0 %v2611, 16
        %v2681 = vpop.permute.xlu0 %2680
        %2682 = vrot.lane.b32.xlu0 %v2614, 16
        %v2683 = vpop.permute.xlu0 %2682
        %2684 = vrot.lane.b32.xlu0 %v2616, 16
        %v2685 = vpop.permute.xlu0 %2684
        %2686 = vrot.lane.b32.xlu0 %v2619, 16
        %v2687 = vpop.permute.xlu0 %2686
        %2688 = vrot.lane.b32.xlu0 %v2621, 16
        %v2689 = vpop.permute.xlu0 %2688
        %2690 = vrot.lane.b32.xlu0 %v2624, 16
        %v2691 = vpop.permute.xlu0 %2690
        %2692 = vrot.lane.b32.xlu0 %v2626, 16
        %v2693 = vpop.permute.xlu0 %2692
        %2694 = vrot.lane.b32.xlu0 %v2629, 16
        %v2695 = vpop.permute.xlu0 %2694
        %2696 = vrot.lane.b32.xlu0 %v2631, 16
        %v2697 = vpop.permute.xlu0 %2696
        %2698 = vrot.lane.b32.xlu0 %v2634, 16
        %v2699 = vpop.permute.xlu0 %2698
        %2700 = vrot.lane.b32.xlu0 %v2636, 16
        %v2701 = vpop.permute.xlu0 %2700
        %2702 = vrot.lane.b32.xlu0 %v2639, 16
        %v2703 = vpop.permute.xlu0 %2702
        %2704 = vrot.lane.b32.xlu0 %v2641, 16
        %v2705 = vpop.permute.xlu0 %2704
        %2740 = vrot.lane.b32.xlu0 %v2287, 24
        %v2741 = vpop.permute.xlu0 %2740
        %2742 = vrot.lane.b32.xlu0 %v2288, 24
        %v2743 = vpop.permute.xlu0 %2742
        %2744 = vrot.lane.b32.xlu0 %v2290, 24
        %v2745 = vpop.permute.xlu0 %2744
        %2746 = vrot.lane.b32.xlu0 %v2291, 24
        %v2747 = vpop.permute.xlu0 %2746
        %2748 = vrot.lane.b32.xlu0 %v2293, 24
        %v2749 = vpop.permute.xlu0 %2748
        %2750 = vrot.lane.b32.xlu0 %v2294, 24
        %v2751 = vpop.permute.xlu0 %2750
        %2752 = vrot.lane.b32.xlu0 %v2296, 24
        %v2753 = vpop.permute.xlu0 %2752
        %2754 = vrot.lane.b32.xlu0 %v2297, 24
        %v2755 = vpop.permute.xlu0 %2754
        %2756 = vrot.lane.b32.xlu0 %v2299, 24
        %v2757 = vpop.permute.xlu0 %2756
        %2758 = vrot.lane.b32.xlu0 %v2300, 24
        %v2759 = vpop.permute.xlu0 %2758
        %2760 = vrot.lane.b32.xlu0 %v2302, 24
        %v2761 = vpop.permute.xlu0 %2760
        %2762 = vrot.lane.b32.xlu0 %v2303, 24
        %v2763 = vpop.permute.xlu0 %2762
        %2764 = vrot.lane.b32.xlu0 %v2305, 24
        %v2765 = vpop.permute.xlu0 %2764
        %2766 = vrot.lane.b32.xlu0 %v2306, 24
        %v2767 = vpop.permute.xlu0 %2766
        %2768 = vrot.lane.b32.xlu0 %v2308, 24
        %v2769 = vpop.permute.xlu0 %2768
        %2770 = vrot.lane.b32.xlu0 %v2309, 24
        %v2771 = vpop.permute.xlu0 %2770
        %2772 = vrot.lane.b32.xlu0 %v2311, 24
        %v2773 = vpop.permute.xlu0 %2772
        %2774 = vrot.lane.b32.xlu0 %v2312, 24
        %v2775 = vpop.permute.xlu0 %2774
        %2776 = vrot.lane.b32.xlu0 %v2314, 24
        %v2777 = vpop.permute.xlu0 %2776
        %2778 = vrot.lane.b32.xlu0 %v2315, 24
        %v2779 = vpop.permute.xlu0 %2778
        %2780 = vrot.lane.b32.xlu0 %v2317, 24
        %v2781 = vpop.permute.xlu0 %2780
        %2782 = vrot.lane.b32.xlu0 %v2318, 24
        %v2783 = vpop.permute.xlu0 %2782
        %2784 = vrot.lane.b32.xlu0 %v2320, 24
        %v2785 = vpop.permute.xlu0 %2784
        %2786 = vrot.lane.b32.xlu0 %v2321, 24
        %v2787 = vpop.permute.xlu0 %2786
        %2788 = vrot.lane.b32.xlu0 %v2323, 24
        %v2789 = vpop.permute.xlu0 %2788
        %2790 = vrot.lane.b32.xlu0 %v2324, 24
        %v2791 = vpop.permute.xlu0 %2790
        %2792 = vrot.lane.b32.xlu0 %v2326, 24
        %v2793 = vpop.permute.xlu0 %2792
        %2794 = vrot.lane.b32.xlu0 %v2327, 24
        %v2795 = vpop.permute.xlu0 %2794
        %2796 = vrot.lane.b32.xlu0 %v2329, 24
        %v2797 = vpop.permute.xlu0 %2796
        %2798 = vrot.lane.b32.xlu0 %v2330, 24
        %v2799 = vpop.permute.xlu0 %2798
        %2800 = vrot.lane.b32.xlu0 %v2332, 24
        %v2801 = vpop.permute.xlu0 %2800
        %2802 = vrot.lane.b32.xlu0 %v2333, 24
        %v2803 = vpop.permute.xlu0 %2802
        %v2837 = vrot.slane %v2332, 1
        %v2838 = vrot.slane %v2333, 1
        %v2839 = vsel %vm699, %v2837, %v2838
        %v2840 = vrot.slane %v2334, 1
        %v2841 = vsel %vm699, %v2838, %v2840
        %2842 = vrot.lane.b32.xlu0 %v2393, 32
        %v2843 = vpop.permute.xlu0 %2842
        %2844 = vrot.lane.b32.xlu0 %v2395, 32
        %v2845 = vpop.permute.xlu0 %2844
        %2846 = vrot.lane.b32.xlu0 %v2398, 32
        %v2847 = vpop.permute.xlu0 %2846
        %2848 = vrot.lane.b32.xlu0 %v2400, 32
        %v2849 = vpop.permute.xlu0 %2848
        %2850 = vrot.lane.b32.xlu0 %v2403, 32
        %v2851 = vpop.permute.xlu0 %2850
        %2852 = vrot.lane.b32.xlu0 %v2405, 32
        %v2853 = vpop.permute.xlu0 %2852
        %2854 = vrot.lane.b32.xlu0 %v2408, 32
        %v2855 = vpop.permute.xlu0 %2854
        %2856 = vrot.lane.b32.xlu0 %v2410, 32
        %v2857 = vpop.permute.xlu0 %2856
        %2858 = vrot.lane.b32.xlu0 %v2413, 32
        %v2859 = vpop.permute.xlu0 %2858
        %2860 = vrot.lane.b32.xlu0 %v2415, 32
        %v2861 = vpop.permute.xlu0 %2860
        %2862 = vrot.lane.b32.xlu0 %v2418, 32
        %v2863 = vpop.permute.xlu0 %2862
        %2864 = vrot.lane.b32.xlu0 %v2420, 32
        %v2865 = vpop.permute.xlu0 %2864
        %2866 = vrot.lane.b32.xlu0 %v2423, 32
        %v2867 = vpop.permute.xlu0 %2866
        %2868 = vrot.lane.b32.xlu0 %v2425, 32
        %v2869 = vpop.permute.xlu0 %2868
        %2870 = vrot.lane.b32.xlu0 %v2428, 32
        %v2871 = vpop.permute.xlu0 %2870
        %2872 = vrot.lane.b32.xlu0 %v2430, 32
        %v2873 = vpop.permute.xlu0 %2872
        %2874 = vrot.lane.b32.xlu0 %v2433, 32
        %v2875 = vpop.permute.xlu0 %2874
        %2876 = vrot.lane.b32.xlu0 %v2435, 32
        %v2877 = vpop.permute.xlu0 %2876
        %2878 = vrot.lane.b32.xlu0 %v2438, 32
        %v2879 = vpop.permute.xlu0 %2878
        %2880 = vrot.lane.b32.xlu0 %v2440, 32
        %v2881 = vpop.permute.xlu0 %2880
        %2882 = vrot.lane.b32.xlu0 %v2443, 32
        %v2883 = vpop.permute.xlu0 %2882
        %2884 = vrot.lane.b32.xlu0 %v2445, 32
        %v2885 = vpop.permute.xlu0 %2884
        %2886 = vrot.lane.b32.xlu0 %v2448, 32
        %v2887 = vpop.permute.xlu0 %2886
        %2888 = vrot.lane.b32.xlu0 %v2450, 32
        %v2889 = vpop.permute.xlu0 %2888
        %2890 = vrot.lane.b32.xlu0 %v2453, 32
        %v2891 = vpop.permute.xlu0 %2890
        %2892 = vrot.lane.b32.xlu0 %v2455, 32
        %v2893 = vpop.permute.xlu0 %2892
        %2894 = vrot.lane.b32.xlu0 %v2458, 32
        %v2895 = vpop.permute.xlu0 %2894
        %2896 = vrot.lane.b32.xlu0 %v2460, 32
        %v2897 = vpop.permute.xlu0 %2896
        %2898 = vrot.lane.b32.xlu0 %v2463, 32
        %v2899 = vpop.permute.xlu0 %2898
        %2900 = vrot.lane.b32.xlu0 %v2465, 32
        %v2901 = vpop.permute.xlu0 %2900
        %2902 = vrot.lane.b32.xlu0 %v2839, 32
        %v2903 = vpop.permute.xlu0 %2902
        %2904 = vrot.lane.b32.xlu0 %v2841, 32
        %v2905 = vpop.permute.xlu0 %2904
        %v2938 = vrot.slane %v2332, 2
        %v2939 = vrot.slane %v2333, 2
        %v2940 = vsel %vm876, %v2938, %v2939
        %v2941 = vrot.slane %v2334, 2
        %v2942 = vsel %vm876, %v2939, %v2941
        %2943 = vrot.lane.b32.xlu0 %v2569, 40
        %v2944 = vpop.permute.xlu0 %2943
        %2945 = vrot.lane.b32.xlu0 %v2571, 40
        %v2946 = vpop.permute.xlu0 %2945
        %2947 = vrot.lane.b32.xlu0 %v2574, 40
        %v2948 = vpop.permute.xlu0 %2947
        %2949 = vrot.lane.b32.xlu0 %v2576, 40
        %v2950 = vpop.permute.xlu0 %2949
        %2951 = vrot.lane.b32.xlu0 %v2579, 40
        %v2952 = vpop.permute.xlu0 %2951
        %2953 = vrot.lane.b32.xlu0 %v2581, 40
        %v2954 = vpop.permute.xlu0 %2953
        %2955 = vrot.lane.b32.xlu0 %v2584, 40
        %v2956 = vpop.permute.xlu0 %2955
        %2957 = vrot.lane.b32.xlu0 %v2586, 40
        %v2958 = vpop.permute.xlu0 %2957
        %2959 = vrot.lane.b32.xlu0 %v2589, 40
        %v2960 = vpop.permute.xlu0 %2959
        %2961 = vrot.lane.b32.xlu0 %v2591, 40
        %v2962 = vpop.permute.xlu0 %2961
        %2963 = vrot.lane.b32.xlu0 %v2594, 40
        %v2964 = vpop.permute.xlu0 %2963
        %2965 = vrot.lane.b32.xlu0 %v2596, 40
        %v2966 = vpop.permute.xlu0 %2965
        %2967 = vrot.lane.b32.xlu0 %v2599, 40
        %v2968 = vpop.permute.xlu0 %2967
        %2969 = vrot.lane.b32.xlu0 %v2601, 40
        %v2970 = vpop.permute.xlu0 %2969
        %2971 = vrot.lane.b32.xlu0 %v2604, 40
        %v2972 = vpop.permute.xlu0 %2971
        %2973 = vrot.lane.b32.xlu0 %v2606, 40
        %v2974 = vpop.permute.xlu0 %2973
        %2975 = vrot.lane.b32.xlu0 %v2609, 40
        %v2976 = vpop.permute.xlu0 %2975
        %2977 = vrot.lane.b32.xlu0 %v2611, 40
        %v2978 = vpop.permute.xlu0 %2977
        %2979 = vrot.lane.b32.xlu0 %v2614, 40
        %v2980 = vpop.permute.xlu0 %2979
        %2981 = vrot.lane.b32.xlu0 %v2616, 40
        %v2982 = vpop.permute.xlu0 %2981
        %2983 = vrot.lane.b32.xlu0 %v2619, 40
        %v2984 = vpop.permute.xlu0 %2983
        %2985 = vrot.lane.b32.xlu0 %v2621, 40
        %v2986 = vpop.permute.xlu0 %2985
        %2987 = vrot.lane.b32.xlu0 %v2624, 40
        %v2988 = vpop.permute.xlu0 %2987
        %2989 = vrot.lane.b32.xlu0 %v2626, 40
        %v2990 = vpop.permute.xlu0 %2989
        %2991 = vrot.lane.b32.xlu0 %v2629, 40
        %v2992 = vpop.permute.xlu0 %2991
        %2993 = vrot.lane.b32.xlu0 %v2631, 40
        %v2994 = vpop.permute.xlu0 %2993
        %2995 = vrot.lane.b32.xlu0 %v2634, 40
        %v2996 = vpop.permute.xlu0 %2995
        %2997 = vrot.lane.b32.xlu0 %v2636, 40
        %v2998 = vpop.permute.xlu0 %2997
        %2999 = vrot.lane.b32.xlu0 %v2639, 40
        %v3000 = vpop.permute.xlu0 %2999
        %3001 = vrot.lane.b32.xlu0 %v2641, 40
        %v3002 = vpop.permute.xlu0 %3001
        %3003 = vrot.lane.b32.xlu0 %v2940, 40
        %v3004 = vpop.permute.xlu0 %3003
        %3005 = vrot.lane.b32.xlu0 %v2942, 40
        %v3006 = vpop.permute.xlu0 %3005
        %3041 = vrot.lane.b32.xlu0 %v2290, 48
        %v3042 = vpop.permute.xlu0 %3041
        %3043 = vrot.lane.b32.xlu0 %v2291, 48
        %v3044 = vpop.permute.xlu0 %3043
        %3045 = vrot.lane.b32.xlu0 %v2293, 48
        %v3046 = vpop.permute.xlu0 %3045
        %3047 = vrot.lane.b32.xlu0 %v2294, 48
        %v3048 = vpop.permute.xlu0 %3047
        %3049 = vrot.lane.b32.xlu0 %v2296, 48
        %v3050 = vpop.permute.xlu0 %3049
        %3051 = vrot.lane.b32.xlu0 %v2297, 48
        %v3052 = vpop.permute.xlu0 %3051
        %3053 = vrot.lane.b32.xlu0 %v2299, 48
        %v3054 = vpop.permute.xlu0 %3053
        %3055 = vrot.lane.b32.xlu0 %v2300, 48
        %v3056 = vpop.permute.xlu0 %3055
        %3057 = vrot.lane.b32.xlu0 %v2302, 48
        %v3058 = vpop.permute.xlu0 %3057
        %3059 = vrot.lane.b32.xlu0 %v2303, 48
        %v3060 = vpop.permute.xlu0 %3059
        %3061 = vrot.lane.b32.xlu0 %v2305, 48
        %v3062 = vpop.permute.xlu0 %3061
        %3063 = vrot.lane.b32.xlu0 %v2306, 48
        %v3064 = vpop.permute.xlu0 %3063
        %3065 = vrot.lane.b32.xlu0 %v2308, 48
        %v3066 = vpop.permute.xlu0 %3065
        %3067 = vrot.lane.b32.xlu0 %v2309, 48
        %v3068 = vpop.permute.xlu0 %3067
        %3069 = vrot.lane.b32.xlu0 %v2311, 48
        %v3070 = vpop.permute.xlu0 %3069
        %3071 = vrot.lane.b32.xlu0 %v2312, 48
        %v3072 = vpop.permute.xlu0 %3071
        %3073 = vrot.lane.b32.xlu0 %v2314, 48
        %v3074 = vpop.permute.xlu0 %3073
        %3075 = vrot.lane.b32.xlu0 %v2315, 48
        %v3076 = vpop.permute.xlu0 %3075
        %3077 = vrot.lane.b32.xlu0 %v2317, 48
        %v3078 = vpop.permute.xlu0 %3077
        %3079 = vrot.lane.b32.xlu0 %v2318, 48
        %v3080 = vpop.permute.xlu0 %3079
        %3081 = vrot.lane.b32.xlu0 %v2320, 48
        %v3082 = vpop.permute.xlu0 %3081
        %3083 = vrot.lane.b32.xlu0 %v2321, 48
        %v3084 = vpop.permute.xlu0 %3083
        %3085 = vrot.lane.b32.xlu0 %v2323, 48
        %v3086 = vpop.permute.xlu0 %3085
        %3087 = vrot.lane.b32.xlu0 %v2324, 48
        %v3088 = vpop.permute.xlu0 %3087
        %3089 = vrot.lane.b32.xlu0 %v2326, 48
        %v3090 = vpop.permute.xlu0 %3089
        %3091 = vrot.lane.b32.xlu0 %v2327, 48
        %v3092 = vpop.permute.xlu0 %3091
        %3093 = vrot.lane.b32.xlu0 %v2329, 48
        %v3094 = vpop.permute.xlu0 %3093
        %3095 = vrot.lane.b32.xlu0 %v2330, 48
        %v3096 = vpop.permute.xlu0 %3095
        %3097 = vrot.lane.b32.xlu0 %v2332, 48
        %v3098 = vpop.permute.xlu0 %3097
        %3099 = vrot.lane.b32.xlu0 %v2333, 48
        %v3100 = vpop.permute.xlu0 %3099
        %3101 = vrot.lane.b32.xlu0 %v2335, 48
        %v3102 = vpop.permute.xlu0 %3101
        %3103 = vrot.lane.b32.xlu0 %v2336, 48
        %v3104 = vpop.permute.xlu0 %3103
        %v3138 = vrot.slane %v2335, 1
        %v3139 = vrot.slane %v2336, 1
        %v3140 = vsel %vm699, %v3138, %v3139
        %v3141 = vrot.slane %v2337, 1
        %v3142 = vsel %vm699, %v3139, %v3141
        %3143 = vrot.lane.b32.xlu0 %v2398, 56
        %v3144 = vpop.permute.xlu0 %3143
        %3145 = vrot.lane.b32.xlu0 %v2400, 56
        %v3146 = vpop.permute.xlu0 %3145
        %3147 = vrot.lane.b32.xlu0 %v2403, 56
        %v3148 = vpop.permute.xlu0 %3147
        %3149 = vrot.lane.b32.xlu0 %v2405, 56
        %v3150 = vpop.permute.xlu0 %3149
        %3151 = vrot.lane.b32.xlu0 %v2408, 56
        %v3152 = vpop.permute.xlu0 %3151
        %3153 = vrot.lane.b32.xlu0 %v2410, 56
        %v3154 = vpop.permute.xlu0 %3153
        %3155 = vrot.lane.b32.xlu0 %v2413, 56
        %v3156 = vpop.permute.xlu0 %3155
        %3157 = vrot.lane.b32.xlu0 %v2415, 56
        %v3158 = vpop.permute.xlu0 %3157
        %3159 = vrot.lane.b32.xlu0 %v2418, 56
        %v3160 = vpop.permute.xlu0 %3159
        %3161 = vrot.lane.b32.xlu0 %v2420, 56
        %v3162 = vpop.permute.xlu0 %3161
        %3163 = vrot.lane.b32.xlu0 %v2423, 56
        %v3164 = vpop.permute.xlu0 %3163
        %3165 = vrot.lane.b32.xlu0 %v2425, 56
        %v3166 = vpop.permute.xlu0 %3165
        %3167 = vrot.lane.b32.xlu0 %v2428, 56
        %v3168 = vpop.permute.xlu0 %3167
        %3169 = vrot.lane.b32.xlu0 %v2430, 56
        %v3170 = vpop.permute.xlu0 %3169
        %3171 = vrot.lane.b32.xlu0 %v2433, 56
        %v3172 = vpop.permute.xlu0 %3171
        %3173 = vrot.lane.b32.xlu0 %v2435, 56
        %v3174 = vpop.permute.xlu0 %3173
        %3175 = vrot.lane.b32.xlu0 %v2438, 56
        %v3176 = vpop.permute.xlu0 %3175
        %3177 = vrot.lane.b32.xlu0 %v2440, 56
        %v3178 = vpop.permute.xlu0 %3177
        %3179 = vrot.lane.b32.xlu0 %v2443, 56
        %v3180 = vpop.permute.xlu0 %3179
        %3181 = vrot.lane.b32.xlu0 %v2445, 56
        %v3182 = vpop.permute.xlu0 %3181
        %3183 = vrot.lane.b32.xlu0 %v2448, 56
        %v3184 = vpop.permute.xlu0 %3183
        %3185 = vrot.lane.b32.xlu0 %v2450, 56
        %v3186 = vpop.permute.xlu0 %3185
        %3187 = vrot.lane.b32.xlu0 %v2453, 56
        %v3188 = vpop.permute.xlu0 %3187
        %3189 = vrot.lane.b32.xlu0 %v2455, 56
        %v3190 = vpop.permute.xlu0 %3189
        %3191 = vrot.lane.b32.xlu0 %v2458, 56
        %v3192 = vpop.permute.xlu0 %3191
        %3193 = vrot.lane.b32.xlu0 %v2460, 56
        %v3194 = vpop.permute.xlu0 %3193
        %3195 = vrot.lane.b32.xlu0 %v2463, 56
        %v3196 = vpop.permute.xlu0 %3195
        %3197 = vrot.lane.b32.xlu0 %v2465, 56
        %v3198 = vpop.permute.xlu0 %3197
        %3199 = vrot.lane.b32.xlu0 %v2839, 56
        %v3200 = vpop.permute.xlu0 %3199
        %3201 = vrot.lane.b32.xlu0 %v2841, 56
        %v3202 = vpop.permute.xlu0 %3201
        %3203 = vrot.lane.b32.xlu0 %v3140, 56
        %v3204 = vpop.permute.xlu0 %3203
        %3205 = vrot.lane.b32.xlu0 %v3142, 56
        %v3206 = vpop.permute.xlu0 %3205
        %v3239 = vrot.slane %v2335, 2
        %v3240 = vrot.slane %v2336, 2
        %v3241 = vsel %vm876, %v3239, %v3240
        %v3242 = vrot.slane %v2337, 2
        %v3243 = vsel %vm876, %v3240, %v3242
        %3244 = vrot.lane.b32.xlu0 %v2574, 64
        %v3245 = vpop.permute.xlu0 %3244
        %3246 = vrot.lane.b32.xlu0 %v2576, 64
        %v3247 = vpop.permute.xlu0 %3246
        %3248 = vrot.lane.b32.xlu0 %v2579, 64
        %v3249 = vpop.permute.xlu0 %3248
        %3250 = vrot.lane.b32.xlu0 %v2581, 64
        %v3251 = vpop.permute.xlu0 %3250
        %3252 = vrot.lane.b32.xlu0 %v2584, 64
        %v3253 = vpop.permute.xlu0 %3252
        %3254 = vrot.lane.b32.xlu0 %v2586, 64
        %v3255 = vpop.permute.xlu0 %3254
        %3256 = vrot.lane.b32.xlu0 %v2589, 64
        %v3257 = vpop.permute.xlu0 %3256
        %3258 = vrot.lane.b32.xlu0 %v2591, 64
        %v3259 = vpop.permute.xlu0 %3258
        %3260 = vrot.lane.b32.xlu0 %v2594, 64
        %v3261 = vpop.permute.xlu0 %3260
        %3262 = vrot.lane.b32.xlu0 %v2596, 64
        %v3263 = vpop.permute.xlu0 %3262
        %3264 = vrot.lane.b32.xlu0 %v2599, 64
        %v3265 = vpop.permute.xlu0 %3264
        %3266 = vrot.lane.b32.xlu0 %v2601, 64
        %v3267 = vpop.permute.xlu0 %3266
        %3268 = vrot.lane.b32.xlu0 %v2604, 64
        %v3269 = vpop.permute.xlu0 %3268
        %3270 = vrot.lane.b32.xlu0 %v2606, 64
        %v3271 = vpop.permute.xlu0 %3270
        %3272 = vrot.lane.b32.xlu0 %v2609, 64
        %v3273 = vpop.permute.xlu0 %3272
        %3274 = vrot.lane.b32.xlu0 %v2611, 64
        %v3275 = vpop.permute.xlu0 %3274
        %3276 = vrot.lane.b32.xlu0 %v2614, 64
        %v3277 = vpop.permute.xlu0 %3276
        %3278 = vrot.lane.b32.xlu0 %v2616, 64
        %v3279 = vpop.permute.xlu0 %3278
        %3280 = vrot.lane.b32.xlu0 %v2619, 64
        %v3281 = vpop.permute.xlu0 %3280
        %3282 = vrot.lane.b32.xlu0 %v2621, 64
        %v3283 = vpop.permute.xlu0 %3282
        %3284 = vrot.lane.b32.xlu0 %v2624, 64
        %v3285 = vpop.permute.xlu0 %3284
        %3286 = vrot.lane.b32.xlu0 %v2626, 64
        %v3287 = vpop.permute.xlu0 %3286
        %3288 = vrot.lane.b32.xlu0 %v2629, 64
        %v3289 = vpop.permute.xlu0 %3288
        %3290 = vrot.lane.b32.xlu0 %v2631, 64
        %v3291 = vpop.permute.xlu0 %3290
        %3292 = vrot.lane.b32.xlu0 %v2634, 64
        %v3293 = vpop.permute.xlu0 %3292
        %3294 = vrot.lane.b32.xlu0 %v2636, 64
        %v3295 = vpop.permute.xlu0 %3294
        %3296 = vrot.lane.b32.xlu0 %v2639, 64
        %v3297 = vpop.permute.xlu0 %3296
        %3298 = vrot.lane.b32.xlu0 %v2641, 64
        %v3299 = vpop.permute.xlu0 %3298
        %3300 = vrot.lane.b32.xlu0 %v2940, 64
        %v3301 = vpop.permute.xlu0 %3300
        %3302 = vrot.lane.b32.xlu0 %v2942, 64
        %v3303 = vpop.permute.xlu0 %3302
        %3304 = vrot.lane.b32.xlu0 %v3241, 64
        %v3305 = vpop.permute.xlu0 %3304
        %3306 = vrot.lane.b32.xlu0 %v3243, 64
        %v3307 = vpop.permute.xlu0 %3306
        %v3340 = vsel %vm2195, %v2284, %v2467
        %v3341 = vsel %vm2195, %v2285, %v2469
        %v3342 = vsel %vm2195, %v2287, %v2471
        %v3343 = vsel %vm2195, %v2288, %v2473
        %v3344 = vsel %vm2195, %v2290, %v2475
        %v3345 = vsel %vm2195, %v2291, %v2477
        %v3346 = vsel %vm2195, %v2293, %v2479
        %v3347 = vsel %vm2195, %v2294, %v2481
        %v3348 = vsel %vm2195, %v2296, %v2483
        %v3349 = vsel %vm2195, %v2297, %v2485
        %v3350 = vsel %vm2195, %v2299, %v2487
        %v3351 = vsel %vm2195, %v2300, %v2489
        %v3352 = vsel %vm2195, %v2302, %v2491
        %v3353 = vsel %vm2195, %v2303, %v2493
        %v3354 = vsel %vm2195, %v2305, %v2495
        %v3355 = vsel %vm2195, %v2306, %v2497
        %v3356 = vsel %vm2195, %v2308, %v2499
        %v3357 = vsel %vm2195, %v2309, %v2501
        %v3358 = vsel %vm2195, %v2311, %v2503
        %v3359 = vsel %vm2195, %v2312, %v2505
        %v3360 = vsel %vm2195, %v2314, %v2507
        %v3361 = vsel %vm2195, %v2315, %v2509
        %v3362 = vsel %vm2195, %v2317, %v2511
        %v3363 = vsel %vm2195, %v2318, %v2513
        %v3364 = vsel %vm2195, %v2320, %v2515
        %v3365 = vsel %vm2195, %v2321, %v2517
        %v3366 = vsel %vm2195, %v2323, %v2519
        %v3367 = vsel %vm2195, %v2324, %v2521
        %v3368 = vsel %vm2195, %v2326, %v2523
        %v3369 = vsel %vm2195, %v2327, %v2525
        %v3370 = vsel %vm2195, %v2329, %v2527
        %v3371 = vsel %vm2195, %v2330, %v2529
        %vm3372 = vcmask 130048
        %v3373 = vsel %vm3372, %v3340, %v2643
        %v3374 = vsel %vm3372, %v3341, %v2645
        %v3375 = vsel %vm3372, %v3342, %v2647
        %v3376 = vsel %vm3372, %v3343, %v2649
        %v3377 = vsel %vm3372, %v3344, %v2651
        %v3378 = vsel %vm3372, %v3345, %v2653
        %v3379 = vsel %vm3372, %v3346, %v2655
        %v3380 = vsel %vm3372, %v3347, %v2657
        %v3381 = vsel %vm3372, %v3348, %v2659
        %v3382 = vsel %vm3372, %v3349, %v2661
        %v3383 = vsel %vm3372, %v3350, %v2663
        %v3384 = vsel %vm3372, %v3351, %v2665
        %v3385 = vsel %vm3372, %v3352, %v2667
        %v3386 = vsel %vm3372, %v3353, %v2669
        %v3387 = vsel %vm3372, %v3354, %v2671
        %v3388 = vsel %vm3372, %v3355, %v2673
        %v3389 = vsel %vm3372, %v3356, %v2675
        %v3390 = vsel %vm3372, %v3357, %v2677
        %v3391 = vsel %vm3372, %v3358, %v2679
        %v3392 = vsel %vm3372, %v3359, %v2681
        %v3393 = vsel %vm3372, %v3360, %v2683
        %v3394 = vsel %vm3372, %v3361, %v2685
        %v3395 = vsel %vm3372, %v3362, %v2687
        %v3396 = vsel %vm3372, %v3363, %v2689
        %v3397 = vsel %vm3372, %v3364, %v2691
        %v3398 = vsel %vm3372, %v3365, %v2693
        %v3399 = vsel %vm3372, %v3366, %v2695
        %v3400 = vsel %vm3372, %v3367, %v2697
        %v3401 = vsel %vm3372, %v3368, %v2699
        %v3402 = vsel %vm3372, %v3369, %v2701
        %v3403 = vsel %vm3372, %v3370, %v2703
        %v3404 = vsel %vm3372, %v3371, %v2705
        %v3405 = vsel %vm1885, %v3373, %v2741
        %v3406 = vsel %vm1885, %v3374, %v2743
        %v3407 = vsel %vm1885, %v3375, %v2745
        %v3408 = vsel %vm1885, %v3376, %v2747
        %v3409 = vsel %vm1885, %v3377, %v2749
        %v3410 = vsel %vm1885, %v3378, %v2751
        %v3411 = vsel %vm1885, %v3379, %v2753
        %v3412 = vsel %vm1885, %v3380, %v2755
        %v3413 = vsel %vm1885, %v3381, %v2757
        %v3414 = vsel %vm1885, %v3382, %v2759
        %v3415 = vsel %vm1885, %v3383, %v2761
        %v3416 = vsel %vm1885, %v3384, %v2763
        %v3417 = vsel %vm1885, %v3385, %v2765
        %v3418 = vsel %vm1885, %v3386, %v2767
        %v3419 = vsel %vm1885, %v3387, %v2769
        %v3420 = vsel %vm1885, %v3388, %v2771
        %v3421 = vsel %vm1885, %v3389, %v2773
        %v3422 = vsel %vm1885, %v3390, %v2775
        %v3423 = vsel %vm1885, %v3391, %v2777
        %v3424 = vsel %vm1885, %v3392, %v2779
        %v3425 = vsel %vm1885, %v3393, %v2781
        %v3426 = vsel %vm1885, %v3394, %v2783
        %v3427 = vsel %vm1885, %v3395, %v2785
        %v3428 = vsel %vm1885, %v3396, %v2787
        %v3429 = vsel %vm1885, %v3397, %v2789
        %v3430 = vsel %vm1885, %v3398, %v2791
        %v3431 = vsel %vm1885, %v3399, %v2793
        %v3432 = vsel %vm1885, %v3400, %v2795
        %v3433 = vsel %vm1885, %v3401, %v2797
        %v3434 = vsel %vm1885, %v3402, %v2799
        %v3435 = vsel %vm1885, %v3403, %v2801
        %v3436 = vsel %vm1885, %v3404, %v2803
        %vm3437 = vcmask 261120
        %v3438 = vsel %vm3437, %v3405, %v2843
        %v3439 = vsel %vm3437, %v3406, %v2845
        %v3440 = vsel %vm3437, %v3407, %v2847
        %v3441 = vsel %vm3437, %v3408, %v2849
        %v3442 = vsel %vm3437, %v3409, %v2851
        %v3443 = vsel %vm3437, %v3410, %v2853
        %v3444 = vsel %vm3437, %v3411, %v2855
        %v3445 = vsel %vm3437, %v3412, %v2857
        %v3446 = vsel %vm3437, %v3413, %v2859
        %v3447 = vsel %vm3437, %v3414, %v2861
        %v3448 = vsel %vm3437, %v3415, %v2863
        %v3449 = vsel %vm3437, %v3416, %v2865
        %v3450 = vsel %vm3437, %v3417, %v2867
        %v3451 = vsel %vm3437, %v3418, %v2869
        %v3452 = vsel %vm3437, %v3419, %v2871
        %v3453 = vsel %vm3437, %v3420, %v2873
        %v3454 = vsel %vm3437, %v3421, %v2875
        %v3455 = vsel %vm3437, %v3422, %v2877
        %v3456 = vsel %vm3437, %v3423, %v2879
        %v3457 = vsel %vm3437, %v3424, %v2881
        %v3458 = vsel %vm3437, %v3425, %v2883
        %v3459 = vsel %vm3437, %v3426, %v2885
        %v3460 = vsel %vm3437, %v3427, %v2887
        %v3461 = vsel %vm3437, %v3428, %v2889
        %v3462 = vsel %vm3437, %v3429, %v2891
        %v3463 = vsel %vm3437, %v3430, %v2893
        %v3464 = vsel %vm3437, %v3431, %v2895
        %v3465 = vsel %vm3437, %v3432, %v2897
        %v3466 = vsel %vm3437, %v3433, %v2899
        %v3467 = vsel %vm3437, %v3434, %v2901
        %v3468 = vsel %vm3437, %v3435, %v2903
        %v3469 = vsel %vm3437, %v3436, %v2905
        %vm3470 = vcmask 326656
        %v3471 = vsel %vm3470, %v3438, %v2944
        %v3472 = vsel %vm3470, %v3439, %v2946
        %v3473 = vsel %vm3470, %v3440, %v2948
        %v3474 = vsel %vm3470, %v3441, %v2950
        %v3475 = vsel %vm3470, %v3442, %v2952
        %v3476 = vsel %vm3470, %v3443, %v2954
        %v3477 = vsel %vm3470, %v3444, %v2956
        %v3478 = vsel %vm3470, %v3445, %v2958
        %v3479 = vsel %vm3470, %v3446, %v2960
        %v3480 = vsel %vm3470, %v3447, %v2962
        %v3481 = vsel %vm3470, %v3448, %v2964
        %v3482 = vsel %vm3470, %v3449, %v2966
        %v3483 = vsel %vm3470, %v3450, %v2968
        %v3484 = vsel %vm3470, %v3451, %v2970
        %v3485 = vsel %vm3470, %v3452, %v2972
        %v3486 = vsel %vm3470, %v3453, %v2974
        %v3487 = vsel %vm3470, %v3454, %v2976
        %v3488 = vsel %vm3470, %v3455, %v2978
        %v3489 = vsel %vm3470, %v3456, %v2980
        %v3490 = vsel %vm3470, %v3457, %v2982
        %v3491 = vsel %vm3470, %v3458, %v2984
        %v3492 = vsel %vm3470, %v3459, %v2986
        %v3493 = vsel %vm3470, %v3460, %v2988
        %v3494 = vsel %vm3470, %v3461, %v2990
        %v3495 = vsel %vm3470, %v3462, %v2992
        %v3496 = vsel %vm3470, %v3463, %v2994
        %v3497 = vsel %vm3470, %v3464, %v2996
        %v3498 = vsel %vm3470, %v3465, %v2998
        %v3499 = vsel %vm3470, %v3466, %v3000
        %v3500 = vsel %vm3470, %v3467, %v3002
        %v3501 = vsel %vm3470, %v3468, %v3004
        %v3502 = vsel %vm3470, %v3469, %v3006
        %vm3503 = vcmask 392192
        %v3504 = vsel %vm3503, %v3471, %v3042
        %v3505 = vsel %vm3503, %v3472, %v3044
        %v3506 = vsel %vm3503, %v3473, %v3046
        %v3507 = vsel %vm3503, %v3474, %v3048
        %v3508 = vsel %vm3503, %v3475, %v3050
        %v3509 = vsel %vm3503, %v3476, %v3052
        %v3510 = vsel %vm3503, %v3477, %v3054
        %v3511 = vsel %vm3503, %v3478, %v3056
        %v3512 = vsel %vm3503, %v3479, %v3058
        %v3513 = vsel %vm3503, %v3480, %v3060
        %v3514 = vsel %vm3503, %v3481, %v3062
        %v3515 = vsel %vm3503, %v3482, %v3064
        %v3516 = vsel %vm3503, %v3483, %v3066
        %v3517 = vsel %vm3503, %v3484, %v3068
        %v3518 = vsel %vm3503, %v3485, %v3070
        %v3519 = vsel %vm3503, %v3486, %v3072
        %v3520 = vsel %vm3503, %v3487, %v3074
        %v3521 = vsel %vm3503, %v3488, %v3076
        %v3522 = vsel %vm3503, %v3489, %v3078
        %v3523 = vsel %vm3503, %v3490, %v3080
        %v3524 = vsel %vm3503, %v3491, %v3082
        %v3525 = vsel %vm3503, %v3492, %v3084
        %v3526 = vsel %vm3503, %v3493, %v3086
        %v3527 = vsel %vm3503, %v3494, %v3088
        %v3528 = vsel %vm3503, %v3495, %v3090
        %v3529 = vsel %vm3503, %v3496, %v3092
        %v3530 = vsel %vm3503, %v3497, %v3094
        %v3531 = vsel %vm3503, %v3498, %v3096
        %v3532 = vsel %vm3503, %v3499, %v3098
        %v3533 = vsel %vm3503, %v3500, %v3100
        %v3534 = vsel %vm3503, %v3501, %v3102
        %v3535 = vsel %vm3503, %v3502, %v3104
        %vm3536 = vcmask 457728
        %v3537 = vsel %vm3536, %v3504, %v3144
        %v3538 = vsel %vm3536, %v3505, %v3146
        %v3539 = vsel %vm3536, %v3506, %v3148
        %v3540 = vsel %vm3536, %v3507, %v3150
        %v3541 = vsel %vm3536, %v3508, %v3152
        %v3542 = vsel %vm3536, %v3509, %v3154
        %v3543 = vsel %vm3536, %v3510, %v3156
        %v3544 = vsel %vm3536, %v3511, %v3158
        %v3545 = vsel %vm3536, %v3512, %v3160
        %v3546 = vsel %vm3536, %v3513, %v3162
        %v3547 = vsel %vm3536, %v3514, %v3164
        %v3548 = vsel %vm3536, %v3515, %v3166
        %v3549 = vsel %vm3536, %v3516, %v3168
        %v3550 = vsel %vm3536, %v3517, %v3170
        %v3551 = vsel %vm3536, %v3518, %v3172
        %v3552 = vsel %vm3536, %v3519, %v3174
        %v3553 = vsel %vm3536, %v3520, %v3176
        %v3554 = vsel %vm3536, %v3521, %v3178
        %v3555 = vsel %vm3536, %v3522, %v3180
        %v3556 = vsel %vm3536, %v3523, %v3182
        %v3557 = vsel %vm3536, %v3524, %v3184
        %v3558 = vsel %vm3536, %v3525, %v3186
        %v3559 = vsel %vm3536, %v3526, %v3188
        %v3560 = vsel %vm3536, %v3527, %v3190
        %v3561 = vsel %vm3536, %v3528, %v3192
        %v3562 = vsel %vm3536, %v3529, %v3194
        %v3563 = vsel %vm3536, %v3530, %v3196
        %v3564 = vsel %vm3536, %v3531, %v3198
        %v3565 = vsel %vm3536, %v3532, %v3200
        %v3566 = vsel %vm3536, %v3533, %v3202
        %v3567 = vsel %vm3536, %v3534, %v3204
        %v3568 = vsel %vm3536, %v3535, %v3206
        %vm3569 = vcmask 523264
        %v3570 = vsel %vm3569, %v3537, %v3245
        %v3571 = vsel %vm3569, %v3538, %v3247
        %v3572 = vsel %vm3569, %v3539, %v3249
        %v3573 = vsel %vm3569, %v3540, %v3251
        %v3574 = vsel %vm3569, %v3541, %v3253
        %v3575 = vsel %vm3569, %v3542, %v3255
        %v3576 = vsel %vm3569, %v3543, %v3257
        %v3577 = vsel %vm3569, %v3544, %v3259
        %v3578 = vsel %vm3569, %v3545, %v3261
        %v3579 = vsel %vm3569, %v3546, %v3263
        %v3580 = vsel %vm3569, %v3547, %v3265
        %v3581 = vsel %vm3569, %v3548, %v3267
        %v3582 = vsel %vm3569, %v3549, %v3269
        %v3583 = vsel %vm3569, %v3550, %v3271
        %v3584 = vsel %vm3569, %v3551, %v3273
        %v3585 = vsel %vm3569, %v3552, %v3275
        %v3586 = vsel %vm3569, %v3553, %v3277
        %v3587 = vsel %vm3569, %v3554, %v3279
        %v3588 = vsel %vm3569, %v3555, %v3281
        %v3589 = vsel %vm3569, %v3556, %v3283
        %v3590 = vsel %vm3569, %v3557, %v3285
        %v3591 = vsel %vm3569, %v3558, %v3287
        %v3592 = vsel %vm3569, %v3559, %v3289
        %v3593 = vsel %vm3569, %v3560, %v3291
        %v3594 = vsel %vm3569, %v3561, %v3293
        %v3595 = vsel %vm3569, %v3562, %v3295
        %v3596 = vsel %vm3569, %v3563, %v3297
        %v3597 = vsel %vm3569, %v3564, %v3299
        %v3598 = vsel %vm3569, %v3565, %v3301
        %v3599 = vsel %vm3569, %v3566, %v3303
        %v3600 = vsel %vm3569, %v3567, %v3305
        %v3601 = vsel %vm3569, %v3568, %v3307
        %v3602 = vpack.c.bf16 %v3571, %v3570
        %v3603 = vpack.c.bf16 %v3573, %v3572
        %v3604 = vpack.c.bf16 %v3575, %v3574
        %v3605 = vpack.c.bf16 %v3577, %v3576
        %v3606 = vpack.c.bf16 %v3579, %v3578
        %v3607 = vpack.c.bf16 %v3581, %v3580
        %v3608 = vpack.c.bf16 %v3583, %v3582
        %v3609 = vpack.c.bf16 %v3585, %v3584
        %v3610 = vpack.c.bf16 %v3587, %v3586
        %v3611 = vpack.c.bf16 %v3589, %v3588
        %v3612 = vpack.c.bf16 %v3591, %v3590
        %v3613 = vpack.c.bf16 %v3593, %v3592
        %v3614 = vpack.c.bf16 %v3595, %v3594
        %v3615 = vpack.c.bf16 %v3597, %v3596
        %v3616 = vpack.c.bf16 %v3599, %v3598
        %v3617 = vpack.c.bf16 %v3601, %v3600
        %v3618 = vld [vmem:[%s5] sm:$0xf]
        %v3619 = vld [vmem:[%s5 + $0x4] sm:$0xf]
        %v3620 = vld [vmem:[%s5 + $0x8] sm:$0xf]
        %v3621 = vld [vmem:[%s5 + $0xc] sm:$0xf]
        %v3622 = vld [vmem:[%s5 + $0x10] sm:$0xf]
        %v3623 = vld [vmem:[%s5 + $0x14] sm:$0xf]
        %v3624 = vld [vmem:[%s5 + $0x18] sm:$0xf]
        %v3625 = vld [vmem:[%s5 + $0x1c] sm:$0xf]
        %v3626 = vld [vmem:[%s5 + $0x20] sm:$0xf]
        %v3627 = vld [vmem:[%s6] sm:$0x1]
        %v3629 = vperm.slane %v3627, 0
        %v3640 = vunpack.c.l.b16 %v3618
        %v3641 = vunpack.c.l.b16 %v3619
        %v3642 = vunpack.c.l.b16 %v3620
        %v3643 = vunpack.c.l.b16 %v3621
        %v3644 = vunpack.c.l.b16 %v3622
        %v3645 = vunpack.c.l.b16 %v3623
        %v3646 = vunpack.c.l.b16 %v3624
        %v3647 = vunpack.c.l.b16 %v3625
        %v3648 = vunpack.c.l.b16 %v3626
        %v3649 = vpack.c.b16 %v3641, %v3640
        %v3650 = vpack.c.b16 %v3643, %v3642
        %v3651 = vpack.c.b16 %v3645, %v3644
        %v3652 = vpack.c.b16 %v3647, %v3646
        %v3653 = vpack.c.b16 %v3648, %v3648
        %vm3658 = vcmask 588800
        %v3660 = vsel %vm3658, %v3602, 0
        %v3663 = vsel %vm3658, %v3603, 0
        %v3666 = vsel %vm3658, %v3604, 0
        %v3669 = vsel %vm3658, %v3605, 0
        %v3672 = vsel %vm3658, %v3606, 0
        %v3675 = vsel %vm3658, %v3607, 0
        %v3678 = vsel %vm3658, %v3608, 0
        %v3681 = vsel %vm3658, %v3609, 0
        %v3684 = vsel %vm3658, %v3610, 0
        %v3687 = vsel %vm3658, %v3611, 0
        %v3690 = vsel %vm3658, %v3612, 0
        %v3693 = vsel %vm3658, %v3613, 0
        %v3696 = vsel %vm3658, %v3614, 0
        %v3699 = vsel %vm3658, %v3615, 0
        %v3702 = vsel %vm3658, %v3616, 0
        %v3705 = vsel %vm3658, %v3617, 0
        %vm3707 = vcmask 1043456
        %v3709 = vsel %vm3707, %v3653, 0
        %3711 = vmatpush.bf16.msra.mxu0 0
        %3712 = vmatpush.bf16.msra.mxu0 0
        %3713 = vmatpush.bf16.msra.mxu0 0
        %3714 = vmatpush.bf16.msra.mxu0 %v3709
        %3715 = vmatpush.bf16.msra.mxu0 %v3652
        %3716 = vmatpush.bf16.msra.mxu0 %v3651
        %3717 = vmatpush.bf16.msra.mxu0 %v3650
        %3718 = vmatpush.bf16.msra.mxu0 %v3649
        %3719 = vmatmul.bf16.gmra.mxu0 %v3660
        %v3720 = vpop.f32.mrf.mxu0
        %v3721 = vadd.f32 %v3629, %v3720
        %v3722 = vpop.f32.mrf.mxu0
        %v3723 = vadd.f32 %v3629, %v3722
        %3724 = vmatmul.bf16.gmra.mxu0 %v3663
        %v3725 = vpop.f32.mrf.mxu0
        %v3726 = vadd.f32 %v3629, %v3725
        %v3727 = vpop.f32.mrf.mxu0
        %v3728 = vadd.f32 %v3629, %v3727
        %3729 = vmatmul.bf16.gmra.mxu0 %v3666
        %v3730 = vpop.f32.mrf.mxu0
        %v3731 = vadd.f32 %v3629, %v3730
        %v3732 = vpop.f32.mrf.mxu0
        %v3733 = vadd.f32 %v3629, %v3732
        %3734 = vmatmul.bf16.gmra.mxu0 %v3669
        %v3735 = vpop.f32.mrf.mxu0
        %v3736 = vadd.f32 %v3629, %v3735
        %v3737 = vpop.f32.mrf.mxu0
        %v3738 = vadd.f32 %v3629, %v3737
        %3739 = vmatmul.bf16.gmra.mxu0 %v3672
        %v3740 = vpop.f32.mrf.mxu0
        %v3741 = vadd.f32 %v3629, %v3740
        %v3742 = vpop.f32.mrf.mxu0
        %v3743 = vadd.f32 %v3629, %v3742
        %3744 = vmatmul.bf16.gmra.mxu0 %v3675
        %v3745 = vpop.f32.mrf.mxu0
        %v3746 = vadd.f32 %v3629, %v3745
        %v3747 = vpop.f32.mrf.mxu0
        %v3748 = vadd.f32 %v3629, %v3747
        %3749 = vmatmul.bf16.gmra.mxu0 %v3678
        %v3750 = vpop.f32.mrf.mxu0
        %v3751 = vadd.f32 %v3629, %v3750
        %v3752 = vpop.f32.mrf.mxu0
        %v3753 = vadd.f32 %v3629, %v3752
        %3754 = vmatmul.bf16.gmra.mxu0 %v3681
        %v3755 = vpop.f32.mrf.mxu0
        %v3756 = vadd.f32 %v3629, %v3755
        %v3757 = vpop.f32.mrf.mxu0
        %v3758 = vadd.f32 %v3629, %v3757
        %3759 = vmatmul.bf16.gmra.mxu0 %v3684
        %v3760 = vpop.f32.mrf.mxu0
        %v3761 = vadd.f32 %v3629, %v3760
        %v3762 = vpop.f32.mrf.mxu0
        %v3763 = vadd.f32 %v3629, %v3762
        %3764 = vmatmul.bf16.gmra.mxu0 %v3687
        %v3765 = vpop.f32.mrf.mxu0
        %v3766 = vadd.f32 %v3629, %v3765
        %v3767 = vpop.f32.mrf.mxu0
        %v3768 = vadd.f32 %v3629, %v3767
        %3769 = vmatmul.bf16.gmra.mxu0 %v3690
        %v3770 = vpop.f32.mrf.mxu0
        %v3771 = vadd.f32 %v3629, %v3770
        %v3772 = vpop.f32.mrf.mxu0
        %v3773 = vadd.f32 %v3629, %v3772
        %3774 = vmatmul.bf16.gmra.mxu0 %v3693
        %v3775 = vpop.f32.mrf.mxu0
        %v3776 = vadd.f32 %v3629, %v3775
        %v3777 = vpop.f32.mrf.mxu0
        %v3778 = vadd.f32 %v3629, %v3777
        %3779 = vmatmul.bf16.gmra.mxu0 %v3696
        %v3780 = vpop.f32.mrf.mxu0
        %v3781 = vadd.f32 %v3629, %v3780
        %v3782 = vpop.f32.mrf.mxu0
        %v3783 = vadd.f32 %v3629, %v3782
        %3784 = vmatmul.bf16.gmra.mxu0 %v3699
        %v3785 = vpop.f32.mrf.mxu0
        %v3786 = vadd.f32 %v3629, %v3785
        %v3787 = vpop.f32.mrf.mxu0
        %v3788 = vadd.f32 %v3629, %v3787
        %3789 = vmatmul.bf16.gmra.mxu0 %v3702
        %v3790 = vpop.f32.mrf.mxu0
        %v3791 = vadd.f32 %v3629, %v3790
        %v3792 = vpop.f32.mrf.mxu0
        %v3793 = vadd.f32 %v3629, %v3792
        %3794 = vmatmul.bf16.gmra.mxu0 %v3705
        %v3795 = vpop.f32.mrf.mxu0
        %v3796 = vadd.f32 %v3629, %v3795
        %v3797 = vpop.f32.mrf.mxu0
        %v3798 = vadd.f32 %v3629, %v3797
        %3799 = vdwg.mxu0
        %3800 = vxpose.xlu0.b32.start [1/16] %v3721, 128
        %3801 = vxpose.xlu0.b32.cont [2/16] %v3723, 128
        %3802 = vxpose.xlu0.b32.cont [3/16] %v3726, 128
        %3803 = vxpose.xlu0.b32.cont [4/16] %v3728, 128
        %3804 = vxpose.xlu0.b32.cont [5/16] %v3731, 128
        %3805 = vxpose.xlu0.b32.cont [6/16] %v3733, 128
        %3806 = vxpose.xlu0.b32.cont [7/16] %v3736, 128
        %3807 = vxpose.xlu0.b32.cont [8/16] %v3738, 128
        %3808 = vxpose.xlu0.b32.cont [9/16] %v3741, 128
        %3809 = vxpose.xlu0.b32.cont [10/16] %v3743, 128
        %3810 = vxpose.xlu0.b32.cont [11/16] %v3746, 128
        %3811 = vxpose.xlu0.b32.cont [12/16] %v3748, 128
        %3812 = vxpose.xlu0.b32.cont [13/16] %v3751, 128
        %3813 = vxpose.xlu0.b32.cont [14/16] %v3753, 128
        %3814 = vxpose.xlu0.b32.cont [15/16] %v3756, 128
        %3815 = vxpose.xlu0.b32.end [16/16] %v3758, 128
        %v3816 = vpop.trf.xlu0
        %v3817 = vpop.trf.xlu0
        %v3818 = vpop.trf.xlu0
        %v3819 = vpop.trf.xlu0
        %v3820 = vpop.trf.xlu0
        %v3821 = vpop.trf.xlu0
        %v3822 = vpop.trf.xlu0
        %v3823 = vpop.trf.xlu0
        %v3824 = vpop.trf.xlu0
        %v3825 = vpop.trf.xlu0
        %v3826 = vpop.trf.xlu0
        %v3827 = vpop.trf.xlu0
        %v3828 = vpop.trf.xlu0
        %v3829 = vpop.trf.xlu0
        %v3830 = vpop.trf.xlu0
        %v3831 = vpop.trf.xlu0
        %3832 = vxpose.xlu0.b32.start [1/16] %v3761, 128
        %3833 = vxpose.xlu0.b32.cont [2/16] %v3763, 128
        %3834 = vxpose.xlu0.b32.cont [3/16] %v3766, 128
        %3835 = vxpose.xlu0.b32.cont [4/16] %v3768, 128
        %3836 = vxpose.xlu0.b32.cont [5/16] %v3771, 128
        %3837 = vxpose.xlu0.b32.cont [6/16] %v3773, 128
        %3838 = vxpose.xlu0.b32.cont [7/16] %v3776, 128
        %3839 = vxpose.xlu0.b32.cont [8/16] %v3778, 128
        %3840 = vxpose.xlu0.b32.cont [9/16] %v3781, 128
        %3841 = vxpose.xlu0.b32.cont [10/16] %v3783, 128
        %3842 = vxpose.xlu0.b32.cont [11/16] %v3786, 128
        %3843 = vxpose.xlu0.b32.cont [12/16] %v3788, 128
        %3844 = vxpose.xlu0.b32.cont [13/16] %v3791, 128
        %3845 = vxpose.xlu0.b32.cont [14/16] %v3793, 128
        %3846 = vxpose.xlu0.b32.cont [15/16] %v3796, 128
        %3847 = vxpose.xlu0.b32.end [16/16] %v3798, 128
        %v3848 = vpop.trf.xlu0
        %v3849 = vpop.trf.xlu0
        %v3850 = vpop.trf.xlu0
        %v3851 = vpop.trf.xlu0
        %v3852 = vpop.trf.xlu0
        %v3853 = vpop.trf.xlu0
        %v3854 = vpop.trf.xlu0
        %v3855 = vpop.trf.xlu0
        %v3856 = vpop.trf.xlu0
        %v3857 = vpop.trf.xlu0
        %v3858 = vpop.trf.xlu0
        %v3859 = vpop.trf.xlu0
        %v3860 = vpop.trf.xlu0
        %v3861 = vpop.trf.xlu0
        %v3862 = vpop.trf.xlu0
        %v3863 = vpop.trf.xlu0
        %3864 = vst [vmem:[%s390] sm:$0xff] %v3816
        %3865 = vst [vmem:[%s390 + $0x8] sm:$0xff] %v3848
        %v3866 = vmax.f32 %v3721, 0.0
        %v3867 = vmax.f32 %v3723, 0.0
        %v3868 = vmax.f32 %v3726, 0.0
        %v3869 = vmax.f32 %v3728, 0.0
        %v3870 = vmax.f32 %v3731, 0.0
        %v3871 = vmax.f32 %v3733, 0.0
        %v3872 = vmax.f32 %v3736, 0.0
        %v3873 = vmax.f32 %v3738, 0.0
        %v3874 = vmax.f32 %v3741, 0.0
        %v3875 = vmax.f32 %v3743, 0.0
        %v3876 = vmax.f32 %v3746, 0.0
        %v3877 = vmax.f32 %v3748, 0.0
        %v3878 = vmax.f32 %v3751, 0.0
        %v3879 = vmax.f32 %v3753, 0.0
        %v3880 = vmax.f32 %v3756, 0.0
        %v3881 = vmax.f32 %v3758, 0.0
        %v3882 = vmax.f32 %v3761, 0.0
        %v3883 = vmax.f32 %v3763, 0.0
        %v3884 = vmax.f32 %v3766, 0.0
        %v3885 = vmax.f32 %v3768, 0.0
        %v3886 = vmax.f32 %v3771, 0.0
        %v3887 = vmax.f32 %v3773, 0.0
        %v3888 = vmax.f32 %v3776, 0.0
        %v3889 = vmax.f32 %v3778, 0.0
        %v3890 = vmax.f32 %v3781, 0.0
        %v3891 = vmax.f32 %v3783, 0.0
        %v3892 = vmax.f32 %v3786, 0.0
        %v3893 = vmax.f32 %v3788, 0.0
        %v3894 = vmax.f32 %v3791, 0.0
        %v3895 = vmax.f32 %v3793, 0.0
        %v3896 = vmax.f32 %v3796, 0.0
        %v3897 = vmax.f32 %v3798, 0.0
        %v3930 = vrot.slane %v3866, 2
        %v3931 = vrot.slane %v3866, 4
        %v3932 = vrot.slane %v3866, 6
        %v3933 = vrot.slane %v3867, 2
        %v3934 = vrot.slane %v3867, 4
        %v3935 = vrot.slane %v3867, 6
        %v3936 = vrot.slane %v3868, 2
        %v3937 = vrot.slane %v3868, 4
        %v3938 = vrot.slane %v3868, 6
        %v3939 = vrot.slane %v3869, 2
        %v3940 = vrot.slane %v3869, 4
        %v3941 = vrot.slane %v3869, 6
        %v3942 = vrot.slane %v3870, 2
        %v3943 = vrot.slane %v3870, 4
        %v3944 = vrot.slane %v3870, 6
        %v3945 = vrot.slane %v3871, 2
        %v3946 = vrot.slane %v3871, 4
        %v3947 = vrot.slane %v3871, 6
        %v3948 = vrot.slane %v3872, 2
        %v3949 = vrot.slane %v3872, 4
        %v3950 = vrot.slane %v3872, 6
        %v3951 = vrot.slane %v3873, 2
        %v3952 = vrot.slane %v3873, 4
        %v3953 = vrot.slane %v3873, 6
        %v3954 = vrot.slane %v3874, 2
        %v3955 = vrot.slane %v3874, 4
        %v3956 = vrot.slane %v3874, 6
        %v3957 = vrot.slane %v3875, 2
        %v3958 = vrot.slane %v3875, 4
        %v3959 = vrot.slane %v3875, 6
        %v3960 = vrot.slane %v3876, 2
        %v3961 = vrot.slane %v3876, 4
        %v3962 = vrot.slane %v3876, 6
        %v3963 = vrot.slane %v3877, 2
        %v3964 = vrot.slane %v3877, 4
        %v3965 = vrot.slane %v3877, 6
        %v3966 = vrot.slane %v3878, 2
        %v3967 = vrot.slane %v3878, 4
        %v3968 = vrot.slane %v3878, 6
        %v3969 = vrot.slane %v3879, 2
        %v3970 = vrot.slane %v3879, 4
        %v3971 = vrot.slane %v3879, 6
        %v3972 = vrot.slane %v3880, 2
        %v3973 = vrot.slane %v3880, 4
        %v3974 = vrot.slane %v3880, 6
        %v3975 = vrot.slane %v3881, 2
        %v3976 = vrot.slane %v3881, 4
        %v3977 = vrot.slane %v3881, 6
        %v3978 = vrot.slane %v3882, 2
        %v3979 = vrot.slane %v3882, 4
        %v3980 = vrot.slane %v3882, 6
        %v3981 = vrot.slane %v3883, 2
        %v3982 = vrot.slane %v3883, 4
        %v3983 = vrot.slane %v3883, 6
        %v3984 = vrot.slane %v3884, 2
        %v3985 = vrot.slane %v3884, 4
        %v3986 = vrot.slane %v3884, 6
        %v3987 = vrot.slane %v3885, 2
        %v3988 = vrot.slane %v3885, 4
        %v3989 = vrot.slane %v3885, 6
        %v3990 = vrot.slane %v3886, 2
        %v3991 = vrot.slane %v3886, 4
        %v3992 = vrot.slane %v3886, 6
        %v3993 = vrot.slane %v3887, 2
        %v3994 = vrot.slane %v3887, 4
        %v3995 = vrot.slane %v3887, 6
        %v3996 = vrot.slane %v3888, 2
        %v3997 = vrot.slane %v3888, 4
        %v3998 = vrot.slane %v3888, 6
        %v3999 = vrot.slane %v3889, 2
        %v4000 = vrot.slane %v3889, 4
        %v4001 = vrot.slane %v3889, 6
        %v4002 = vrot.slane %v3890, 2
        %v4003 = vrot.slane %v3890, 4
        %v4004 = vrot.slane %v3890, 6
        %v4005 = vrot.slane %v3891, 2
        %v4006 = vrot.slane %v3891, 4
        %v4007 = vrot.slane %v3891, 6
        %v4008 = vrot.slane %v3892, 2
        %v4009 = vrot.slane %v3892, 4
        %v4010 = vrot.slane %v3892, 6
        %v4011 = vrot.slane %v3893, 2
        %v4012 = vrot.slane %v3893, 4
        %v4013 = vrot.slane %v3893, 6
        %v4014 = vrot.slane %v3894, 2
        %v4015 = vrot.slane %v3894, 4
        %v4016 = vrot.slane %v3894, 6
        %v4017 = vrot.slane %v3895, 2
        %v4018 = vrot.slane %v3895, 4
        %v4019 = vrot.slane %v3895, 6
        %v4020 = vrot.slane %v3896, 2
        %v4021 = vrot.slane %v3896, 4
        %v4022 = vrot.slane %v3896, 6
        %v4023 = vrot.slane %v3897, 2
        %v4024 = vrot.slane %v3897, 4
        %v4025 = vrot.slane %v3897, 6
        %v4122 = vsel %vm2198, %v3866, -inf
        %v4123 = vsel %vm2198, %v3868, -inf
        %v4124 = vmax.f32 %v4122, %v4123
        %v4125 = vrot.slane %v4124, 4
        %v4126 = vmax.f32 %v4124, %v4125
        %v4127 = vrot.slane %v4126, 2
        %v4128 = vmax.f32 %v4126, %v4127
        %v4129 = vrot.slane %v4128, 1
        %v4130 = vmax.f32 %v4128, %v4129
        %v4131 = vsel %vm2198, %v3930, -inf
        %v4132 = vsel %vm2198, %v3936, -inf
        %v4133 = vmax.f32 %v4131, %v4132
        %v4134 = vrot.slane %v4133, 4
        %v4135 = vmax.f32 %v4133, %v4134
        %v4136 = vrot.slane %v4135, 2
        %v4137 = vmax.f32 %v4135, %v4136
        %v4138 = vrot.slane %v4137, 1
        %v4139 = vmax.f32 %v4137, %v4138
        %v4140 = vsel %vm2198, %v3931, -inf
        %v4141 = vsel %vm2198, %v3937, -inf
        %v4142 = vmax.f32 %v4140, %v4141
        %v4143 = vrot.slane %v4142, 4
        %v4144 = vmax.f32 %v4142, %v4143
        %v4145 = vrot.slane %v4144, 2
        %v4146 = vmax.f32 %v4144, %v4145
        %v4147 = vrot.slane %v4146, 1
        %v4148 = vmax.f32 %v4146, %v4147
        %v4149 = vsel %vm2198, %v3932, -inf
        %v4150 = vsel %vm2198, %v3938, -inf
        %v4151 = vmax.f32 %v4149, %v4150
        %v4152 = vrot.slane %v4151, 4
        %v4153 = vmax.f32 %v4151, %v4152
        %v4154 = vrot.slane %v4153, 2
        %v4155 = vmax.f32 %v4153, %v4154
        %v4156 = vrot.slane %v4155, 1
        %v4157 = vmax.f32 %v4155, %v4156
        %v4158 = vsel %vm2198, %v3867, -inf
        %v4159 = vsel %vm2198, %v3869, -inf
        %v4160 = vmax.f32 %v4158, %v4159
        %v4161 = vrot.slane %v4160, 4
        %v4162 = vmax.f32 %v4160, %v4161
        %v4163 = vrot.slane %v4162, 2
        %v4164 = vmax.f32 %v4162, %v4163
        %v4165 = vrot.slane %v4164, 1
        %v4166 = vmax.f32 %v4164, %v4165
        %v4167 = vsel %vm2198, %v3933, -inf
        %v4168 = vsel %vm2198, %v3939, -inf
        %v4169 = vmax.f32 %v4167, %v4168
        %v4170 = vrot.slane %v4169, 4
        %v4171 = vmax.f32 %v4169, %v4170
        %v4172 = vrot.slane %v4171, 2
        %v4173 = vmax.f32 %v4171, %v4172
        %v4174 = vrot.slane %v4173, 1
        %v4175 = vmax.f32 %v4173, %v4174
        %v4176 = vsel %vm2198, %v3934, -inf
        %v4177 = vsel %vm2198, %v3940, -inf
        %v4178 = vmax.f32 %v4176, %v4177
        %v4179 = vrot.slane %v4178, 4
        %v4180 = vmax.f32 %v4178, %v4179
        %v4181 = vrot.slane %v4180, 2
        %v4182 = vmax.f32 %v4180, %v4181
        %v4183 = vrot.slane %v4182, 1
        %v4184 = vmax.f32 %v4182, %v4183
        %v4185 = vsel %vm2198, %v3935, -inf
        %v4186 = vsel %vm2198, %v3941, -inf
        %v4187 = vmax.f32 %v4185, %v4186
        %v4188 = vrot.slane %v4187, 4
        %v4189 = vmax.f32 %v4187, %v4188
        %v4190 = vrot.slane %v4189, 2
        %v4191 = vmax.f32 %v4189, %v4190
        %v4192 = vrot.slane %v4191, 1
        %v4193 = vmax.f32 %v4191, %v4192
        %v4194 = vsel %vm2198, %v3870, -inf
        %v4195 = vsel %vm2198, %v3872, -inf
        %v4196 = vmax.f32 %v4194, %v4195
        %v4197 = vrot.slane %v4196, 4
        %v4198 = vmax.f32 %v4196, %v4197
        %v4199 = vrot.slane %v4198, 2
        %v4200 = vmax.f32 %v4198, %v4199
        %v4201 = vrot.slane %v4200, 1
        %v4202 = vmax.f32 %v4200, %v4201
        %v4203 = vsel %vm2198, %v3942, -inf
        %v4204 = vsel %vm2198, %v3948, -inf
        %v4205 = vmax.f32 %v4203, %v4204
        %v4206 = vrot.slane %v4205, 4
        %v4207 = vmax.f32 %v4205, %v4206
        %v4208 = vrot.slane %v4207, 2
        %v4209 = vmax.f32 %v4207, %v4208
        %v4210 = vrot.slane %v4209, 1
        %v4211 = vmax.f32 %v4209, %v4210
        %v4212 = vsel %vm2198, %v3943, -inf
        %v4213 = vsel %vm2198, %v3949, -inf
        %v4214 = vmax.f32 %v4212, %v4213
        %v4215 = vrot.slane %v4214, 4
        %v4216 = vmax.f32 %v4214, %v4215
        %v4217 = vrot.slane %v4216, 2
        %v4218 = vmax.f32 %v4216, %v4217
        %v4219 = vrot.slane %v4218, 1
        %v4220 = vmax.f32 %v4218, %v4219
        %v4221 = vsel %vm2198, %v3944, -inf
        %v4222 = vsel %vm2198, %v3950, -inf
        %v4223 = vmax.f32 %v4221, %v4222
        %v4224 = vrot.slane %v4223, 4
        %v4225 = vmax.f32 %v4223, %v4224
        %v4226 = vrot.slane %v4225, 2
        %v4227 = vmax.f32 %v4225, %v4226
        %v4228 = vrot.slane %v4227, 1
        %v4229 = vmax.f32 %v4227, %v4228
        %v4230 = vsel %vm2198, %v3871, -inf
        %v4231 = vsel %vm2198, %v3873, -inf
        %v4232 = vmax.f32 %v4230, %v4231
        %v4233 = vrot.slane %v4232, 4
        %v4234 = vmax.f32 %v4232, %v4233
        %v4235 = vrot.slane %v4234, 2
        %v4236 = vmax.f32 %v4234, %v4235
        %v4237 = vrot.slane %v4236, 1
        %v4238 = vmax.f32 %v4236, %v4237
        %v4239 = vsel %vm2198, %v3945, -inf
        %v4240 = vsel %vm2198, %v3951, -inf
        %v4241 = vmax.f32 %v4239, %v4240
        %v4242 = vrot.slane %v4241, 4
        %v4243 = vmax.f32 %v4241, %v4242
        %v4244 = vrot.slane %v4243, 2
        %v4245 = vmax.f32 %v4243, %v4244
        %v4246 = vrot.slane %v4245, 1
        %v4247 = vmax.f32 %v4245, %v4246
        %v4248 = vsel %vm2198, %v3946, -inf
        %v4249 = vsel %vm2198, %v3952, -inf
        %v4250 = vmax.f32 %v4248, %v4249
        %v4251 = vrot.slane %v4250, 4
        %v4252 = vmax.f32 %v4250, %v4251
        %v4253 = vrot.slane %v4252, 2
        %v4254 = vmax.f32 %v4252, %v4253
        %v4255 = vrot.slane %v4254, 1
        %v4256 = vmax.f32 %v4254, %v4255
        %v4257 = vsel %vm2198, %v3947, -inf
        %v4258 = vsel %vm2198, %v3953, -inf
        %v4259 = vmax.f32 %v4257, %v4258
        %v4260 = vrot.slane %v4259, 4
        %v4261 = vmax.f32 %v4259, %v4260
        %v4262 = vrot.slane %v4261, 2
        %v4263 = vmax.f32 %v4261, %v4262
        %v4264 = vrot.slane %v4263, 1
        %v4265 = vmax.f32 %v4263, %v4264
        %v4266 = vsel %vm2198, %v3874, -inf
        %v4267 = vsel %vm2198, %v3876, -inf
        %v4268 = vmax.f32 %v4266, %v4267
        %v4269 = vrot.slane %v4268, 4
        %v4270 = vmax.f32 %v4268, %v4269
        %v4271 = vrot.slane %v4270, 2
        %v4272 = vmax.f32 %v4270, %v4271
        %v4273 = vrot.slane %v4272, 1
        %v4274 = vmax.f32 %v4272, %v4273
        %v4275 = vsel %vm2198, %v3954, -inf
        %v4276 = vsel %vm2198, %v3960, -inf
        %v4277 = vmax.f32 %v4275, %v4276
        %v4278 = vrot.slane %v4277, 4
        %v4279 = vmax.f32 %v4277, %v4278
        %v4280 = vrot.slane %v4279, 2
        %v4281 = vmax.f32 %v4279, %v4280
        %v4282 = vrot.slane %v4281, 1
        %v4283 = vmax.f32 %v4281, %v4282
        %v4284 = vsel %vm2198, %v3955, -inf
        %v4285 = vsel %vm2198, %v3961, -inf
        %v4286 = vmax.f32 %v4284, %v4285
        %v4287 = vrot.slane %v4286, 4
        %v4288 = vmax.f32 %v4286, %v4287
        %v4289 = vrot.slane %v4288, 2
        %v4290 = vmax.f32 %v4288, %v4289
        %v4291 = vrot.slane %v4290, 1
        %v4292 = vmax.f32 %v4290, %v4291
        %v4293 = vsel %vm2198, %v3956, -inf
        %v4294 = vsel %vm2198, %v3962, -inf
        %v4295 = vmax.f32 %v4293, %v4294
        %v4296 = vrot.slane %v4295, 4
        %v4297 = vmax.f32 %v4295, %v4296
        %v4298 = vrot.slane %v4297, 2
        %v4299 = vmax.f32 %v4297, %v4298
        %v4300 = vrot.slane %v4299, 1
        %v4301 = vmax.f32 %v4299, %v4300
        %v4302 = vsel %vm2198, %v3875, -inf
        %v4303 = vsel %vm2198, %v3877, -inf
        %v4304 = vmax.f32 %v4302, %v4303
        %v4305 = vrot.slane %v4304, 4
        %v4306 = vmax.f32 %v4304, %v4305
        %v4307 = vrot.slane %v4306, 2
        %v4308 = vmax.f32 %v4306, %v4307
        %v4309 = vrot.slane %v4308, 1
        %v4310 = vmax.f32 %v4308, %v4309
        %v4311 = vsel %vm2198, %v3957, -inf
        %v4312 = vsel %vm2198, %v3963, -inf
        %v4313 = vmax.f32 %v4311, %v4312
        %v4314 = vrot.slane %v4313, 4
        %v4315 = vmax.f32 %v4313, %v4314
        %v4316 = vrot.slane %v4315, 2
        %v4317 = vmax.f32 %v4315, %v4316
        %v4318 = vrot.slane %v4317, 1
        %v4319 = vmax.f32 %v4317, %v4318
        %v4320 = vsel %vm2198, %v3958, -inf
        %v4321 = vsel %vm2198, %v3964, -inf
        %v4322 = vmax.f32 %v4320, %v4321
        %v4323 = vrot.slane %v4322, 4
        %v4324 = vmax.f32 %v4322, %v4323
        %v4325 = vrot.slane %v4324, 2
        %v4326 = vmax.f32 %v4324, %v4325
        %v4327 = vrot.slane %v4326, 1
        %v4328 = vmax.f32 %v4326, %v4327
        %v4329 = vsel %vm2198, %v3959, -inf
        %v4330 = vsel %vm2198, %v3965, -inf
        %v4331 = vmax.f32 %v4329, %v4330
        %v4332 = vrot.slane %v4331, 4
        %v4333 = vmax.f32 %v4331, %v4332
        %v4334 = vrot.slane %v4333, 2
        %v4335 = vmax.f32 %v4333, %v4334
        %v4336 = vrot.slane %v4335, 1
        %v4337 = vmax.f32 %v4335, %v4336
        %v4338 = vsel %vm2198, %v3878, -inf
        %v4339 = vsel %vm2198, %v3880, -inf
        %v4340 = vmax.f32 %v4338, %v4339
        %v4341 = vrot.slane %v4340, 4
        %v4342 = vmax.f32 %v4340, %v4341
        %v4343 = vrot.slane %v4342, 2
        %v4344 = vmax.f32 %v4342, %v4343
        %v4345 = vrot.slane %v4344, 1
        %v4346 = vmax.f32 %v4344, %v4345
        %v4347 = vsel %vm2198, %v3966, -inf
        %v4348 = vsel %vm2198, %v3972, -inf
        %v4349 = vmax.f32 %v4347, %v4348
        %v4350 = vrot.slane %v4349, 4
        %v4351 = vmax.f32 %v4349, %v4350
        %v4352 = vrot.slane %v4351, 2
        %v4353 = vmax.f32 %v4351, %v4352
        %v4354 = vrot.slane %v4353, 1
        %v4355 = vmax.f32 %v4353, %v4354
        %v4356 = vsel %vm2198, %v3967, -inf
        %v4357 = vsel %vm2198, %v3973, -inf
        %v4358 = vmax.f32 %v4356, %v4357
        %v4359 = vrot.slane %v4358, 4
        %v4360 = vmax.f32 %v4358, %v4359
        %v4361 = vrot.slane %v4360, 2
        %v4362 = vmax.f32 %v4360, %v4361
        %v4363 = vrot.slane %v4362, 1
        %v4364 = vmax.f32 %v4362, %v4363
        %v4365 = vsel %vm2198, %v3968, -inf
        %v4366 = vsel %vm2198, %v3974, -inf
        %v4367 = vmax.f32 %v4365, %v4366
        %v4368 = vrot.slane %v4367, 4
        %v4369 = vmax.f32 %v4367, %v4368
        %v4370 = vrot.slane %v4369, 2
        %v4371 = vmax.f32 %v4369, %v4370
        %v4372 = vrot.slane %v4371, 1
        %v4373 = vmax.f32 %v4371, %v4372
        %v4374 = vsel %vm2198, %v3879, -inf
        %v4375 = vsel %vm2198, %v3881, -inf
        %v4376 = vmax.f32 %v4374, %v4375
        %v4377 = vrot.slane %v4376, 4
        %v4378 = vmax.f32 %v4376, %v4377
        %v4379 = vrot.slane %v4378, 2
        %v4380 = vmax.f32 %v4378, %v4379
        %v4381 = vrot.slane %v4380, 1
        %v4382 = vmax.f32 %v4380, %v4381
        %v4383 = vsel %vm2198, %v3969, -inf
        %v4384 = vsel %vm2198, %v3975, -inf
        %v4385 = vmax.f32 %v4383, %v4384
        %v4386 = vrot.slane %v4385, 4
        %v4387 = vmax.f32 %v4385, %v4386
        %v4388 = vrot.slane %v4387, 2
        %v4389 = vmax.f32 %v4387, %v4388
        %v4390 = vrot.slane %v4389, 1
        %v4391 = vmax.f32 %v4389, %v4390
        %v4392 = vsel %vm2198, %v3970, -inf
        %v4393 = vsel %vm2198, %v3976, -inf
        %v4394 = vmax.f32 %v4392, %v4393
        %v4395 = vrot.slane %v4394, 4
        %v4396 = vmax.f32 %v4394, %v4395
        %v4397 = vrot.slane %v4396, 2
        %v4398 = vmax.f32 %v4396, %v4397
        %v4399 = vrot.slane %v4398, 1
        %v4400 = vmax.f32 %v4398, %v4399
        %v4401 = vsel %vm2198, %v3971, -inf
        %v4402 = vsel %vm2198, %v3977, -inf
        %v4403 = vmax.f32 %v4401, %v4402
        %v4404 = vrot.slane %v4403, 4
        %v4405 = vmax.f32 %v4403, %v4404
        %v4406 = vrot.slane %v4405, 2
        %v4407 = vmax.f32 %v4405, %v4406
        %v4408 = vrot.slane %v4407, 1
        %v4409 = vmax.f32 %v4407, %v4408
        %v4410 = vsel %vm2198, %v3882, -inf
        %v4411 = vsel %vm2198, %v3884, -inf
        %v4412 = vmax.f32 %v4410, %v4411
        %v4413 = vrot.slane %v4412, 4
        %v4414 = vmax.f32 %v4412, %v4413
        %v4415 = vrot.slane %v4414, 2
        %v4416 = vmax.f32 %v4414, %v4415
        %v4417 = vrot.slane %v4416, 1
        %v4418 = vmax.f32 %v4416, %v4417
        %v4419 = vsel %vm2198, %v3978, -inf
        %v4420 = vsel %vm2198, %v3984, -inf
        %v4421 = vmax.f32 %v4419, %v4420
        %v4422 = vrot.slane %v4421, 4
        %v4423 = vmax.f32 %v4421, %v4422
        %v4424 = vrot.slane %v4423, 2
        %v4425 = vmax.f32 %v4423, %v4424
        %v4426 = vrot.slane %v4425, 1
        %v4427 = vmax.f32 %v4425, %v4426
        %v4428 = vsel %vm2198, %v3979, -inf
        %v4429 = vsel %vm2198, %v3985, -inf
        %v4430 = vmax.f32 %v4428, %v4429
        %v4431 = vrot.slane %v4430, 4
        %v4432 = vmax.f32 %v4430, %v4431
        %v4433 = vrot.slane %v4432, 2
        %v4434 = vmax.f32 %v4432, %v4433
        %v4435 = vrot.slane %v4434, 1
        %v4436 = vmax.f32 %v4434, %v4435
        %v4437 = vsel %vm2198, %v3980, -inf
        %v4438 = vsel %vm2198, %v3986, -inf
        %v4439 = vmax.f32 %v4437, %v4438
        %v4440 = vrot.slane %v4439, 4
        %v4441 = vmax.f32 %v4439, %v4440
        %v4442 = vrot.slane %v4441, 2
        %v4443 = vmax.f32 %v4441, %v4442
        %v4444 = vrot.slane %v4443, 1
        %v4445 = vmax.f32 %v4443, %v4444
        %v4446 = vsel %vm2198, %v3883, -inf
        %v4447 = vsel %vm2198, %v3885, -inf
        %v4448 = vmax.f32 %v4446, %v4447
        %v4449 = vrot.slane %v4448, 4
        %v4450 = vmax.f32 %v4448, %v4449
        %v4451 = vrot.slane %v4450, 2
        %v4452 = vmax.f32 %v4450, %v4451
        %v4453 = vrot.slane %v4452, 1
        %v4454 = vmax.f32 %v4452, %v4453
        %v4455 = vsel %vm2198, %v3981, -inf
        %v4456 = vsel %vm2198, %v3987, -inf
        %v4457 = vmax.f32 %v4455, %v4456
        %v4458 = vrot.slane %v4457, 4
        %v4459 = vmax.f32 %v4457, %v4458
        %v4460 = vrot.slane %v4459, 2
        %v4461 = vmax.f32 %v4459, %v4460
        %v4462 = vrot.slane %v4461, 1
        %v4463 = vmax.f32 %v4461, %v4462
        %v4464 = vsel %vm2198, %v3982, -inf
        %v4465 = vsel %vm2198, %v3988, -inf
        %v4466 = vmax.f32 %v4464, %v4465
        %v4467 = vrot.slane %v4466, 4
        %v4468 = vmax.f32 %v4466, %v4467
        %v4469 = vrot.slane %v4468, 2
        %v4470 = vmax.f32 %v4468, %v4469
        %v4471 = vrot.slane %v4470, 1
        %v4472 = vmax.f32 %v4470, %v4471
        %v4473 = vsel %vm2198, %v3983, -inf
        %v4474 = vsel %vm2198, %v3989, -inf
        %v4475 = vmax.f32 %v4473, %v4474
        %v4476 = vrot.slane %v4475, 4
        %v4477 = vmax.f32 %v4475, %v4476
        %v4478 = vrot.slane %v4477, 2
        %v4479 = vmax.f32 %v4477, %v4478
        %v4480 = vrot.slane %v4479, 1
        %v4481 = vmax.f32 %v4479, %v4480
        %v4482 = vsel %vm2198, %v3886, -inf
        %v4483 = vsel %vm2198, %v3888, -inf
        %v4484 = vmax.f32 %v4482, %v4483
        %v4485 = vrot.slane %v4484, 4
        %v4486 = vmax.f32 %v4484, %v4485
        %v4487 = vrot.slane %v4486, 2
        %v4488 = vmax.f32 %v4486, %v4487
        %v4489 = vrot.slane %v4488, 1
        %v4490 = vmax.f32 %v4488, %v4489
        %v4491 = vsel %vm2198, %v3990, -inf
        %v4492 = vsel %vm2198, %v3996, -inf
        %v4493 = vmax.f32 %v4491, %v4492
        %v4494 = vrot.slane %v4493, 4
        %v4495 = vmax.f32 %v4493, %v4494
        %v4496 = vrot.slane %v4495, 2
        %v4497 = vmax.f32 %v4495, %v4496
        %v4498 = vrot.slane %v4497, 1
        %v4499 = vmax.f32 %v4497, %v4498
        %v4500 = vsel %vm2198, %v3991, -inf
        %v4501 = vsel %vm2198, %v3997, -inf
        %v4502 = vmax.f32 %v4500, %v4501
        %v4503 = vrot.slane %v4502, 4
        %v4504 = vmax.f32 %v4502, %v4503
        %v4505 = vrot.slane %v4504, 2
        %v4506 = vmax.f32 %v4504, %v4505
        %v4507 = vrot.slane %v4506, 1
        %v4508 = vmax.f32 %v4506, %v4507
        %v4509 = vsel %vm2198, %v3992, -inf
        %v4510 = vsel %vm2198, %v3998, -inf
        %v4511 = vmax.f32 %v4509, %v4510
        %v4512 = vrot.slane %v4511, 4
        %v4513 = vmax.f32 %v4511, %v4512
        %v4514 = vrot.slane %v4513, 2
        %v4515 = vmax.f32 %v4513, %v4514
        %v4516 = vrot.slane %v4515, 1
        %v4517 = vmax.f32 %v4515, %v4516
        %v4518 = vsel %vm2198, %v3887, -inf
        %v4519 = vsel %vm2198, %v3889, -inf
        %v4520 = vmax.f32 %v4518, %v4519
        %v4521 = vrot.slane %v4520, 4
        %v4522 = vmax.f32 %v4520, %v4521
        %v4523 = vrot.slane %v4522, 2
        %v4524 = vmax.f32 %v4522, %v4523
        %v4525 = vrot.slane %v4524, 1
        %v4526 = vmax.f32 %v4524, %v4525
        %v4527 = vsel %vm2198, %v3993, -inf
        %v4528 = vsel %vm2198, %v3999, -inf
        %v4529 = vmax.f32 %v4527, %v4528
        %v4530 = vrot.slane %v4529, 4
        %v4531 = vmax.f32 %v4529, %v4530
        %v4532 = vrot.slane %v4531, 2
        %v4533 = vmax.f32 %v4531, %v4532
        %v4534 = vrot.slane %v4533, 1
        %v4535 = vmax.f32 %v4533, %v4534
        %v4536 = vsel %vm2198, %v3994, -inf
        %v4537 = vsel %vm2198, %v4000, -inf
        %v4538 = vmax.f32 %v4536, %v4537
        %v4539 = vrot.slane %v4538, 4
        %v4540 = vmax.f32 %v4538, %v4539
        %v4541 = vrot.slane %v4540, 2
        %v4542 = vmax.f32 %v4540, %v4541
        %v4543 = vrot.slane %v4542, 1
        %v4544 = vmax.f32 %v4542, %v4543
        %v4545 = vsel %vm2198, %v3995, -inf
        %v4546 = vsel %vm2198, %v4001, -inf
        %v4547 = vmax.f32 %v4545, %v4546
        %v4548 = vrot.slane %v4547, 4
        %v4549 = vmax.f32 %v4547, %v4548
        %v4550 = vrot.slane %v4549, 2
        %v4551 = vmax.f32 %v4549, %v4550
        %v4552 = vrot.slane %v4551, 1
        %v4553 = vmax.f32 %v4551, %v4552
        %v4554 = vsel %vm2198, %v3890, -inf
        %v4555 = vsel %vm2198, %v3892, -inf
        %v4556 = vmax.f32 %v4554, %v4555
        %v4557 = vrot.slane %v4556, 4
        %v4558 = vmax.f32 %v4556, %v4557
        %v4559 = vrot.slane %v4558, 2
        %v4560 = vmax.f32 %v4558, %v4559
        %v4561 = vrot.slane %v4560, 1
        %v4562 = vmax.f32 %v4560, %v4561
        %v4563 = vsel %vm2198, %v4002, -inf
        %v4564 = vsel %vm2198, %v4008, -inf
        %v4565 = vmax.f32 %v4563, %v4564
        %v4566 = vrot.slane %v4565, 4
        %v4567 = vmax.f32 %v4565, %v4566
        %v4568 = vrot.slane %v4567, 2
        %v4569 = vmax.f32 %v4567, %v4568
        %v4570 = vrot.slane %v4569, 1
        %v4571 = vmax.f32 %v4569, %v4570
        %v4572 = vsel %vm2198, %v4003, -inf
        %v4573 = vsel %vm2198, %v4009, -inf
        %v4574 = vmax.f32 %v4572, %v4573
        %v4575 = vrot.slane %v4574, 4
        %v4576 = vmax.f32 %v4574, %v4575
        %v4577 = vrot.slane %v4576, 2
        %v4578 = vmax.f32 %v4576, %v4577
        %v4579 = vrot.slane %v4578, 1
        %v4580 = vmax.f32 %v4578, %v4579
        %v4581 = vsel %vm2198, %v4004, -inf
        %v4582 = vsel %vm2198, %v4010, -inf
        %v4583 = vmax.f32 %v4581, %v4582
        %v4584 = vrot.slane %v4583, 4
        %v4585 = vmax.f32 %v4583, %v4584
        %v4586 = vrot.slane %v4585, 2
        %v4587 = vmax.f32 %v4585, %v4586
        %v4588 = vrot.slane %v4587, 1
        %v4589 = vmax.f32 %v4587, %v4588
        %v4590 = vsel %vm2198, %v3891, -inf
        %v4591 = vsel %vm2198, %v3893, -inf
        %v4592 = vmax.f32 %v4590, %v4591
        %v4593 = vrot.slane %v4592, 4
        %v4594 = vmax.f32 %v4592, %v4593
        %v4595 = vrot.slane %v4594, 2
        %v4596 = vmax.f32 %v4594, %v4595
        %v4597 = vrot.slane %v4596, 1
        %v4598 = vmax.f32 %v4596, %v4597
        %v4599 = vsel %vm2198, %v4005, -inf
        %v4600 = vsel %vm2198, %v4011, -inf
        %v4601 = vmax.f32 %v4599, %v4600
        %v4602 = vrot.slane %v4601, 4
        %v4603 = vmax.f32 %v4601, %v4602
        %v4604 = vrot.slane %v4603, 2
        %v4605 = vmax.f32 %v4603, %v4604
        %v4606 = vrot.slane %v4605, 1
        %v4607 = vmax.f32 %v4605, %v4606
        %v4608 = vsel %vm2198, %v4006, -inf
        %v4609 = vsel %vm2198, %v4012, -inf
        %v4610 = vmax.f32 %v4608, %v4609
        %v4611 = vrot.slane %v4610, 4
        %v4612 = vmax.f32 %v4610, %v4611
        %v4613 = vrot.slane %v4612, 2
        %v4614 = vmax.f32 %v4612, %v4613
        %v4615 = vrot.slane %v4614, 1
        %v4616 = vmax.f32 %v4614, %v4615
        %v4617 = vsel %vm2198, %v4007, -inf
        %v4618 = vsel %vm2198, %v4013, -inf
        %v4619 = vmax.f32 %v4617, %v4618
        %v4620 = vrot.slane %v4619, 4
        %v4621 = vmax.f32 %v4619, %v4620
        %v4622 = vrot.slane %v4621, 2
        %v4623 = vmax.f32 %v4621, %v4622
        %v4624 = vrot.slane %v4623, 1
        %v4625 = vmax.f32 %v4623, %v4624
        %v4626 = vsel %vm2198, %v3894, -inf
        %v4627 = vsel %vm2198, %v3896, -inf
        %v4628 = vmax.f32 %v4626, %v4627
        %v4629 = vrot.slane %v4628, 4
        %v4630 = vmax.f32 %v4628, %v4629
        %v4631 = vrot.slane %v4630, 2
        %v4632 = vmax.f32 %v4630, %v4631
        %v4633 = vrot.slane %v4632, 1
        %v4634 = vmax.f32 %v4632, %v4633
        %v4635 = vsel %vm2198, %v4014, -inf
        %v4636 = vsel %vm2198, %v4020, -inf
        %v4637 = vmax.f32 %v4635, %v4636
        %v4638 = vrot.slane %v4637, 4
        %v4639 = vmax.f32 %v4637, %v4638
        %v4640 = vrot.slane %v4639, 2
        %v4641 = vmax.f32 %v4639, %v4640
        %v4642 = vrot.slane %v4641, 1
        %v4643 = vmax.f32 %v4641, %v4642
        %v4644 = vsel %vm2198, %v4015, -inf
        %v4645 = vsel %vm2198, %v4021, -inf
        %v4646 = vmax.f32 %v4644, %v4645
        %v4647 = vrot.slane %v4646, 4
        %v4648 = vmax.f32 %v4646, %v4647
        %v4649 = vrot.slane %v4648, 2
        %v4650 = vmax.f32 %v4648, %v4649
        %v4651 = vrot.slane %v4650, 1
        %v4652 = vmax.f32 %v4650, %v4651
        %v4653 = vsel %vm2198, %v4016, -inf
        %v4654 = vsel %vm2198, %v4022, -inf
        %v4655 = vmax.f32 %v4653, %v4654
        %v4656 = vrot.slane %v4655, 4
        %v4657 = vmax.f32 %v4655, %v4656
        %v4658 = vrot.slane %v4657, 2
        %v4659 = vmax.f32 %v4657, %v4658
        %v4660 = vrot.slane %v4659, 1
        %v4661 = vmax.f32 %v4659, %v4660
        %v4662 = vsel %vm2198, %v3895, -inf
        %v4663 = vsel %vm2198, %v3897, -inf
        %v4664 = vmax.f32 %v4662, %v4663
        %v4665 = vrot.slane %v4664, 4
        %v4666 = vmax.f32 %v4664, %v4665
        %v4667 = vrot.slane %v4666, 2
        %v4668 = vmax.f32 %v4666, %v4667
        %v4669 = vrot.slane %v4668, 1
        %v4670 = vmax.f32 %v4668, %v4669
        %v4671 = vsel %vm2198, %v4017, -inf
        %v4672 = vsel %vm2198, %v4023, -inf
        %v4673 = vmax.f32 %v4671, %v4672
        %v4674 = vrot.slane %v4673, 4
        %v4675 = vmax.f32 %v4673, %v4674
        %v4676 = vrot.slane %v4675, 2
        %v4677 = vmax.f32 %v4675, %v4676
        %v4678 = vrot.slane %v4677, 1
        %v4679 = vmax.f32 %v4677, %v4678
        %v4680 = vsel %vm2198, %v4018, -inf
        %v4681 = vsel %vm2198, %v4024, -inf
        %v4682 = vmax.f32 %v4680, %v4681
        %v4683 = vrot.slane %v4682, 4
        %v4684 = vmax.f32 %v4682, %v4683
        %v4685 = vrot.slane %v4684, 2
        %v4686 = vmax.f32 %v4684, %v4685
        %v4687 = vrot.slane %v4686, 1
        %v4688 = vmax.f32 %v4686, %v4687
        %v4689 = vsel %vm2198, %v4019, -inf
        %v4690 = vsel %vm2198, %v4025, -inf
        %v4691 = vmax.f32 %v4689, %v4690
        %v4692 = vrot.slane %v4691, 4
        %v4693 = vmax.f32 %v4691, %v4692
        %v4694 = vrot.slane %v4693, 2
        %v4695 = vmax.f32 %v4693, %v4694
        %v4696 = vrot.slane %v4695, 1
        %v4697 = vmax.f32 %v4695, %v4696
        %4698 = vst.msk [vmem:[#allocation4] sm:$0xff] %vm2195, 0.0
        %4699 = vst.msk [vmem:[#allocation4 + $0x8] sm:$0x3] %vm2198, 0.0
        %4700 = vst.msk [vmem:[#allocation4 + $0x10] sm:$0xff] %vm2195, 0.0
        %4701 = vst.msk [vmem:[#allocation4 + $0x18] sm:$0x3] %vm2198, 0.0
        %4702 = vst.msk [vmem:[#allocation4 + $0x20] sm:$0xff] %vm2195, 0.0
        %4703 = vst.msk [vmem:[#allocation4 + $0x28] sm:$0x3] %vm2198, 0.0
        %4704 = vst.msk [vmem:[#allocation4 + $0x30] sm:$0xff] %vm2195, 0.0
        %4705 = vst.msk [vmem:[#allocation4 + $0x38] sm:$0x3] %vm2198, 0.0
        %4706 = vst.msk [vmem:[#allocation4 + $0x40] sm:$0xff] %vm2195, 0.0
        %4707 = vst.msk [vmem:[#allocation4 + $0x48] sm:$0x3] %vm2198, 0.0
        %4708 = vst.msk [vmem:[#allocation4 + $0x50] sm:$0xff] %vm2195, 0.0
        %4709 = vst.msk [vmem:[#allocation4 + $0x58] sm:$0x3] %vm2198, 0.0
        %4710 = vst.msk [vmem:[#allocation4 + $0x60] sm:$0xff] %vm2195, 0.0
        %4711 = vst.msk [vmem:[#allocation4 + $0x68] sm:$0x3] %vm2198, 0.0
        %4712 = vst.msk [vmem:[#allocation4 + $0x70] sm:$0xff] %vm2195, 0.0
        %4713 = vst.msk [vmem:[#allocation4 + $0x78] sm:$0x3] %vm2198, 0.0
        %4714 = vst.msk [vmem:[#allocation4 + $0x80] sm:$0xff] %vm2195, 0.0
        %4715 = vst.msk [vmem:[#allocation4 + $0x88] sm:$0x3] %vm2198, 0.0
        %4716 = vst.msk [vmem:[#allocation4 + $0x90] sm:$0xff] %vm2195, 0.0
        %4717 = vst.msk [vmem:[#allocation4 + $0x98] sm:$0x3] %vm2198, 0.0
        %vm4782 = vcmask 1041409
        %v4783 = vsel %vm4782, %v4139, %v4130
        %vm4784 = vcmask 1042434
        %v4785 = vsel %vm4784, %v4148, %v4783
        %vm4786 = vcmask 1043459
        %v4787 = vsel %vm4786, %v4157, %v4785
        %vm4788 = vcmask 1044484
        %v4789 = vsel %vm4788, %v4166, %v4787
        %vm4790 = vcmask 1045509
        %v4791 = vsel %vm4790, %v4175, %v4789
        %vm4792 = vcmask 1046534
        %v4793 = vsel %vm4792, %v4184, %v4791
        %vm4794 = vcmask 1047559
        %v4795 = vsel %vm4794, %v4193, %v4793
        %v4796 = vsel %vm4782, %v4211, %v4202
        %v4797 = vsel %vm4784, %v4220, %v4796
        %v4798 = vsel %vm4786, %v4229, %v4797
        %v4799 = vsel %vm4788, %v4238, %v4798
        %v4800 = vsel %vm4790, %v4247, %v4799
        %v4801 = vsel %vm4792, %v4256, %v4800
        %v4802 = vsel %vm4794, %v4265, %v4801
        %v4803 = vsel %vm4782, %v4283, %v4274
        %v4804 = vsel %vm4784, %v4292, %v4803
        %v4805 = vsel %vm4786, %v4301, %v4804
        %v4806 = vsel %vm4788, %v4310, %v4805
        %v4807 = vsel %vm4790, %v4319, %v4806
        %v4808 = vsel %vm4792, %v4328, %v4807
        %v4809 = vsel %vm4794, %v4337, %v4808
        %v4810 = vsel %vm4782, %v4355, %v4346
        %v4811 = vsel %vm4784, %v4364, %v4810
        %v4812 = vsel %vm4786, %v4373, %v4811
        %v4813 = vsel %vm4788, %v4382, %v4812
        %v4814 = vsel %vm4790, %v4391, %v4813
        %v4815 = vsel %vm4792, %v4400, %v4814
        %v4816 = vsel %vm4794, %v4409, %v4815
        %v4817 = vsel %vm4782, %v4427, %v4418
        %v4818 = vsel %vm4784, %v4436, %v4817
        %v4819 = vsel %vm4786, %v4445, %v4818
        %v4820 = vsel %vm4788, %v4454, %v4819
        %v4821 = vsel %vm4790, %v4463, %v4820
        %v4822 = vsel %vm4792, %v4472, %v4821
        %v4823 = vsel %vm4794, %v4481, %v4822
        %v4824 = vsel %vm4782, %v4499, %v4490
        %v4825 = vsel %vm4784, %v4508, %v4824
        %v4826 = vsel %vm4786, %v4517, %v4825
        %v4827 = vsel %vm4788, %v4526, %v4826
        %v4828 = vsel %vm4790, %v4535, %v4827
        %v4829 = vsel %vm4792, %v4544, %v4828
        %v4830 = vsel %vm4794, %v4553, %v4829
        %v4831 = vsel %vm4782, %v4571, %v4562
        %v4832 = vsel %vm4784, %v4580, %v4831
        %v4833 = vsel %vm4786, %v4589, %v4832
        %v4834 = vsel %vm4788, %v4598, %v4833
        %v4835 = vsel %vm4790, %v4607, %v4834
        %v4836 = vsel %vm4792, %v4616, %v4835
        %v4837 = vsel %vm4794, %v4625, %v4836
        %v4838 = vsel %vm4782, %v4643, %v4634
        %v4839 = vsel %vm4784, %v4652, %v4838
        %v4840 = vsel %vm4786, %v4661, %v4839
        %v4841 = vsel %vm4788, %v4670, %v4840
        %v4842 = vsel %vm4790, %v4679, %v4841
        %v4843 = vsel %vm4792, %v4688, %v4842
        %v4844 = vsel %vm4794, %v4697, %v4843
        %s4853 = scalar_lea.vmem [#allocation4], 16
        %4854 = vst.msk [vmem:[%s4853 + $0x1] sm:$0xff] %vm2195, %v4795
        %4855 = vst.msk [vmem:[%s4853 + $0x11] sm:$0xff] %vm2195, %v4802
        %4856 = vst.msk [vmem:[%s4853 + $0x21] sm:$0xff] %vm2195, %v4809
        %4857 = vst.msk [vmem:[%s4853 + $0x31] sm:$0xff] %vm2195, %v4816
        %4858 = vst.msk [vmem:[%s4853 + $0x41] sm:$0xff] %vm2195, %v4823
        %4859 = vst.msk [vmem:[%s4853 + $0x51] sm:$0xff] %vm2195, %v4830
        %4860 = vst.msk [vmem:[%s4853 + $0x61] sm:$0xff] %vm2195, %v4837
        %4861 = vst.msk [vmem:[%s4853 + $0x71] sm:$0xff] %vm2195, %v4844
        %v4862 = vld [vmem:[#allocation4] sm:$0xff]
        %v4863 = vld [vmem:[#allocation4 + $0x8] sm:$0x3]
        %v4864 = vld [vmem:[#allocation4 + $0x10] sm:$0xff]
        %v4865 = vld [vmem:[#allocation4 + $0x18] sm:$0x3]
        %v4866 = vld [vmem:[#allocation4 + $0x20] sm:$0xff]
        %v4867 = vld [vmem:[#allocation4 + $0x28] sm:$0x3]
        %v4868 = vld [vmem:[#allocation4 + $0x30] sm:$0xff]
        %v4869 = vld [vmem:[#allocation4 + $0x38] sm:$0x3]
        %v4870 = vld [vmem:[#allocation4 + $0x40] sm:$0xff]
        %v4871 = vld [vmem:[#allocation4 + $0x48] sm:$0x3]
        %v4872 = vld [vmem:[#allocation4 + $0x50] sm:$0xff]
        %v4873 = vld [vmem:[#allocation4 + $0x58] sm:$0x3]
        %v4874 = vld [vmem:[#allocation4 + $0x60] sm:$0xff]
        %v4875 = vld [vmem:[#allocation4 + $0x68] sm:$0x3]
        %v4876 = vld [vmem:[#allocation4 + $0x70] sm:$0xff]
        %v4877 = vld [vmem:[#allocation4 + $0x78] sm:$0x3]
        %v4878 = vld [vmem:[#allocation4 + $0x80] sm:$0xff]
        %v4879 = vld [vmem:[#allocation4 + $0x88] sm:$0x3]
        %v4880 = vld [vmem:[#allocation4 + $0x90] sm:$0xff]
        %v4881 = vld [vmem:[#allocation4 + $0x98] sm:$0x3]
        %v4898 = vrot.slane %v4862, 1
        %v4899 = vrot.slane %v4863, 1
        %v4900 = vsel %vm699, %v4898, %v4899
        %v4901 = vrot.slane %v4864, 1
        %v4902 = vrot.slane %v4865, 1
        %v4903 = vsel %vm699, %v4901, %v4902
        %v4904 = vrot.slane %v4866, 1
        %v4905 = vrot.slane %v4867, 1
        %v4906 = vsel %vm699, %v4904, %v4905
        %v4907 = vrot.slane %v4868, 1
        %v4908 = vrot.slane %v4869, 1
        %v4909 = vsel %vm699, %v4907, %v4908
        %v4910 = vrot.slane %v4870, 1
        %v4911 = vrot.slane %v4871, 1
        %v4912 = vsel %vm699, %v4910, %v4911
        %v4913 = vrot.slane %v4872, 1
        %v4914 = vrot.slane %v4873, 1
        %v4915 = vsel %vm699, %v4913, %v4914
        %v4916 = vrot.slane %v4874, 1
        %v4917 = vrot.slane %v4875, 1
        %v4918 = vsel %vm699, %v4916, %v4917
        %v4919 = vrot.slane %v4876, 1
        %v4920 = vrot.slane %v4877, 1
        %v4921 = vsel %vm699, %v4919, %v4920
        %4922 = vrot.lane.b32.xlu0 %v4900, 8
        %v4923 = vpop.permute.xlu0 %4922
        %4924 = vrot.lane.b32.xlu0 %v4903, 8
        %v4925 = vpop.permute.xlu0 %4924
        %4926 = vrot.lane.b32.xlu0 %v4906, 8
        %v4927 = vpop.permute.xlu0 %4926
        %4928 = vrot.lane.b32.xlu0 %v4909, 8
        %v4929 = vpop.permute.xlu0 %4928
        %4930 = vrot.lane.b32.xlu0 %v4912, 8
        %v4931 = vpop.permute.xlu0 %4930
        %4932 = vrot.lane.b32.xlu0 %v4915, 8
        %v4933 = vpop.permute.xlu0 %4932
        %4934 = vrot.lane.b32.xlu0 %v4918, 8
        %v4935 = vpop.permute.xlu0 %4934
        %4936 = vrot.lane.b32.xlu0 %v4921, 8
        %v4937 = vpop.permute.xlu0 %4936
        %v4946 = vrot.slane %v4862, 2
        %v4947 = vrot.slane %v4863, 2
        %v4948 = vsel %vm876, %v4946, %v4947
        %v4949 = vrot.slane %v4864, 2
        %v4950 = vrot.slane %v4865, 2
        %v4951 = vsel %vm876, %v4949, %v4950
        %v4952 = vrot.slane %v4866, 2
        %v4953 = vrot.slane %v4867, 2
        %v4954 = vsel %vm876, %v4952, %v4953
        %v4955 = vrot.slane %v4868, 2
        %v4956 = vrot.slane %v4869, 2
        %v4957 = vsel %vm876, %v4955, %v4956
        %v4958 = vrot.slane %v4870, 2
        %v4959 = vrot.slane %v4871, 2
        %v4960 = vsel %vm876, %v4958, %v4959
        %v4961 = vrot.slane %v4872, 2
        %v4962 = vrot.slane %v4873, 2
        %v4963 = vsel %vm876, %v4961, %v4962
        %v4964 = vrot.slane %v4874, 2
        %v4965 = vrot.slane %v4875, 2
        %v4966 = vsel %vm876, %v4964, %v4965
        %v4967 = vrot.slane %v4876, 2
        %v4968 = vrot.slane %v4877, 2
        %v4969 = vsel %vm876, %v4967, %v4968
        %4970 = vrot.lane.b32.xlu0 %v4948, 16
        %v4971 = vpop.permute.xlu0 %4970
        %4972 = vrot.lane.b32.xlu0 %v4951, 16
        %v4973 = vpop.permute.xlu0 %4972
        %4974 = vrot.lane.b32.xlu0 %v4954, 16
        %v4975 = vpop.permute.xlu0 %4974
        %4976 = vrot.lane.b32.xlu0 %v4957, 16
        %v4977 = vpop.permute.xlu0 %4976
        %4978 = vrot.lane.b32.xlu0 %v4960, 16
        %v4979 = vpop.permute.xlu0 %4978
        %4980 = vrot.lane.b32.xlu0 %v4963, 16
        %v4981 = vpop.permute.xlu0 %4980
        %4982 = vrot.lane.b32.xlu0 %v4966, 16
        %v4983 = vpop.permute.xlu0 %4982
        %4984 = vrot.lane.b32.xlu0 %v4969, 16
        %v4985 = vpop.permute.xlu0 %4984
        %4995 = vrot.lane.b32.xlu0 %v4864, 24
        %v4996 = vpop.permute.xlu0 %4995
        %4997 = vrot.lane.b32.xlu0 %v4866, 24
        %v4998 = vpop.permute.xlu0 %4997
        %4999 = vrot.lane.b32.xlu0 %v4868, 24
        %v5000 = vpop.permute.xlu0 %4999
        %5001 = vrot.lane.b32.xlu0 %v4870, 24
        %v5002 = vpop.permute.xlu0 %5001
        %5003 = vrot.lane.b32.xlu0 %v4872, 24
        %v5004 = vpop.permute.xlu0 %5003
        %5005 = vrot.lane.b32.xlu0 %v4874, 24
        %v5006 = vpop.permute.xlu0 %5005
        %5007 = vrot.lane.b32.xlu0 %v4876, 24
        %v5008 = vpop.permute.xlu0 %5007
        %5009 = vrot.lane.b32.xlu0 %v4878, 24
        %v5010 = vpop.permute.xlu0 %5009
        %v5020 = vrot.slane %v4878, 1
        %v5021 = vrot.slane %v4879, 1
        %v5022 = vsel %vm699, %v5020, %v5021
        %5023 = vrot.lane.b32.xlu0 %v4903, 32
        %v5024 = vpop.permute.xlu0 %5023
        %5025 = vrot.lane.b32.xlu0 %v4906, 32
        %v5026 = vpop.permute.xlu0 %5025
        %5027 = vrot.lane.b32.xlu0 %v4909, 32
        %v5028 = vpop.permute.xlu0 %5027
        %5029 = vrot.lane.b32.xlu0 %v4912, 32
        %v5030 = vpop.permute.xlu0 %5029
        %5031 = vrot.lane.b32.xlu0 %v4915, 32
        %v5032 = vpop.permute.xlu0 %5031
        %5033 = vrot.lane.b32.xlu0 %v4918, 32
        %v5034 = vpop.permute.xlu0 %5033
        %5035 = vrot.lane.b32.xlu0 %v4921, 32
        %v5036 = vpop.permute.xlu0 %5035
        %5037 = vrot.lane.b32.xlu0 %v5022, 32
        %v5038 = vpop.permute.xlu0 %5037
        %v5047 = vrot.slane %v4878, 2
        %v5048 = vrot.slane %v4879, 2
        %v5049 = vsel %vm876, %v5047, %v5048
        %5050 = vrot.lane.b32.xlu0 %v4951, 40
        %v5051 = vpop.permute.xlu0 %5050
        %5052 = vrot.lane.b32.xlu0 %v4954, 40
        %v5053 = vpop.permute.xlu0 %5052
        %5054 = vrot.lane.b32.xlu0 %v4957, 40
        %v5055 = vpop.permute.xlu0 %5054
        %5056 = vrot.lane.b32.xlu0 %v4960, 40
        %v5057 = vpop.permute.xlu0 %5056
        %5058 = vrot.lane.b32.xlu0 %v4963, 40
        %v5059 = vpop.permute.xlu0 %5058
        %5060 = vrot.lane.b32.xlu0 %v4966, 40
        %v5061 = vpop.permute.xlu0 %5060
        %5062 = vrot.lane.b32.xlu0 %v4969, 40
        %v5063 = vpop.permute.xlu0 %5062
        %5064 = vrot.lane.b32.xlu0 %v5049, 40
        %v5065 = vpop.permute.xlu0 %5064
        %5075 = vrot.lane.b32.xlu0 %v4866, 48
        %v5076 = vpop.permute.xlu0 %5075
        %5077 = vrot.lane.b32.xlu0 %v4868, 48
        %v5078 = vpop.permute.xlu0 %5077
        %5079 = vrot.lane.b32.xlu0 %v4870, 48
        %v5080 = vpop.permute.xlu0 %5079
        %5081 = vrot.lane.b32.xlu0 %v4872, 48
        %v5082 = vpop.permute.xlu0 %5081
        %5083 = vrot.lane.b32.xlu0 %v4874, 48
        %v5084 = vpop.permute.xlu0 %5083
        %5085 = vrot.lane.b32.xlu0 %v4876, 48
        %v5086 = vpop.permute.xlu0 %5085
        %5087 = vrot.lane.b32.xlu0 %v4878, 48
        %v5088 = vpop.permute.xlu0 %5087
        %5089 = vrot.lane.b32.xlu0 %v4880, 48
        %v5090 = vpop.permute.xlu0 %5089
        %v5100 = vrot.slane %v4880, 1
        %v5101 = vrot.slane %v4881, 1
        %v5102 = vsel %vm699, %v5100, %v5101
        %5103 = vrot.lane.b32.xlu0 %v4906, 56
        %v5104 = vpop.permute.xlu0 %5103
        %5105 = vrot.lane.b32.xlu0 %v4909, 56
        %v5106 = vpop.permute.xlu0 %5105
        %5107 = vrot.lane.b32.xlu0 %v4912, 56
        %v5108 = vpop.permute.xlu0 %5107
        %5109 = vrot.lane.b32.xlu0 %v4915, 56
        %v5110 = vpop.permute.xlu0 %5109
        %5111 = vrot.lane.b32.xlu0 %v4918, 56
        %v5112 = vpop.permute.xlu0 %5111
        %5113 = vrot.lane.b32.xlu0 %v4921, 56
        %v5114 = vpop.permute.xlu0 %5113
        %5115 = vrot.lane.b32.xlu0 %v5022, 56
        %v5116 = vpop.permute.xlu0 %5115
        %5117 = vrot.lane.b32.xlu0 %v5102, 56
        %v5118 = vpop.permute.xlu0 %5117
        %v5127 = vrot.slane %v4880, 2
        %v5128 = vrot.slane %v4881, 2
        %v5129 = vsel %vm876, %v5127, %v5128
        %5130 = vrot.lane.b32.xlu0 %v4954, 64
        %v5131 = vpop.permute.xlu0 %5130
        %5132 = vrot.lane.b32.xlu0 %v4957, 64
        %v5133 = vpop.permute.xlu0 %5132
        %5134 = vrot.lane.b32.xlu0 %v4960, 64
        %v5135 = vpop.permute.xlu0 %5134
        %5136 = vrot.lane.b32.xlu0 %v4963, 64
        %v5137 = vpop.permute.xlu0 %5136
        %5138 = vrot.lane.b32.xlu0 %v4966, 64
        %v5139 = vpop.permute.xlu0 %5138
        %5140 = vrot.lane.b32.xlu0 %v4969, 64
        %v5141 = vpop.permute.xlu0 %5140
        %5142 = vrot.lane.b32.xlu0 %v5049, 64
        %v5143 = vpop.permute.xlu0 %5142
        %5144 = vrot.lane.b32.xlu0 %v5129, 64
        %v5145 = vpop.permute.xlu0 %5144
        %v5154 = vsel %vm2195, %v4862, %v4923
        %v5155 = vsel %vm2195, %v4864, %v4925
        %v5156 = vsel %vm2195, %v4866, %v4927
        %v5157 = vsel %vm2195, %v4868, %v4929
        %v5158 = vsel %vm2195, %v4870, %v4931
        %v5159 = vsel %vm2195, %v4872, %v4933
        %v5160 = vsel %vm2195, %v4874, %v4935
        %v5161 = vsel %vm2195, %v4876, %v4937
        %v5162 = vsel %vm3372, %v5154, %v4971
        %v5163 = vsel %vm3372, %v5155, %v4973
        %v5164 = vsel %vm3372, %v5156, %v4975
        %v5165 = vsel %vm3372, %v5157, %v4977
        %v5166 = vsel %vm3372, %v5158, %v4979
        %v5167 = vsel %vm3372, %v5159, %v4981
        %v5168 = vsel %vm3372, %v5160, %v4983
        %v5169 = vsel %vm3372, %v5161, %v4985
        %v5170 = vsel %vm1885, %v5162, %v4996
        %v5171 = vsel %vm1885, %v5163, %v4998
        %v5172 = vsel %vm1885, %v5164, %v5000
        %v5173 = vsel %vm1885, %v5165, %v5002
        %v5174 = vsel %vm1885, %v5166, %v5004
        %v5175 = vsel %vm1885, %v5167, %v5006
        %v5176 = vsel %vm1885, %v5168, %v5008
        %v5177 = vsel %vm1885, %v5169, %v5010
        %v5178 = vsel %vm3437, %v5170, %v5024
        %v5179 = vsel %vm3437, %v5171, %v5026
        %v5180 = vsel %vm3437, %v5172, %v5028
        %v5181 = vsel %vm3437, %v5173, %v5030
        %v5182 = vsel %vm3437, %v5174, %v5032
        %v5183 = vsel %vm3437, %v5175, %v5034
        %v5184 = vsel %vm3437, %v5176, %v5036
        %v5185 = vsel %vm3437, %v5177, %v5038
        %v5186 = vsel %vm3470, %v5178, %v5051
        %v5187 = vsel %vm3470, %v5179, %v5053
        %v5188 = vsel %vm3470, %v5180, %v5055
        %v5189 = vsel %vm3470, %v5181, %v5057
        %v5190 = vsel %vm3470, %v5182, %v5059
        %v5191 = vsel %vm3470, %v5183, %v5061
        %v5192 = vsel %vm3470, %v5184, %v5063
        %v5193 = vsel %vm3470, %v5185, %v5065
        %v5194 = vsel %vm3503, %v5186, %v5076
        %v5195 = vsel %vm3503, %v5187, %v5078
        %v5196 = vsel %vm3503, %v5188, %v5080
        %v5197 = vsel %vm3503, %v5189, %v5082
        %v5198 = vsel %vm3503, %v5190, %v5084
        %v5199 = vsel %vm3503, %v5191, %v5086
        %v5200 = vsel %vm3503, %v5192, %v5088
        %v5201 = vsel %vm3503, %v5193, %v5090
        %v5202 = vsel %vm3536, %v5194, %v5104
        %v5203 = vsel %vm3536, %v5195, %v5106
        %v5204 = vsel %vm3536, %v5196, %v5108
        %v5205 = vsel %vm3536, %v5197, %v5110
        %v5206 = vsel %vm3536, %v5198, %v5112
        %v5207 = vsel %vm3536, %v5199, %v5114
        %v5208 = vsel %vm3536, %v5200, %v5116
        %v5209 = vsel %vm3536, %v5201, %v5118
        %v5210 = vsel %vm3569, %v5202, %v5131
        %v5211 = vsel %vm3569, %v5203, %v5133
        %v5212 = vsel %vm3569, %v5204, %v5135
        %v5213 = vsel %vm3569, %v5205, %v5137
        %v5214 = vsel %vm3569, %v5206, %v5139
        %v5215 = vsel %vm3569, %v5207, %v5141
        %v5216 = vsel %vm3569, %v5208, %v5143
        %v5217 = vsel %vm3569, %v5209, %v5145
        %v5218 = vpack.c.bf16 %v5211, %v5210
        %v5219 = vpack.c.bf16 %v5213, %v5212
        %v5220 = vpack.c.bf16 %v5215, %v5214
        %v5221 = vpack.c.bf16 %v5217, %v5216
        %v5222 = vld [vmem:[%s7] sm:$0xf]
        %v5223 = vld [vmem:[%s7 + $0x4] sm:$0xf]
        %v5224 = vld [vmem:[%s7 + $0x8] sm:$0xf]
        %v5225 = vld [vmem:[%s7 + $0xc] sm:$0xf]
        %v5226 = vld [vmem:[%s7 + $0x10] sm:$0xf]
        %v5227 = vld [vmem:[%s7 + $0x14] sm:$0xf]
        %v5228 = vld [vmem:[%s7 + $0x18] sm:$0xf]
        %v5229 = vld [vmem:[%s7 + $0x1c] sm:$0xf]
        %v5230 = vld [vmem:[%s7 + $0x20] sm:$0xf]
        %v5231 = vld [vmem:[%s8] sm:$0x1]
        %v5233 = vperm.slane %v5231, 0
        %v5244 = vunpack.c.l.b16 %v5222
        %v5245 = vunpack.c.l.b16 %v5223
        %v5246 = vunpack.c.l.b16 %v5224
        %v5247 = vunpack.c.l.b16 %v5225
        %v5248 = vunpack.c.l.b16 %v5226
        %v5249 = vunpack.c.l.b16 %v5227
        %v5250 = vunpack.c.l.b16 %v5228
        %v5251 = vunpack.c.l.b16 %v5229
        %v5252 = vunpack.c.l.b16 %v5230
        %v5253 = vpack.c.b16 %v5245, %v5244
        %v5254 = vpack.c.b16 %v5247, %v5246
        %v5255 = vpack.c.b16 %v5249, %v5248
        %v5256 = vpack.c.b16 %v5251, %v5250
        %v5257 = vpack.c.b16 %v5252, %v5252
        %v5263 = vsel %vm3658, %v5218, 0
        %v5266 = vsel %vm3658, %v5219, 0
        %v5269 = vsel %vm3658, %v5220, 0
        %v5272 = vsel %vm3658, %v5221, 0
        %v5275 = vsel %vm3707, %v5257, 0
        %5277 = vmatpush.bf16.msra.mxu0 0
        %5278 = vmatpush.bf16.msra.mxu0 0
        %5279 = vmatpush.bf16.msra.mxu0 0
        %5280 = vmatpush.bf16.msra.mxu0 %v5275
        %5281 = vmatpush.bf16.msra.mxu0 %v5256
        %5282 = vmatpush.bf16.msra.mxu0 %v5255
        %5283 = vmatpush.bf16.msra.mxu0 %v5254
        %5284 = vmatpush.bf16.msra.mxu0 %v5253
        %5285 = vmatmul.bf16.gmra.mxu0 %v5263
        %v5286 = vpop.f32.mrf.mxu0
        %v5287 = vadd.f32 %v5233, %v5286
        %v5288 = vpop.f32.mrf.mxu0
        %v5289 = vadd.f32 %v5233, %v5288
        %5290 = vmatmul.bf16.gmra.mxu0 %v5266
        %v5291 = vpop.f32.mrf.mxu0
        %v5292 = vadd.f32 %v5233, %v5291
        %v5293 = vpop.f32.mrf.mxu0
        %v5294 = vadd.f32 %v5233, %v5293
        %5295 = vmatmul.bf16.gmra.mxu0 %v5269
        %v5296 = vpop.f32.mrf.mxu0
        %v5297 = vadd.f32 %v5233, %v5296
        %v5298 = vpop.f32.mrf.mxu0
        %v5299 = vadd.f32 %v5233, %v5298
        %5300 = vmatmul.bf16.gmra.mxu0 %v5272
        %v5301 = vpop.f32.mrf.mxu0
        %v5302 = vadd.f32 %v5233, %v5301
        %v5303 = vpop.f32.mrf.mxu0
        %v5304 = vadd.f32 %v5233, %v5303
        %5305 = vdwg.mxu0
        %5306 = vxpose.xlu0.b32.start [1/16] %v5287, 128
        %5307 = vxpose.xlu0.b32.cont [2/16] %v5289, 128
        %5308 = vxpose.xlu0.b32.cont [3/16] %v5292, 128
        %5309 = vxpose.xlu0.b32.cont [4/16] %v5294, 128
        %5310 = vxpose.xlu0.b32.cont [5/16] %v5297, 128
        %5311 = vxpose.xlu0.b32.cont [6/16] %v5299, 128
        %5312 = vxpose.xlu0.b32.cont [7/16] %v5302, 128
        %5313 = vxpose.xlu0.b32.cont [8/16] %v5304, 128
        %5314 = vxpose.xlu0.b32.cont [9/16] 0.0, 128
        %5315 = vxpose.xlu0.b32.cont [10/16] 0.0, 128
        %5316 = vxpose.xlu0.b32.cont [11/16] 0.0, 128
        %5317 = vxpose.xlu0.b32.cont [12/16] 0.0, 128
        %5318 = vxpose.xlu0.b32.cont [13/16] 0.0, 128
        %5319 = vxpose.xlu0.b32.cont [14/16] 0.0, 128
        %5320 = vxpose.xlu0.b32.cont [15/16] 0.0, 128
        %5321 = vxpose.xlu0.b32.end [16/16] 0.0, 128
        %v5322 = vpop.trf.xlu0
        %v5323 = vpop.trf.xlu0
        %v5324 = vpop.trf.xlu0
        %v5325 = vpop.trf.xlu0
        %v5326 = vpop.trf.xlu0
        %v5327 = vpop.trf.xlu0
        %v5328 = vpop.trf.xlu0
        %v5329 = vpop.trf.xlu0
        %v5330 = vpop.trf.xlu0
        %v5331 = vpop.trf.xlu0
        %v5332 = vpop.trf.xlu0
        %v5333 = vpop.trf.xlu0
        %v5334 = vpop.trf.xlu0
        %v5335 = vpop.trf.xlu0
        %v5336 = vpop.trf.xlu0
        %v5337 = vpop.trf.xlu0
        %5338 = vst.msk [vmem:[%s397] sm:$0xff] %vm3569, %v5322
        %5339 = vst.msk [vmem:[%s397 + $0x8] sm:$0xff] %vm3569, %v5323
        %s5340 = sand.u32 %s231, 1
        %s5341 = scalar_lea.sflag [#allocation6], %s5340
        %s5342 = sand.u32 %s231, 1
        %s5343 = smul.addr %s5342, 16
        %s5344 = scalar_lea.vmem [#allocation5], %s5343
        %s5345 = sand.u32 %s29, 1
        %s5346 = scalar_lea.sflag [#allocation8], %s5345
        %s5347 = sand.u32 %s257, 1
        %s5348 = smul.addr %s5347, 16
        %s5349 = scalar_lea.vmem [#allocation7], %s5348
        %s5350 = sand.u32 %s29, 1
        %s5351 = scalar_lea.sflag [#allocation8], %s5350
        %s5352 = sand.u32 %s283, 1
        %s5353 = smul.addr %s5352, 16
        %s5354 = scalar_lea.vmem [#allocation9], %s5353
        // Predicated region
        $region57: #{tpu_custom_call.1} parent=55 // pred_check
          %p5355 = pneg %p241
        $region58: #{tpu_custom_call.1} parent=55 // pred_check_branch
          %5357 = sbr.rel (%p5355) target = $region60
        $region59: #{tpu_custom_call.1} parent=55 // pred_region
          %5359 = vsyncadd %s5341, 0
          %s5360 = smul.addr %s29, 2
          %s5361 = smul.addr %s5360, 8
          %s5362 = scalar_lea.hbm %s9, %s5361
          %s5364 = sshll.u32 %s5344, 4
          %s5365 = int_to_ptr.vmem [resolvable:$true] %s5364
          %s5366 = sshll.u32 %s5362, 4
          %s5367 = int_to_ptr.hbm [resolvable:$true] %s5366
          %5369 = dma.vmem_to_hbm [thread:$0]  %s5365, 256, %s5367, %s5341
        $region60: #{tpu_custom_call.1} parent=55 // pred_fallthru
          _
        // Predicated region
        $region61: #{tpu_custom_call.1} parent=55 // pred_check
          %p5370 = pneg %p267
        $region62: #{tpu_custom_call.1} parent=55 // pred_check_branch
          %5372 = sbr.rel (%p5370) target = $region64
        $region63: #{tpu_custom_call.1} parent=55 // pred_region
          %5374 = vsyncadd %s5346, 0
          %s5375 = smul.addr %s29, 2
          %s5376 = smul.addr %s5375, 8
          %s5377 = scalar_lea.hbm %s10, %s5376
          %s5379 = sshll.u32 %s5349, 4
          %s5380 = int_to_ptr.vmem [resolvable:$true] %s5379
          %s5381 = sshll.u32 %s5377, 4
          %s5382 = int_to_ptr.hbm [resolvable:$true] %s5381
          %5384 = dma.vmem_to_hbm [thread:$0]  %s5380, 256, %s5382, %s5346
        $region64: #{tpu_custom_call.1} parent=55 // pred_fallthru
          _
        // Predicated region
        $region65: #{tpu_custom_call.1} parent=55 // pred_check
          %p5385 = pneg %p293
        $region66: #{tpu_custom_call.1} parent=55 // pred_check_branch
          %5387 = sbr.rel (%p5385) target = $region68
        $region67: #{tpu_custom_call.1} parent=55 // pred_region
          %5389 = vsyncadd %s5351, 0
          %s5390 = smul.addr %s29, 2
          %s5391 = smul.addr %s5390, 8
          %s5392 = scalar_lea.hbm %s11, %s5391
          %s5393 = sshll.u32 %s5354, 4
          %s5394 = int_to_ptr.vmem [resolvable:$true] %s5393
          %s5395 = sshll.u32 %s5392, 4
          %s5396 = int_to_ptr.hbm [resolvable:$true] %s5395
          %5401 = dma.vmem_to_hbm [thread:$0]  %s5394, 256, %s5396, %s5351, 128, 128, 8
        $region68: #{tpu_custom_call.1} parent=55 // pred_fallthru
          _
      $region56: #{tpu_custom_call.1} parent=5 // pred_fallthru
        _
      %p5402 = scmp.le.s32.totalorder 2, %s24
      // Predicated region
      $region69: #{tpu_custom_call.1} parent=5 // pred_check
        %p5403 = pneg %p5402
      $region70: #{tpu_custom_call.1} parent=5 // pred_check_branch
        %5405 = sbr.rel (%p5403) target = $region72
      $region71: #{tpu_custom_call.1} parent=5 // pred_region
        %s5406 = ssub.s32 %s24, 2
        // Predicated region
        $region73: #{tpu_custom_call.1} parent=71 // pred_check
          %p5407 = pneg %p247
        $region74: #{tpu_custom_call.1} parent=71 // pred_check_branch
          %5409 = sbr.rel (%p5407) target = $region76
        $region75: #{tpu_custom_call.1} parent=71 // pred_region
          %s5410 = sand.u32 %s232, 1
          %s5411 = scalar_lea.sflag [#allocation6], %s5410
          %s5412 = sand.u32 %s232, 1
          %s5413 = smul.addr %s5412, 16
          %s5414 = scalar_lea.vmem [#allocation5], %s5413
          %5416 = dma.done %s5411, 256
        $region76: #{tpu_custom_call.1} parent=71 // pred_fallthru
          _
        // Predicated region
        $region77: #{tpu_custom_call.1} parent=71 // pred_check
          %p5417 = pneg %p273
        $region78: #{tpu_custom_call.1} parent=71 // pred_check_branch
          %5419 = sbr.rel (%p5417) target = $region80
        $region79: #{tpu_custom_call.1} parent=71 // pred_region
          %s5420 = sand.u32 %s30, 1
          %s5421 = scalar_lea.sflag [#allocation8], %s5420
          %s5422 = sand.u32 %s258, 1
          %s5423 = smul.addr %s5422, 16
          %s5424 = scalar_lea.vmem [#allocation7], %s5423
          %5426 = dma.done %s5421, 256
        $region80: #{tpu_custom_call.1} parent=71 // pred_fallthru
          _
        // Predicated region
        $region81: #{tpu_custom_call.1} parent=71 // pred_check
          %p5427 = pneg %p299
        $region82: #{tpu_custom_call.1} parent=71 // pred_check_branch
          %5429 = sbr.rel (%p5427) target = $region84
        $region83: #{tpu_custom_call.1} parent=71 // pred_region
          %s5430 = sand.u32 %s30, 1
          %s5431 = scalar_lea.sflag [#allocation8], %s5430
          %s5432 = sand.u32 %s284, 1
          %s5433 = smul.addr %s5432, 16
          %s5434 = scalar_lea.vmem [#allocation9], %s5433
          %5436 = dma.done %s5431, 256
        $region84: #{tpu_custom_call.1} parent=71 // pred_fallthru
          _
      $region72: #{tpu_custom_call.1} parent=5 // pred_fallthru
        _
    $region6: #{tpu_custom_call.1} parent=1 // loop_footer
      %s28 = sadd.s32 1, %s24
    $region7: #{tpu_custom_call.1} parent=1 // loop_footer_branch
      %23 = sbr.rel target = $region3
    $region8: #{tpu_custom_call.1} parent=1 // loop_exit
      _
    %5437 = vsyncpa [#allocation6], 1
    %s5438 = scalar_lea.sflag [#allocation6], 1
    %5439 = vsyncpa %s5438, 1
    %5440 = vsyncpa [#allocation8], 1
    %s5441 = scalar_lea.sflag [#allocation8], 1
    %5442 = vsyncpa %s5441, 1

</llo_original>
